<compile_context>
chip_gen: v7x
topology: tpu7x:2x2x1
jax: 0.10.0
libtpu: 0.0.40
codegen_flags: <defaults>
</compile_context>

<pallas_src>
import math

import jax
import jax.numpy as jnp
from jax.experimental import pallas as pl
from jax.experimental.pallas import tpu as pltpu

D_WINDOW = 4                      # half-width of the local attention window
WINDOW = 2 * D_WINDOW + 1         # positions actually attended per step


def _round_up(x, m):
    return (x + m - 1) // m * m


def _decoder_step_kernel(
    # scalar prefetch (SMEM)
    t_ref,          # (1,) int32            : decode step t
    tgt_ref,        # (B,) int32            : target token ids
    # inputs
    emb_hbm,        # ANY  (V, H)           : embedding table, stays in HBM
    w_ih0_ref,      # VMEM (2H, 4H)         : layer-0 LSTM input weights
    w_ihr_ref,      # VMEM (max(L-1,1),H,4H): LSTM input weights, layers >= 1
    w_hh_ref,       # VMEM (L, H, 4H)       : LSTM recurrent weights
    b_ref,          # VMEM (L, 1, 4H)       : combined bias b_ih + b_hh
    h0_ref,         # VMEM (L, B, H)        : previous hidden
    c0_ref,         # VMEM (L, B, H)        : previous cell
    attn_in_ref,    # VMEM (B, H)           : previous attentional vector
    enc_hbm,        # ANY  (S, B, H)        : encoder outputs, seq-major
    len_ref,        # VMEM (1, B) int32     : per-batch source lengths
    w1_ref,         # VMEM (2H, H)          : dense1 (no bias)
    w2_ref,         # VMEM (H, tile_v)      : dense2 tile, streamed over grid
    # outputs
    attn_out_ref,   # (B, H)
    h_out_ref,      # (L, B, H)
    c_out_ref,      # (L, B, H)
    logits_ref,     # (B, tile_v)
    # scratch
    emb_buf,        # VMEM (B, H) emb dtype
    enc_win,        # VMEM (WINDOW, B, H) enc dtype
    attn_x_ref,     # VMEM (B, H) w2 dtype  : attn_vec cached for vocab tiles
    emb_sem,        # DMA sems (B,)
    enc_sem,        # DMA sems (1,)
):
    L, B, H = h_out_ref.shape
    S = enc_hbm.shape[0]
    w_dt = w_hh_ref.dtype

    # ---------------- state step: only on the first vocab tile --------------
    @pl.when(pl.program_id(0) == 0)
    def _state_step():
        t = t_ref[0]

        # -- kick off the local-attention-window DMA early (overlaps the LSTM)
        start = jnp.clip(t - D_WINDOW, 0, S - WINDOW)
        enc_cp = pltpu.make_async_copy(enc_hbm.at[pl.ds(start, WINDOW)],
                                       enc_win, enc_sem.at[0])
        enc_cp.start()

        # -- embedding lookup as B one-row DMAs (table never enters VMEM) ----
        row_cps = []
        for bi in range(B):                       # B is static & small
            cp = pltpu.make_async_copy(emb_hbm.at[pl.ds(tgt_ref[bi], 1)],
                                       emb_buf.at[pl.ds(bi, 1)],
                                       emb_sem.at[bi])
            cp.start()
            row_cps.append(cp)

        # -- MXU work that does NOT need the embedding is issued before the
        #    gather wait, hiding the tiny row DMAs behind real compute --------
        rec = jnp.einsum('lbh,lhk->lbk', h0_ref[...].astype(w_dt),
                         w_hh_ref[...],
                         preferred_element_type=jnp.float32)   # (L, B, 4H)
        feed = attn_in_ref[...].astype(w_dt)
        gates0 = (jnp.dot(feed, w_ih0_ref[H:, :],
                          preferred_element_type=jnp.float32)
                  + rec[0] + b_ref[0])

        for cp in row_cps:
            cp.wait()
        embedded = emb_buf[...].astype(w_dt)
        gates0 = gates0 + jnp.dot(embedded, w_ih0_ref[:H, :],
                                  preferred_element_type=jnp.float32)

        # -- multi-layer LSTM, single time step (PyTorch gate order i,f,g,o) -
        x = None
        h_last = None
        for l in range(L):                        # L is static
            if l == 0:
                gates = gates0
            else:
                gates = (jnp.dot(x.astype(w_dt), w_ihr_ref[l - 1],
                                 preferred_element_type=jnp.float32)
                         + rec[l] + b_ref[l])
            i_g = jax.nn.sigmoid(gates[:, 0 * H:1 * H])
            f_g = jax.nn.sigmoid(gates[:, 1 * H:2 * H])
            g_g = jnp.tanh(gates[:, 2 * H:3 * H])
            o_g = jax.nn.sigmoid(gates[:, 3 * H:4 * H])
            c_new = f_g * c0_ref[l].astype(jnp.float32) + i_g * g_g
            h_new = o_g * jnp.tanh(c_new)
            h_out_ref[l] = h_new.astype(h_out_ref.dtype)
            c_out_ref[l] = c_new.astype(c_out_ref.dtype)
            x = h_new
            h_last = h_new
        # TODO(synk): inter-layer LSTM dropout omitted (inference-mode identity).

        # -- Luong local dot attention over the +-D_WINDOW window ------------
        enc_cp.wait()
        enc = enc_win[...].astype(jnp.float32)                  # (W, B, H)
        scores = jnp.sum(h_last[None, :, :] * enc, axis=-1)     # (W, B)
        pos = start + jax.lax.broadcasted_iota(jnp.int32, (WINDOW, B), 0)
        lens = len_ref[...]                                     # (1, B) int32
        valid = (pos < lens) & (pos >= t - D_WINDOW) & (pos <= t + D_WINDOW)
        scores = jnp.where(valid, scores, -1e30)
        scores = scores - jnp.max(scores, axis=0, keepdims=True)
        e = jnp.exp(scores)
        align = e / jnp.sum(e, axis=0, keepdims=True)           # window softmax
        sigma = D_WINDOW / 2.0
        dist = (pos - t).astype(jnp.float32)
        gauss = jnp.exp(-(dist * dist) / (2.0 * sigma * sigma))
        weights = align * gauss                                 # (W, B)
        # fully-masked window (t beyond this row's source length): zero context
        weights = jnp.where(jnp.any(valid, axis=0, keepdims=True), weights, 0.0)
        context = jnp.sum(weights[:, :, None] * enc, axis=0)    # (B, H)

        # -- attentional vector: tanh(dense1(concat(h, ctx))), concat split --
        attn_vec = jnp.tanh(
            jnp.dot(h_last.astype(w_dt), w1_ref[:H, :],
                    preferred_element_type=jnp.float32)
            + jnp.dot(context.astype(w_dt), w1_ref[H:, :],
                      preferred_element_type=jnp.float32))
        attn_out_ref[...] = attn_vec.astype(attn_out_ref.dtype)
        attn_x_ref[...] = attn_vec.astype(attn_x_ref.dtype)

    # ---------- vocab projection tile: every grid step, W2 streamed ---------
    logits_ref[...] = jnp.dot(attn_x_ref[...], w2_ref[...],
                              preferred_element_type=jnp.float32)


def local_decoder_forward(params, tgt, hidden, cell, enc_output, src_mask,
                          attentional_vector, t, *, tile_v=None):
    """Mirrors LocalDecoder.forward.

    tgt: (B,) int; hidden/cell: (L, B, H); enc_output: (S, B, H) (seq-major,
    PyTorch layout, NOT transposed); src_mask: (B, S) (1 = valid, assumed to
    be the usual prefix padding mask); attentional_vector: (1, B, H); t: int.
    Returns (output (1,B,V), attentional_vector (1,B,H), hidden, cell).
    """
    L, B, H = hidden.shape
    S = enc_output.shape[0]
    V = params["w2"].shape[1]
    assert S >= WINDOW, "source length must cover the local attention window"

    # ---- vocab tiling: ~2 MiB of W2 per tile; V padded to a tile multiple --
    w2 = params["w2"]
    w2_elt = w2.dtype.itemsize
    if tile_v is None:
        tile_v = ((2 << 20) // (H * w2_elt)) // 128 * 128
    else:
        tile_v = (tile_v // 128) * 128
    tile_v = max(128, min(tile_v, _round_up(V, 128)))
    v_pad = _round_up(V, tile_v)
    if v_pad != V:
        w2 = jnp.pad(w2, ((0, 0), (0, v_pad - V)))
    n_tiles = v_pad // tile_v

    t_arr = jnp.asarray(t, jnp.int32).reshape(1)
    tgt_i = tgt.astype(jnp.int32).reshape(B)
    # Per-batch source lengths instead of an (S, B) mask buffer.  Callers that
    # already have lengths can pass them directly (skip this tiny reduce).
    src_len = jnp.sum(src_mask > 0, axis=1).astype(jnp.int32).reshape(1, B)
    attn_in = attentional_vector[0]

    # ---- explicit scoped-VMEM budget (defaults are only 16/32 MiB) ---------
    def _nb(x):
        return math.prod(x.shape) * x.dtype.itemsize
    est = (_nb(params["w_ih0"]) + _nb(params["w_ih_rest"]) + _nb(params["w_hh"])
           + _nb(params["b"]) + _nb(params["w1"])
           + 2 * (_nb(hidden) + _nb(cell))
           + 4 * B * H * 4
           + B * H * params["emb"].dtype.itemsize
           + WINDOW * B * H * enc_output.dtype.itemsize
           + 2 * H * tile_v * w2_elt + 2 * B * tile_v * 4)
    try:
        vmem_cap = pltpu.get_tpu_info().vmem_capacity_bytes
    except Exception:                       # conservative fallback (v7x = 64 MiB)
        vmem_cap = 64 << 20
    vmem_limit = int(min(max(2 * est + (4 << 20), 16 << 20), vmem_cap))

    n_rest = params["w_ih_rest"].shape[0]
    grid_spec = pltpu.PrefetchScalarGridSpec(
        num_scalar_prefetch=2,                                    # t, tgt
        grid=(n_tiles,),
        in_specs=[
            pl.BlockSpec(memory_space=pl.ANY),                         # emb
            pl.BlockSpec((2 * H, 4 * H), lambda j, *_: (0, 0)),        # w_ih0
            pl.BlockSpec((n_rest, H, 4 * H), lambda j, *_: (0, 0, 0)), # w_ih_rest
            pl.BlockSpec((L, H, 4 * H), lambda j, *_: (0, 0, 0)),      # w_hh
            pl.BlockSpec((L, 1, 4 * H), lambda j, *_: (0, 0, 0)),      # b
            pl.BlockSpec((L, B, H), lambda j, *_: (0, 0, 0)),          # h0
            pl.BlockSpec((L, B, H), lambda j, *_: (0, 0, 0)),          # c0
            pl.BlockSpec((B, H), lambda j, *_: (0, 0)),                # attn_in
            pl.BlockSpec(memory_space=pl.ANY),                         # enc
            pl.BlockSpec((1, B), lambda j, *_: (0, 0)),                # src_len
            pl.BlockSpec((2 * H, H), lambda j, *_: (0, 0)),            # w1
            pl.BlockSpec((H, tile_v), lambda j, *_: (0, j)),           # w2 stream
        ],
        out_specs=(
            pl.BlockSpec((B, H), lambda j, *_: (0, 0)),                # attn_vec
            pl.BlockSpec((L, B, H), lambda j, *_: (0, 0, 0)),          # hidden
            pl.BlockSpec((L, B, H), lambda j, *_: (0, 0, 0)),          # cell
            pl.BlockSpec((B, tile_v), lambda j, *_: (0, j)),           # logits
        ),
        scratch_shapes=[
            pltpu.VMEM((B, H), params["emb"].dtype),
            pltpu.VMEM((WINDOW, B, H), enc_output.dtype),
            pltpu.VMEM((B, H), w2.dtype),
            pltpu.SemaphoreType.DMA((B,)),
            pltpu.SemaphoreType.DMA((1,)),
        ],
    )

    attn_vec, h_new, c_new, logits = pl.pallas_call(
        _decoder_step_kernel,
        out_shape=(
            jax.ShapeDtypeStruct((B, H), attentional_vector.dtype),
            jax.ShapeDtypeStruct((L, B, H), hidden.dtype),
            jax.ShapeDtypeStruct((L, B, H), cell.dtype),
            jax.ShapeDtypeStruct((B, v_pad), jnp.float32),
        ),
        grid_spec=grid_spec,
        # The vocab axis stays "arbitrary": the LSTM/attention state is written
        # only at grid step 0 and is resident across the grid, so sharding the
        # axis across v7x's two TensorCores would need a separate
        # CORE_PARALLEL vocab-projection call instead.
        compiler_params=pltpu.CompilerParams(
            dimension_semantics=("arbitrary",),
            vmem_limit_bytes=vmem_limit),
    )(t_arr, tgt_i, params["emb"], params["w_ih0"], params["w_ih_rest"],
      params["w_hh"], params["b"], hidden, cell, attn_in, enc_output,
      src_len, params["w1"], w2)

    if v_pad != V:
        logits = logits[:, :V]
    return logits[None], attn_vec[None], h_new, c_new


def init_params(key, vocab_size, hidden_size, num_layers, dtype=jnp.bfloat16):
    """LSTM/dense weights pre-transposed to (in, out); bias = b_ih + b_hh.

    Weights are stored in `dtype` (bf16 default: halves HBM traffic of the
    streamed W2 and halves resident VMEM; every dot accumulates in f32).  The
    embedding table is kept f32: its per-step traffic is only B rows, and f32
    rows keep the one-row DMA gather layout-trivial for any B/H.
    """
    V, H, L = vocab_size, hidden_size, num_layers
    ks = jax.random.split(key, 7)
    scale = 1.0 / float(H) ** 0.5
    u = lambda k, shape: jax.random.uniform(k, shape, jnp.float32, -scale, scale)

    emb = jax.random.normal(ks[0], (V, H), jnp.float32) * 0.1
    w_ih0 = u(ks[1], (2 * H, 4 * H))                  # layer 0: concat(emb, attn)
    n_rest = max(L - 1, 1)
    w_ih_rest = u(ks[2], (n_rest, H, 4 * H))          # layers >= 1 (no dead rows)
    if L == 1:
        w_ih_rest = jnp.zeros_like(w_ih_rest)         # placeholder, never read
    w_hh = u(ks[3], (L, H, 4 * H))
    b = u(ks[4], (L, 1, 4 * H)) * 2.0                 # b_ih + b_hh combined
    w1 = u(ks[5], (2 * H, H))                         # dense1, no bias
    w2 = u(ks[6], (H, V))                             # dense2, no bias
    p = dict(emb=emb, w_ih0=w_ih0, w_ih_rest=w_ih_rest, w_hh=w_hh, b=b,
             w1=w1, w2=w2)
    return {k: (v if k == "emb" else v.astype(dtype)) for k, v in p.items()}


if __name__ == "__main__":
    key = jax.random.PRNGKey(0)
    # Small, lane/sublane-friendly shapes: H, V multiples of 128; B mult of 8.
    V, H, L, B, S = 256, 128, 2, 8, 16
    k1, k2, k3, k4, k5, kp = jax.random.split(key, 6)

    params = init_params(kp, V, H, L)                 # bf16 weights, f32 emb
    tgt = jax.random.randint(k1, (B,), 0, V, jnp.int32)
    hidden = jax.random.normal(k2, (L, B, H), jnp.float32) * 0.1
    cell = jax.random.normal(k3, (L, B, H), jnp.float32) * 0.1
    enc_output = jax.random.normal(k4, (S, B, H), jnp.float32) * 0.1
    src_mask = jnp.ones((B, S), jnp.float32)
    attn_vec0 = jax.random.normal(k5, (1, B, H), jnp.float32) * 0.1
    t = 3

    outs = local_decoder_forward(params, tgt, hidden, cell, enc_output,
                                 src_mask, attn_vec0, t, tile_v=128)
    outs = jax.tree_util.tree_map(jax.block_until_ready, outs)
    logits, attn_vec, h_new, c_new = outs
    assert logits.shape == (1, B, V) and attn_vec.shape == (1, B, H)
    assert h_new.shape == (L, B, H) and c_new.shape == (L, B, H)
    assert all(bool(jnp.all(jnp.isfinite(x.astype(jnp.float32))))
               for x in (logits, attn_vec, h_new, c_new))
    print("KERNEL_OK")
</pallas_src>

<mosaic_0001>
module attributes {stable_mosaic.version = 11 : i64} {
  func.func @_decoder_step_kernel(%arg0: i32, %arg1: memref<1xi32, #tpu.memory_space<smem>>, %arg2: memref<8xi32, #tpu.memory_space<smem>>, %arg3: memref<256x128xf32, #tpu.memory_space<any>>, %arg4: memref<256x512xbf16, #tpu.memory_space<vmem>>, %arg5: memref<1x128x512xbf16, #tpu.memory_space<vmem>>, %arg6: memref<2x128x512xbf16, #tpu.memory_space<vmem>>, %arg7: memref<2x1x512xbf16, #tpu.memory_space<vmem>>, %arg8: memref<2x8x128xf32, #tpu.memory_space<vmem>>, %arg9: memref<2x8x128xf32, #tpu.memory_space<vmem>>, %arg10: memref<8x128xf32, #tpu.memory_space<vmem>>, %arg11: memref<16x8x128xf32, #tpu.memory_space<any>>, %arg12: memref<1x8xi32, #tpu.memory_space<vmem>>, %arg13: memref<256x128xbf16, #tpu.memory_space<vmem>>, %arg14: memref<128x128xbf16, #tpu.memory_space<vmem>>, %arg15: memref<8x128xf32, #tpu.memory_space<vmem>>, %arg16: memref<2x8x128xf32, #tpu.memory_space<vmem>>, %arg17: memref<2x8x128xf32, #tpu.memory_space<vmem>>, %arg18: memref<8x128xf32, #tpu.memory_space<vmem>>, %arg19: memref<8x128xf32, #tpu.memory_space<vmem>>, %arg20: memref<9x8x128xf32, #tpu.memory_space<vmem>>, %arg21: memref<8x128xbf16, #tpu.memory_space<vmem>>, %arg22: memref<8x!tpu.dma_semaphore, #tpu.memory_space<semaphore_mem>>, %arg23: memref<1x!tpu.dma_semaphore, #tpu.memory_space<semaphore_mem>>) attributes {dimension_semantics = [#tpu.dimension_semantics<arbitrary>], iteration_bounds = array<i64: 2>, scalar_prefetch = 2 : i64, scratch_operands = 5 : i64, tpu.core_type = #tpu.core_type<tc>, window_params = [{}, {pipeline_mode = #tpu.pipeline_mode<synchronous>, transform_indices = @transform_1, window_bounds = array<i64: 256, 512>}, {pipeline_mode = #tpu.pipeline_mode<synchronous>, transform_indices = @transform_2, window_bounds = array<i64: 1, 128, 512>}, {pipeline_mode = #tpu.pipeline_mode<synchronous>, transform_indices = @transform_3, window_bounds = array<i64: 2, 128, 512>}, {pipeline_mode = #tpu.pipeline_mode<synchronous>, transform_indices = @transform_4, window_bounds = array<i64: 2, 1, 512>}, {pipeline_mode = #tpu.pipeline_mode<synchronous>, transform_indices = @transform_5, window_bounds = array<i64: 2, 8, 128>}, {pipeline_mode = #tpu.pipeline_mode<synchronous>, transform_indices = @transform_6, window_bounds = array<i64: 2, 8, 128>}, {pipeline_mode = #tpu.pipeline_mode<synchronous>, transform_indices = @transform_7, window_bounds = array<i64: 8, 128>}, {}, {pipeline_mode = #tpu.pipeline_mode<synchronous>, transform_indices = @transform_9, window_bounds = array<i64: 1, 8>}, {pipeline_mode = #tpu.pipeline_mode<synchronous>, transform_indices = @transform_10, window_bounds = array<i64: 256, 128>}, {transform_indices = @transform_11, window_bounds = array<i64: 128, 128>}, {pipeline_mode = #tpu.pipeline_mode<synchronous>, transform_indices = @transform_12, window_bounds = array<i64: 8, 128>}, {pipeline_mode = #tpu.pipeline_mode<synchronous>, transform_indices = @transform_13, window_bounds = array<i64: 2, 8, 128>}, {pipeline_mode = #tpu.pipeline_mode<synchronous>, transform_indices = @transform_14, window_bounds = array<i64: 2, 8, 128>}, {transform_indices = @transform_15, window_bounds = array<i64: 8, 128>}]} {
    %c0_i32 = arith.constant 0 : i32
    %0 = arith.cmpi eq, %arg0, %c0_i32 : i32
    %1 = arith.extui %0 : i1 to i32
    %c0_i32_0 = arith.constant 0 : i32
    %2 = arith.cmpi ne, %1, %c0_i32_0 : i32
    scf.if %2 {
      %c0_6 = arith.constant 0 : index
      %7 = memref.load %arg1[%c0_6] : memref<1xi32, #tpu.memory_space<smem>>
      %c4_i32 = arith.constant 4 : i32
      %8 = arith.subi %7, %c4_i32 : i32
      %c0_i32_7 = arith.constant 0 : i32
      %c7_i32 = arith.constant 7 : i32
      %9 = arith.maxsi %c0_i32_7, %8 : i32
      %10 = arith.minsi %c7_i32, %9 : i32
      %c0_i32_8 = arith.constant 0 : i32
      %c0_i32_9 = arith.constant 0 : i32
      %c0_i32_10 = arith.constant 0 : i32
      %11 = tpu.memref_slice %arg11[%10, %c0_i32_9, %c0_i32_10] : memref<16x8x128xf32, #tpu.memory_space<any>> -> memref<9x8x128xf32, #tpu.memory_space<any>>
      %12 = tpu.memref_slice %arg23[%c0_i32_8] : memref<1x!tpu.dma_semaphore, #tpu.memory_space<semaphore_mem>> -> memref<1x!tpu.dma_semaphore, #tpu.memory_space<semaphore_mem>>
      %13 = tpu.memref_squeeze %12 : memref<1x!tpu.dma_semaphore, #tpu.memory_space<semaphore_mem>> -> memref<!tpu.dma_semaphore, #tpu.memory_space<semaphore_mem>>
      tpu.enqueue_dma source(%11 : memref<9x8x128xf32, #tpu.memory_space<any>>) target(%arg20 : memref<9x8x128xf32, #tpu.memory_space<vmem>>) target_semaphore(%13 : memref<!tpu.dma_semaphore, #tpu.memory_space<semaphore_mem>>)
      %c0_11 = arith.constant 0 : index
      %14 = memref.load %arg2[%c0_11] : memref<8xi32, #tpu.memory_space<smem>>
      %c0_i32_12 = arith.constant 0 : i32
      %c0_i32_13 = arith.constant 0 : i32
      %15 = tpu.memref_slice %arg3[%14, %c0_i32_13] : memref<256x128xf32, #tpu.memory_space<any>> -> memref<1x128xf32, #tpu.memory_space<any>>
      %c0_i32_14 = arith.constant 0 : i32
      %c0_i32_15 = arith.constant 0 : i32
      %16 = tpu.memref_slice %arg19[%c0_i32_14, %c0_i32_15] : memref<8x128xf32, #tpu.memory_space<vmem>> -> memref<1x128xf32, #tpu.memory_space<vmem>>
      %17 = tpu.memref_slice %arg22[%c0_i32_12] : memref<8x!tpu.dma_semaphore, #tpu.memory_space<semaphore_mem>> -> memref<1x!tpu.dma_semaphore, #tpu.memory_space<semaphore_mem>>
      %18 = tpu.memref_squeeze %17 : memref<1x!tpu.dma_semaphore, #tpu.memory_space<semaphore_mem>> -> memref<!tpu.dma_semaphore, #tpu.memory_space<semaphore_mem>>
      tpu.enqueue_dma source(%15 : memref<1x128xf32, #tpu.memory_space<any>>) target(%16 : memref<1x128xf32, #tpu.memory_space<vmem>>) target_semaphore(%18 : memref<!tpu.dma_semaphore, #tpu.memory_space<semaphore_mem>>)
      %c1 = arith.constant 1 : index
      %19 = memref.load %arg2[%c1] : memref<8xi32, #tpu.memory_space<smem>>
      %c1_i32 = arith.constant 1 : i32
      %c0_i32_16 = arith.constant 0 : i32
      %20 = tpu.memref_slice %arg3[%19, %c0_i32_16] : memref<256x128xf32, #tpu.memory_space<any>> -> memref<1x128xf32, #tpu.memory_space<any>>
      %c1_i32_17 = arith.constant 1 : i32
      %c0_i32_18 = arith.constant 0 : i32
      %21 = tpu.memref_slice %arg19[%c1_i32_17, %c0_i32_18] : memref<8x128xf32, #tpu.memory_space<vmem>> -> memref<1x128xf32, #tpu.memory_space<vmem>>
      %22 = tpu.memref_slice %arg22[%c1_i32] : memref<8x!tpu.dma_semaphore, #tpu.memory_space<semaphore_mem>> -> memref<1x!tpu.dma_semaphore, #tpu.memory_space<semaphore_mem>>
      %23 = tpu.memref_squeeze %22 : memref<1x!tpu.dma_semaphore, #tpu.memory_space<semaphore_mem>> -> memref<!tpu.dma_semaphore, #tpu.memory_space<semaphore_mem>>
      tpu.enqueue_dma source(%20 : memref<1x128xf32, #tpu.memory_space<any>>) target(%21 : memref<1x128xf32, #tpu.memory_space<vmem>>) target_semaphore(%23 : memref<!tpu.dma_semaphore, #tpu.memory_space<semaphore_mem>>)
      %c2 = arith.constant 2 : index
      %24 = memref.load %arg2[%c2] : memref<8xi32, #tpu.memory_space<smem>>
      %c2_i32 = arith.constant 2 : i32
      %c0_i32_19 = arith.constant 0 : i32
      %25 = tpu.memref_slice %arg3[%24, %c0_i32_19] : memref<256x128xf32, #tpu.memory_space<any>> -> memref<1x128xf32, #tpu.memory_space<any>>
      %c2_i32_20 = arith.constant 2 : i32
      %c0_i32_21 = arith.constant 0 : i32
      %26 = tpu.memref_slice %arg19[%c2_i32_20, %c0_i32_21] : memref<8x128xf32, #tpu.memory_space<vmem>> -> memref<1x128xf32, #tpu.memory_space<vmem>>
      %27 = tpu.memref_slice %arg22[%c2_i32] : memref<8x!tpu.dma_semaphore, #tpu.memory_space<semaphore_mem>> -> memref<1x!tpu.dma_semaphore, #tpu.memory_space<semaphore_mem>>
      %28 = tpu.memref_squeeze %27 : memref<1x!tpu.dma_semaphore, #tpu.memory_space<semaphore_mem>> -> memref<!tpu.dma_semaphore, #tpu.memory_space<semaphore_mem>>
      tpu.enqueue_dma source(%25 : memref<1x128xf32, #tpu.memory_space<any>>) target(%26 : memref<1x128xf32, #tpu.memory_space<vmem>>) target_semaphore(%28 : memref<!tpu.dma_semaphore, #tpu.memory_space<semaphore_mem>>)
      %c3 = arith.constant 3 : index
      %29 = memref.load %arg2[%c3] : memref<8xi32, #tpu.memory_space<smem>>
      %c3_i32 = arith.constant 3 : i32
      %c0_i32_22 = arith.constant 0 : i32
      %30 = tpu.memref_slice %arg3[%29, %c0_i32_22] : memref<256x128xf32, #tpu.memory_space<any>> -> memref<1x128xf32, #tpu.memory_space<any>>
      %c3_i32_23 = arith.constant 3 : i32
      %c0_i32_24 = arith.constant 0 : i32
      %31 = tpu.memref_slice %arg19[%c3_i32_23, %c0_i32_24] : memref<8x128xf32, #tpu.memory_space<vmem>> -> memref<1x128xf32, #tpu.memory_space<vmem>>
      %32 = tpu.memref_slice %arg22[%c3_i32] : memref<8x!tpu.dma_semaphore, #tpu.memory_space<semaphore_mem>> -> memref<1x!tpu.dma_semaphore, #tpu.memory_space<semaphore_mem>>
      %33 = tpu.memref_squeeze %32 : memref<1x!tpu.dma_semaphore, #tpu.memory_space<semaphore_mem>> -> memref<!tpu.dma_semaphore, #tpu.memory_space<semaphore_mem>>
      tpu.enqueue_dma source(%30 : memref<1x128xf32, #tpu.memory_space<any>>) target(%31 : memref<1x128xf32, #tpu.memory_space<vmem>>) target_semaphore(%33 : memref<!tpu.dma_semaphore, #tpu.memory_space<semaphore_mem>>)
      %c4 = arith.constant 4 : index
      %34 = memref.load %arg2[%c4] : memref<8xi32, #tpu.memory_space<smem>>
      %c4_i32_25 = arith.constant 4 : i32
      %c0_i32_26 = arith.constant 0 : i32
      %35 = tpu.memref_slice %arg3[%34, %c0_i32_26] : memref<256x128xf32, #tpu.memory_space<any>> -> memref<1x128xf32, #tpu.memory_space<any>>
      %c4_i32_27 = arith.constant 4 : i32
      %c0_i32_28 = arith.constant 0 : i32
      %36 = tpu.memref_slice %arg19[%c4_i32_27, %c0_i32_28] : memref<8x128xf32, #tpu.memory_space<vmem>> -> memref<1x128xf32, #tpu.memory_space<vmem>>
      %37 = tpu.memref_slice %arg22[%c4_i32_25] : memref<8x!tpu.dma_semaphore, #tpu.memory_space<semaphore_mem>> -> memref<1x!tpu.dma_semaphore, #tpu.memory_space<semaphore_mem>>
      %38 = tpu.memref_squeeze %37 : memref<1x!tpu.dma_semaphore, #tpu.memory_space<semaphore_mem>> -> memref<!tpu.dma_semaphore, #tpu.memory_space<semaphore_mem>>
      tpu.enqueue_dma source(%35 : memref<1x128xf32, #tpu.memory_space<any>>) target(%36 : memref<1x128xf32, #tpu.memory_space<vmem>>) target_semaphore(%38 : memref<!tpu.dma_semaphore, #tpu.memory_space<semaphore_mem>>)
      %c5 = arith.constant 5 : index
      %39 = memref.load %arg2[%c5] : memref<8xi32, #tpu.memory_space<smem>>
      %c5_i32 = arith.constant 5 : i32
      %c0_i32_29 = arith.constant 0 : i32
      %40 = tpu.memref_slice %arg3[%39, %c0_i32_29] : memref<256x128xf32, #tpu.memory_space<any>> -> memref<1x128xf32, #tpu.memory_space<any>>
      %c5_i32_30 = arith.constant 5 : i32
      %c0_i32_31 = arith.constant 0 : i32
      %41 = tpu.memref_slice %arg19[%c5_i32_30, %c0_i32_31] : memref<8x128xf32, #tpu.memory_space<vmem>> -> memref<1x128xf32, #tpu.memory_space<vmem>>
      %42 = tpu.memref_slice %arg22[%c5_i32] : memref<8x!tpu.dma_semaphore, #tpu.memory_space<semaphore_mem>> -> memref<1x!tpu.dma_semaphore, #tpu.memory_space<semaphore_mem>>
      %43 = tpu.memref_squeeze %42 : memref<1x!tpu.dma_semaphore, #tpu.memory_space<semaphore_mem>> -> memref<!tpu.dma_semaphore, #tpu.memory_space<semaphore_mem>>
      tpu.enqueue_dma source(%40 : memref<1x128xf32, #tpu.memory_space<any>>) target(%41 : memref<1x128xf32, #tpu.memory_space<vmem>>) target_semaphore(%43 : memref<!tpu.dma_semaphore, #tpu.memory_space<semaphore_mem>>)
      %c6 = arith.constant 6 : index
      %44 = memref.load %arg2[%c6] : memref<8xi32, #tpu.memory_space<smem>>
      %c6_i32 = arith.constant 6 : i32
      %c0_i32_32 = arith.constant 0 : i32
      %45 = tpu.memref_slice %arg3[%44, %c0_i32_32] : memref<256x128xf32, #tpu.memory_space<any>> -> memref<1x128xf32, #tpu.memory_space<any>>
      %c6_i32_33 = arith.constant 6 : i32
      %c0_i32_34 = arith.constant 0 : i32
      %46 = tpu.memref_slice %arg19[%c6_i32_33, %c0_i32_34] : memref<8x128xf32, #tpu.memory_space<vmem>> -> memref<1x128xf32, #tpu.memory_space<vmem>>
      %47 = tpu.memref_slice %arg22[%c6_i32] : memref<8x!tpu.dma_semaphore, #tpu.memory_space<semaphore_mem>> -> memref<1x!tpu.dma_semaphore, #tpu.memory_space<semaphore_mem>>
      %48 = tpu.memref_squeeze %47 : memref<1x!tpu.dma_semaphore, #tpu.memory_space<semaphore_mem>> -> memref<!tpu.dma_semaphore, #tpu.memory_space<semaphore_mem>>
      tpu.enqueue_dma source(%45 : memref<1x128xf32, #tpu.memory_space<any>>) target(%46 : memref<1x128xf32, #tpu.memory_space<vmem>>) target_semaphore(%48 : memref<!tpu.dma_semaphore, #tpu.memory_space<semaphore_mem>>)
      %c7 = arith.constant 7 : index
      %49 = memref.load %arg2[%c7] : memref<8xi32, #tpu.memory_space<smem>>
      %c7_i32_35 = arith.constant 7 : i32
      %c0_i32_36 = arith.constant 0 : i32
      %50 = tpu.memref_slice %arg3[%49, %c0_i32_36] : memref<256x128xf32, #tpu.memory_space<any>> -> memref<1x128xf32, #tpu.memory_space<any>>
      %c7_i32_37 = arith.constant 7 : i32
      %c0_i32_38 = arith.constant 0 : i32
      %51 = tpu.memref_slice %arg19[%c7_i32_37, %c0_i32_38] : memref<8x128xf32, #tpu.memory_space<vmem>> -> memref<1x128xf32, #tpu.memory_space<vmem>>
      %52 = tpu.memref_slice %arg22[%c7_i32_35] : memref<8x!tpu.dma_semaphore, #tpu.memory_space<semaphore_mem>> -> memref<1x!tpu.dma_semaphore, #tpu.memory_space<semaphore_mem>>
      %53 = tpu.memref_squeeze %52 : memref<1x!tpu.dma_semaphore, #tpu.memory_space<semaphore_mem>> -> memref<!tpu.dma_semaphore, #tpu.memory_space<semaphore_mem>>
      tpu.enqueue_dma source(%50 : memref<1x128xf32, #tpu.memory_space<any>>) target(%51 : memref<1x128xf32, #tpu.memory_space<vmem>>) target_semaphore(%53 : memref<!tpu.dma_semaphore, #tpu.memory_space<semaphore_mem>>)
      %c0_39 = arith.constant 0 : index
      %c0_40 = arith.constant 0 : index
      %c0_41 = arith.constant 0 : index
      %54 = vector.load %arg8[%c0_39, %c0_40, %c0_41] : memref<2x8x128xf32, #tpu.memory_space<vmem>>, vector<2x8x128xf32>
      %55 = arith.truncf %54 : vector<2x8x128xf32> to vector<2x8x128xbf16>
      %c0_42 = arith.constant 0 : index
      %c0_43 = arith.constant 0 : index
      %c0_44 = arith.constant 0 : index
      %56 = vector.load %arg6[%c0_42, %c0_43, %c0_44] : memref<2x128x512xbf16, #tpu.memory_space<vmem>>, vector<2x128x512xbf16>
      "tpu.trace_start"() <{level = 10 : i32, message = "lbh,lhk->lbk"}> : () -> ()
      %cst_45 = arith.constant dense<0.000000e+00> : vector<2x8x512xf32>
      %57 = tpu.matmul %55, %56, %cst_45 {dimension_numbers = #tpu.dot_dimension_numbers<[2], [1], [1], [2], [0, 0, 0, 1, 1, 2], [0], [0]>} : vector<2x8x128xbf16>, vector<2x128x512xbf16>, vector<2x8x512xf32> -> vector<2x8x512xf32>
      "tpu.trace_stop"() : () -> ()
      %c0_46 = arith.constant 0 : index
      %c0_47 = arith.constant 0 : index
      %58 = vector.load %arg10[%c0_46, %c0_47] : memref<8x128xf32, #tpu.memory_space<vmem>>, vector<8x128xf32>
      %59 = arith.truncf %58 : vector<8x128xf32> to vector<8x128xbf16>
      %c128 = arith.constant 128 : index
      %c0_48 = arith.constant 0 : index
      %60 = vector.load %arg4[%c128, %c0_48] : memref<256x512xbf16, #tpu.memory_space<vmem>>, vector<128x512xbf16>
      %cst_49 = arith.constant dense<0.000000e+00> : vector<8x512xf32>
      %61 = tpu.matmul %59, %60, %cst_49 {dimension_numbers = #tpu.dot_dimension_numbers<[1], [0], [0], [1], [0, 0, 1, 1], [], []>} : vector<8x128xbf16>, vector<128x512xbf16>, vector<8x512xf32> -> vector<8x512xf32>
      %62 = vector.extract_strided_slice %57 {offsets = [0, 0, 0], sizes = [1, 8, 512], strides = [1, 1, 1]} : vector<2x8x512xf32> to vector<1x8x512xf32>
      %63 = vector.shape_cast %62 : vector<1x8x512xf32> to vector<8x512xf32>
      %64 = arith.addf %61, %63 : vector<8x512xf32>
      %c0_50 = arith.constant 0 : index
      %c0_51 = arith.constant 0 : index
      %c0_52 = arith.constant 0 : index
      %65 = vector.load %arg7[%c0_50, %c0_51, %c0_52] : memref<2x1x512xbf16, #tpu.memory_space<vmem>>, vector<1x1x512xbf16>
      %66 = vector.shape_cast %65 : vector<1x1x512xbf16> to vector<1x512xbf16>
      %67 = arith.extf %66 : vector<1x512xbf16> to vector<1x512xf32>
      %68 = vector.broadcast %67 : vector<1x512xf32> to vector<8x512xf32>
      %69 = arith.addf %64, %68 : vector<8x512xf32>
      %c0_i32_53 = arith.constant 0 : i32
      %c0_i32_54 = arith.constant 0 : i32
      %70 = tpu.memref_slice %arg3[%14, %c0_i32_54] : memref<256x128xf32, #tpu.memory_space<any>> -> memref<1x128xf32, #tpu.memory_space<any>>
      %c0_i32_55 = arith.constant 0 : i32
      %c0_i32_56 = arith.constant 0 : i32
      %71 = tpu.memref_slice %arg19[%c0_i32_55, %c0_i32_56] : memref<8x128xf32, #tpu.memory_space<vmem>> -> memref<1x128xf32, #tpu.memory_space<vmem>>
      %72 = tpu.memref_slice %arg22[%c0_i32_53] : memref<8x!tpu.dma_semaphore, #tpu.memory_space<semaphore_mem>> -> memref<1x!tpu.dma_semaphore, #tpu.memory_space<semaphore_mem>>
      %73 = tpu.memref_squeeze %72 : memref<1x!tpu.dma_semaphore, #tpu.memory_space<semaphore_mem>> -> memref<!tpu.dma_semaphore, #tpu.memory_space<semaphore_mem>>
      tpu.wait_dma2 semaphore(%73 : memref<!tpu.dma_semaphore, #tpu.memory_space<semaphore_mem>>) src(%70 : memref<1x128xf32, #tpu.memory_space<any>>) dst(%71 : memref<1x128xf32, #tpu.memory_space<vmem>>)
      %c1_i32_57 = arith.constant 1 : i32
      %c0_i32_58 = arith.constant 0 : i32
      %74 = tpu.memref_slice %arg3[%19, %c0_i32_58] : memref<256x128xf32, #tpu.memory_space<any>> -> memref<1x128xf32, #tpu.memory_space<any>>
      %c1_i32_59 = arith.constant 1 : i32
      %c0_i32_60 = arith.constant 0 : i32
      %75 = tpu.memref_slice %arg19[%c1_i32_59, %c0_i32_60] : memref<8x128xf32, #tpu.memory_space<vmem>> -> memref<1x128xf32, #tpu.memory_space<vmem>>
      %76 = tpu.memref_slice %arg22[%c1_i32_57] : memref<8x!tpu.dma_semaphore, #tpu.memory_space<semaphore_mem>> -> memref<1x!tpu.dma_semaphore, #tpu.memory_space<semaphore_mem>>
      %77 = tpu.memref_squeeze %76 : memref<1x!tpu.dma_semaphore, #tpu.memory_space<semaphore_mem>> -> memref<!tpu.dma_semaphore, #tpu.memory_space<semaphore_mem>>
      tpu.wait_dma2 semaphore(%77 : memref<!tpu.dma_semaphore, #tpu.memory_space<semaphore_mem>>) src(%74 : memref<1x128xf32, #tpu.memory_space<any>>) dst(%75 : memref<1x128xf32, #tpu.memory_space<vmem>>)
      %c2_i32_61 = arith.constant 2 : i32
      %c0_i32_62 = arith.constant 0 : i32
      %78 = tpu.memref_slice %arg3[%24, %c0_i32_62] : memref<256x128xf32, #tpu.memory_space<any>> -> memref<1x128xf32, #tpu.memory_space<any>>
      %c2_i32_63 = arith.constant 2 : i32
      %c0_i32_64 = arith.constant 0 : i32
      %79 = tpu.memref_slice %arg19[%c2_i32_63, %c0_i32_64] : memref<8x128xf32, #tpu.memory_space<vmem>> -> memref<1x128xf32, #tpu.memory_space<vmem>>
      %80 = tpu.memref_slice %arg22[%c2_i32_61] : memref<8x!tpu.dma_semaphore, #tpu.memory_space<semaphore_mem>> -> memref<1x!tpu.dma_semaphore, #tpu.memory_space<semaphore_mem>>
      %81 = tpu.memref_squeeze %80 : memref<1x!tpu.dma_semaphore, #tpu.memory_space<semaphore_mem>> -> memref<!tpu.dma_semaphore, #tpu.memory_space<semaphore_mem>>
      tpu.wait_dma2 semaphore(%81 : memref<!tpu.dma_semaphore, #tpu.memory_space<semaphore_mem>>) src(%78 : memref<1x128xf32, #tpu.memory_space<any>>) dst(%79 : memref<1x128xf32, #tpu.memory_space<vmem>>)
      %c3_i32_65 = arith.constant 3 : i32
      %c0_i32_66 = arith.constant 0 : i32
      %82 = tpu.memref_slice %arg3[%29, %c0_i32_66] : memref<256x128xf32, #tpu.memory_space<any>> -> memref<1x128xf32, #tpu.memory_space<any>>
      %c3_i32_67 = arith.constant 3 : i32
      %c0_i32_68 = arith.constant 0 : i32
      %83 = tpu.memref_slice %arg19[%c3_i32_67, %c0_i32_68] : memref<8x128xf32, #tpu.memory_space<vmem>> -> memref<1x128xf32, #tpu.memory_space<vmem>>
      %84 = tpu.memref_slice %arg22[%c3_i32_65] : memref<8x!tpu.dma_semaphore, #tpu.memory_space<semaphore_mem>> -> memref<1x!tpu.dma_semaphore, #tpu.memory_space<semaphore_mem>>
      %85 = tpu.memref_squeeze %84 : memref<1x!tpu.dma_semaphore, #tpu.memory_space<semaphore_mem>> -> memref<!tpu.dma_semaphore, #tpu.memory_space<semaphore_mem>>
      tpu.wait_dma2 semaphore(%85 : memref<!tpu.dma_semaphore, #tpu.memory_space<semaphore_mem>>) src(%82 : memref<1x128xf32, #tpu.memory_space<any>>) dst(%83 : memref<1x128xf32, #tpu.memory_space<vmem>>)
      %c4_i32_69 = arith.constant 4 : i32
      %c0_i32_70 = arith.constant 0 : i32
      %86 = tpu.memref_slice %arg3[%34, %c0_i32_70] : memref<256x128xf32, #tpu.memory_space<any>> -> memref<1x128xf32, #tpu.memory_space<any>>
      %c4_i32_71 = arith.constant 4 : i32
      %c0_i32_72 = arith.constant 0 : i32
      %87 = tpu.memref_slice %arg19[%c4_i32_71, %c0_i32_72] : memref<8x128xf32, #tpu.memory_space<vmem>> -> memref<1x128xf32, #tpu.memory_space<vmem>>
      %88 = tpu.memref_slice %arg22[%c4_i32_69] : memref<8x!tpu.dma_semaphore, #tpu.memory_space<semaphore_mem>> -> memref<1x!tpu.dma_semaphore, #tpu.memory_space<semaphore_mem>>
      %89 = tpu.memref_squeeze %88 : memref<1x!tpu.dma_semaphore, #tpu.memory_space<semaphore_mem>> -> memref<!tpu.dma_semaphore, #tpu.memory_space<semaphore_mem>>
      tpu.wait_dma2 semaphore(%89 : memref<!tpu.dma_semaphore, #tpu.memory_space<semaphore_mem>>) src(%86 : memref<1x128xf32, #tpu.memory_space<any>>) dst(%87 : memref<1x128xf32, #tpu.memory_space<vmem>>)
      %c5_i32_73 = arith.constant 5 : i32
      %c0_i32_74 = arith.constant 0 : i32
      %90 = tpu.memref_slice %arg3[%39, %c0_i32_74] : memref<256x128xf32, #tpu.memory_space<any>> -> memref<1x128xf32, #tpu.memory_space<any>>
      %c5_i32_75 = arith.constant 5 : i32
      %c0_i32_76 = arith.constant 0 : i32
      %91 = tpu.memref_slice %arg19[%c5_i32_75, %c0_i32_76] : memref<8x128xf32, #tpu.memory_space<vmem>> -> memref<1x128xf32, #tpu.memory_space<vmem>>
      %92 = tpu.memref_slice %arg22[%c5_i32_73] : memref<8x!tpu.dma_semaphore, #tpu.memory_space<semaphore_mem>> -> memref<1x!tpu.dma_semaphore, #tpu.memory_space<semaphore_mem>>
      %93 = tpu.memref_squeeze %92 : memref<1x!tpu.dma_semaphore, #tpu.memory_space<semaphore_mem>> -> memref<!tpu.dma_semaphore, #tpu.memory_space<semaphore_mem>>
      tpu.wait_dma2 semaphore(%93 : memref<!tpu.dma_semaphore, #tpu.memory_space<semaphore_mem>>) src(%90 : memref<1x128xf32, #tpu.memory_space<any>>) dst(%91 : memref<1x128xf32, #tpu.memory_space<vmem>>)
      %c6_i32_77 = arith.constant 6 : i32
      %c0_i32_78 = arith.constant 0 : i32
      %94 = tpu.memref_slice %arg3[%44, %c0_i32_78] : memref<256x128xf32, #tpu.memory_space<any>> -> memref<1x128xf32, #tpu.memory_space<any>>
      %c6_i32_79 = arith.constant 6 : i32
      %c0_i32_80 = arith.constant 0 : i32
      %95 = tpu.memref_slice %arg19[%c6_i32_79, %c0_i32_80] : memref<8x128xf32, #tpu.memory_space<vmem>> -> memref<1x128xf32, #tpu.memory_space<vmem>>
      %96 = tpu.memref_slice %arg22[%c6_i32_77] : memref<8x!tpu.dma_semaphore, #tpu.memory_space<semaphore_mem>> -> memref<1x!tpu.dma_semaphore, #tpu.memory_space<semaphore_mem>>
      %97 = tpu.memref_squeeze %96 : memref<1x!tpu.dma_semaphore, #tpu.memory_space<semaphore_mem>> -> memref<!tpu.dma_semaphore, #tpu.memory_space<semaphore_mem>>
      tpu.wait_dma2 semaphore(%97 : memref<!tpu.dma_semaphore, #tpu.memory_space<semaphore_mem>>) src(%94 : memref<1x128xf32, #tpu.memory_space<any>>) dst(%95 : memref<1x128xf32, #tpu.memory_space<vmem>>)
      %c7_i32_81 = arith.constant 7 : i32
      %c0_i32_82 = arith.constant 0 : i32
      %98 = tpu.memref_slice %arg3[%49, %c0_i32_82] : memref<256x128xf32, #tpu.memory_space<any>> -> memref<1x128xf32, #tpu.memory_space<any>>
      %c7_i32_83 = arith.constant 7 : i32
      %c0_i32_84 = arith.constant 0 : i32
      %99 = tpu.memref_slice %arg19[%c7_i32_83, %c0_i32_84] : memref<8x128xf32, #tpu.memory_space<vmem>> -> memref<1x128xf32, #tpu.memory_space<vmem>>
      %100 = tpu.memref_slice %arg22[%c7_i32_81] : memref<8x!tpu.dma_semaphore, #tpu.memory_space<semaphore_mem>> -> memref<1x!tpu.dma_semaphore, #tpu.memory_space<semaphore_mem>>
      %101 = tpu.memref_squeeze %100 : memref<1x!tpu.dma_semaphore, #tpu.memory_space<semaphore_mem>> -> memref<!tpu.dma_semaphore, #tpu.memory_space<semaphore_mem>>
      tpu.wait_dma2 semaphore(%101 : memref<!tpu.dma_semaphore, #tpu.memory_space<semaphore_mem>>) src(%98 : memref<1x128xf32, #tpu.memory_space<any>>) dst(%99 : memref<1x128xf32, #tpu.memory_space<vmem>>)
      %c0_85 = arith.constant 0 : index
      %c0_86 = arith.constant 0 : index
      %102 = vector.load %arg19[%c0_85, %c0_86] : memref<8x128xf32, #tpu.memory_space<vmem>>, vector<8x128xf32>
      %103 = arith.truncf %102 : vector<8x128xf32> to vector<8x128xbf16>
      %c0_87 = arith.constant 0 : index
      %c0_88 = arith.constant 0 : index
      %104 = vector.load %arg4[%c0_87, %c0_88] : memref<256x512xbf16, #tpu.memory_space<vmem>>, vector<128x512xbf16>
      %cst_89 = arith.constant dense<0.000000e+00> : vector<8x512xf32>
      %105 = tpu.matmul %103, %104, %cst_89 {dimension_numbers = #tpu.dot_dimension_numbers<[1], [0], [0], [1], [0, 0, 1, 1], [], []>} : vector<8x128xbf16>, vector<128x512xbf16>, vector<8x512xf32> -> vector<8x512xf32>
      %106 = arith.addf %69, %105 : vector<8x512xf32>
      %107 = vector.extract_strided_slice %106 {offsets = [0, 0], sizes = [8, 128], strides = [1, 1]} : vector<8x512xf32> to vector<8x128xf32>
      %108 = arith.negf %107 : vector<8x128xf32>
      %109 = math.exp %108 : vector<8x128xf32>
      %cst_90 = arith.constant 1.000000e+00 : f32
      %110 = vector.broadcast %cst_90 : f32 to vector<8x128xf32>
      %111 = arith.addf %110, %109 : vector<8x128xf32>
      %112 = arith.divf %110, %111 : vector<8x128xf32>
      %113 = vector.extract_strided_slice %106 {offsets = [0, 128], sizes = [8, 128], strides = [1, 1]} : vector<8x512xf32> to vector<8x128xf32>
      %114 = arith.negf %113 : vector<8x128xf32>
      %115 = math.exp %114 : vector<8x128xf32>
      %cst_91 = arith.constant 1.000000e+00 : f32
      %116 = vector.broadcast %cst_91 : f32 to vector<8x128xf32>
      %117 = arith.addf %116, %115 : vector<8x128xf32>
      %118 = arith.divf %116, %117 : vector<8x128xf32>
      %119 = vector.extract_strided_slice %106 {offsets = [0, 256], sizes = [8, 128], strides = [1, 1]} : vector<8x512xf32> to vector<8x128xf32>
      %120 = math.tanh %119 : vector<8x128xf32>
      %121 = vector.extract_strided_slice %106 {offsets = [0, 384], sizes = [8, 128], strides = [1, 1]} : vector<8x512xf32> to vector<8x128xf32>
      %122 = arith.negf %121 : vector<8x128xf32>
      %123 = math.exp %122 : vector<8x128xf32>
      %cst_92 = arith.constant 1.000000e+00 : f32
      %124 = vector.broadcast %cst_92 : f32 to vector<8x128xf32>
      %125 = arith.addf %124, %123 : vector<8x128xf32>
      %126 = arith.divf %124, %125 : vector<8x128xf32>
      %c0_93 = arith.constant 0 : index
      %c0_94 = arith.constant 0 : index
      %c0_95 = arith.constant 0 : index
      %127 = vector.load %arg9[%c0_93, %c0_94, %c0_95] : memref<2x8x128xf32, #tpu.memory_space<vmem>>, vector<1x8x128xf32>
      %128 = vector.shape_cast %127 : vector<1x8x128xf32> to vector<8x128xf32>
      %129 = arith.mulf %118, %128 : vector<8x128xf32>
      %130 = arith.mulf %112, %120 : vector<8x128xf32>
      %131 = arith.addf %129, %130 : vector<8x128xf32>
      %132 = math.tanh %131 : vector<8x128xf32>
      %133 = arith.mulf %126, %132 : vector<8x128xf32>
      %c0_96 = arith.constant 0 : index
      %c0_97 = arith.constant 0 : index
      %c0_98 = arith.constant 0 : index
      %134 = vector.load %arg16[%c0_96, %c0_97, %c0_98] : memref<2x8x128xf32, #tpu.memory_space<vmem>>, vector<1x8x128xf32>
      %135 = vector.shape_cast %134 : vector<1x8x128xf32> to vector<8x128xf32>
      %136 = vector.shape_cast %133 : vector<8x128xf32> to vector<1x8x128xf32>
      tpu.vector_store %arg16[%c0_96, %c0_97, %c0_98], %136 {strides = array<i32>} : memref<2x8x128xf32, #tpu.memory_space<vmem>>, vector<1x8x128xf32>,
      %c0_99 = arith.constant 0 : index
      %c0_100 = arith.constant 0 : index
      %c0_101 = arith.constant 0 : index
      %137 = vector.load %arg17[%c0_99, %c0_100, %c0_101] : memref<2x8x128xf32, #tpu.memory_space<vmem>>, vector<1x8x128xf32>
      %138 = vector.shape_cast %137 : vector<1x8x128xf32> to vector<8x128xf32>
      %139 = vector.shape_cast %131 : vector<8x128xf32> to vector<1x8x128xf32>
      tpu.vector_store %arg17[%c0_99, %c0_100, %c0_101], %139 {strides = array<i32>} : memref<2x8x128xf32, #tpu.memory_space<vmem>>, vector<1x8x128xf32>,
      %140 = arith.truncf %133 : vector<8x128xf32> to vector<8x128xbf16>
      %c0_102 = arith.constant 0 : index
      %c0_103 = arith.constant 0 : index
      %c0_104 = arith.constant 0 : index
      %141 = vector.load %arg5[%c0_102, %c0_103, %c0_104] : memref<1x128x512xbf16, #tpu.memory_space<vmem>>, vector<1x128x512xbf16>
      %142 = vector.shape_cast %141 : vector<1x128x512xbf16> to vector<128x512xbf16>
      %cst_105 = arith.constant dense<0.000000e+00> : vector<8x512xf32>
      %143 = tpu.matmul %140, %142, %cst_105 {dimension_numbers = #tpu.dot_dimension_numbers<[1], [0], [0], [1], [0, 0, 1, 1], [], []>} : vector<8x128xbf16>, vector<128x512xbf16>, vector<8x512xf32> -> vector<8x512xf32>
      %144 = vector.extract_strided_slice %57 {offsets = [1, 0, 0], sizes = [1, 8, 512], strides = [1, 1, 1]} : vector<2x8x512xf32> to vector<1x8x512xf32>
      %145 = vector.shape_cast %144 : vector<1x8x512xf32> to vector<8x512xf32>
      %146 = arith.addf %143, %145 : vector<8x512xf32>
      %c1_106 = arith.constant 1 : index
      %c0_107 = arith.constant 0 : index
      %c0_108 = arith.constant 0 : index
      %147 = vector.load %arg7[%c1_106, %c0_107, %c0_108] : memref<2x1x512xbf16, #tpu.memory_space<vmem>>, vector<1x1x512xbf16>
      %148 = vector.shape_cast %147 : vector<1x1x512xbf16> to vector<1x512xbf16>
      %149 = arith.extf %148 : vector<1x512xbf16> to vector<1x512xf32>
      %150 = vector.broadcast %149 : vector<1x512xf32> to vector<8x512xf32>
      %151 = arith.addf %146, %150 : vector<8x512xf32>
      %152 = vector.extract_strided_slice %151 {offsets = [0, 0], sizes = [8, 128], strides = [1, 1]} : vector<8x512xf32> to vector<8x128xf32>
      %153 = arith.negf %152 : vector<8x128xf32>
      %154 = math.exp %153 : vector<8x128xf32>
      %cst_109 = arith.constant 1.000000e+00 : f32
      %155 = vector.broadcast %cst_109 : f32 to vector<8x128xf32>
      %156 = arith.addf %155, %154 : vector<8x128xf32>
      %157 = arith.divf %155, %156 : vector<8x128xf32>
      %158 = vector.extract_strided_slice %151 {offsets = [0, 128], sizes = [8, 128], strides = [1, 1]} : vector<8x512xf32> to vector<8x128xf32>
      %159 = arith.negf %158 : vector<8x128xf32>
      %160 = math.exp %159 : vector<8x128xf32>
      %cst_110 = arith.constant 1.000000e+00 : f32
      %161 = vector.broadcast %cst_110 : f32 to vector<8x128xf32>
      %162 = arith.addf %161, %160 : vector<8x128xf32>
      %163 = arith.divf %161, %162 : vector<8x128xf32>
      %164 = vector.extract_strided_slice %151 {offsets = [0, 256], sizes = [8, 128], strides = [1, 1]} : vector<8x512xf32> to vector<8x128xf32>
      %165 = math.tanh %164 : vector<8x128xf32>
      %166 = vector.extract_strided_slice %151 {offsets = [0, 384], sizes = [8, 128], strides = [1, 1]} : vector<8x512xf32> to vector<8x128xf32>
      %167 = arith.negf %166 : vector<8x128xf32>
      %168 = math.exp %167 : vector<8x128xf32>
      %cst_111 = arith.constant 1.000000e+00 : f32
      %169 = vector.broadcast %cst_111 : f32 to vector<8x128xf32>
      %170 = arith.addf %169, %168 : vector<8x128xf32>
      %171 = arith.divf %169, %170 : vector<8x128xf32>
      %c1_112 = arith.constant 1 : index
      %c0_113 = arith.constant 0 : index
      %c0_114 = arith.constant 0 : index
      %172 = vector.load %arg9[%c1_112, %c0_113, %c0_114] : memref<2x8x128xf32, #tpu.memory_space<vmem>>, vector<1x8x128xf32>
      %173 = vector.shape_cast %172 : vector<1x8x128xf32> to vector<8x128xf32>
      %174 = arith.mulf %163, %173 : vector<8x128xf32>
      %175 = arith.mulf %157, %165 : vector<8x128xf32>
      %176 = arith.addf %174, %175 : vector<8x128xf32>
      %177 = math.tanh %176 : vector<8x128xf32>
      %178 = arith.mulf %171, %177 : vector<8x128xf32>
      %c1_115 = arith.constant 1 : index
      %c0_116 = arith.constant 0 : index
      %c0_117 = arith.constant 0 : index
      %179 = vector.load %arg16[%c1_115, %c0_116, %c0_117] : memref<2x8x128xf32, #tpu.memory_space<vmem>>, vector<1x8x128xf32>
      %180 = vector.shape_cast %179 : vector<1x8x128xf32> to vector<8x128xf32>
      %181 = vector.shape_cast %178 : vector<8x128xf32> to vector<1x8x128xf32>
      tpu.vector_store %arg16[%c1_115, %c0_116, %c0_117], %181 {strides = array<i32>} : memref<2x8x128xf32, #tpu.memory_space<vmem>>, vector<1x8x128xf32>,
      %c1_118 = arith.constant 1 : index
      %c0_119 = arith.constant 0 : index
      %c0_120 = arith.constant 0 : index
      %182 = vector.load %arg17[%c1_118, %c0_119, %c0_120] : memref<2x8x128xf32, #tpu.memory_space<vmem>>, vector<1x8x128xf32>
      %183 = vector.shape_cast %182 : vector<1x8x128xf32> to vector<8x128xf32>
      %184 = vector.shape_cast %176 : vector<8x128xf32> to vector<1x8x128xf32>
      tpu.vector_store %arg17[%c1_118, %c0_119, %c0_120], %184 {strides = array<i32>} : memref<2x8x128xf32, #tpu.memory_space<vmem>>, vector<1x8x128xf32>,
      %c0_i32_121 = arith.constant 0 : i32
      %c0_i32_122 = arith.constant 0 : i32
      %c0_i32_123 = arith.constant 0 : i32
      %185 = tpu.memref_slice %arg11[%10, %c0_i32_122, %c0_i32_123] : memref<16x8x128xf32, #tpu.memory_space<any>> -> memref<9x8x128xf32, #tpu.memory_space<any>>
      %186 = tpu.memref_slice %arg23[%c0_i32_121] : memref<1x!tpu.dma_semaphore, #tpu.memory_space<semaphore_mem>> -> memref<1x!tpu.dma_semaphore, #tpu.memory_space<semaphore_mem>>
      %187 = tpu.memref_squeeze %186 : memref<1x!tpu.dma_semaphore, #tpu.memory_space<semaphore_mem>> -> memref<!tpu.dma_semaphore, #tpu.memory_space<semaphore_mem>>
      tpu.wait_dma2 semaphore(%187 : memref<!tpu.dma_semaphore, #tpu.memory_space<semaphore_mem>>) src(%185 : memref<9x8x128xf32, #tpu.memory_space<any>>) dst(%arg20 : memref<9x8x128xf32, #tpu.memory_space<vmem>>)
      %c0_124 = arith.constant 0 : index
      %c0_125 = arith.constant 0 : index
      %c0_126 = arith.constant 0 : index
      %188 = vector.load %arg20[%c0_124, %c0_125, %c0_126] : memref<9x8x128xf32, #tpu.memory_space<vmem>>, vector<9x8x128xf32>
      %189 = vector.shape_cast %178 : vector<8x128xf32> to vector<1x8x128xf32>
      %190 = vector.broadcast %189 : vector<1x8x128xf32> to vector<9x8x128xf32>
      %191 = arith.mulf %190, %188 : vector<9x8x128xf32>
      %cst_127 = arith.constant dense<0.000000e+00> : vector<9x8xf32>
      %192 = vector.multi_reduction <add>, %191, %cst_127 [2] : vector<9x8x128xf32> to vector<9x8xf32>
      %193 = tpu.iota {dimensions = array<i32: 0>} : vector<9x8xi32>
      %194 = vector.broadcast %10 : i32 to vector<9x8xi32>
      %195 = arith.addi %194, %193 : vector<9x8xi32>
      %c0_128 = arith.constant 0 : index
      %c0_129 = arith.constant 0 : index
      %196 = vector.load %arg12[%c0_128, %c0_129] : memref<1x8xi32, #tpu.memory_space<vmem>>, vector<1x8xi32>
      %197 = vector.broadcast %196 : vector<1x8xi32> to vector<9x8xi32>
      %198 = arith.cmpi slt, %195, %197 : vector<9x8xi32>
      %c4_i32_130 = arith.constant 4 : i32
      %199 = arith.subi %7, %c4_i32_130 : i32
      %200 = vector.broadcast %199 : i32 to vector<9x8xi32>
      %201 = arith.cmpi sge, %195, %200 : vector<9x8xi32>
      %202 = arith.andi %198, %201 : vector<9x8xi1>
      %c4_i32_131 = arith.constant 4 : i32
      %203 = arith.addi %7, %c4_i32_131 : i32
      %204 = vector.broadcast %203 : i32 to vector<9x8xi32>
      %205 = arith.cmpi sle, %195, %204 : vector<9x8xi32>
      %206 = arith.andi %202, %205 : vector<9x8xi1>
      %cst_132 = arith.constant -1.000000e+30 : f32
      %207 = vector.broadcast %cst_132 : f32 to vector<9x8xf32>
      %208 = arith.select %206, %192, %207 : vector<9x8xi1>, vector<9x8xf32>
      %cst_133 = arith.constant dense<0xFF800000> : vector<8xf32>
      %209 = vector.multi_reduction <maximumf>, %208, %cst_133 [0] : vector<9x8xf32> to vector<8xf32>
      %210 = vector.shape_cast %209 : vector<8xf32> to vector<1x8xf32>
      %211 = vector.broadcast %210 : vector<1x8xf32> to vector<9x8xf32>
      %212 = arith.subf %208, %211 : vector<9x8xf32>
      %213 = math.exp %212 : vector<9x8xf32>
      %cst_134 = arith.constant dense<0.000000e+00> : vector<8xf32>
      %214 = vector.multi_reduction <add>, %213, %cst_134 [0] : vector<9x8xf32> to vector<8xf32>
      %215 = vector.shape_cast %214 : vector<8xf32> to vector<1x8xf32>
      %216 = vector.broadcast %215 : vector<1x8xf32> to vector<9x8xf32>
      %217 = arith.divf %213, %216 : vector<9x8xf32>
      %218 = vector.broadcast %7 : i32 to vector<9x8xi32>
      %219 = arith.subi %195, %218 : vector<9x8xi32>
      %220 = arith.sitofp %219 : vector<9x8xi32> to vector<9x8xf32>
      %221 = arith.mulf %220, %220 : vector<9x8xf32>
      %cst_135 = arith.constant 0.000000e+00 : f32
      %222 = vector.broadcast %cst_135 : f32 to vector<9x8xf32>
      %223 = arith.subf %222, %221 : vector<9x8xf32>
      %cst_136 = arith.constant 8.000000e+00 : f32
      %224 = vector.broadcast %cst_136 : f32 to vector<9x8xf32>
      %225 = arith.divf %223, %224 : vector<9x8xf32>
      %226 = math.exp %225 : vector<9x8xf32>
      %227 = arith.mulf %217, %226 : vector<9x8xf32>
      %cst_137 = arith.constant 1.000000e+00 : f32
      %cst_138 = arith.constant 0.000000e+00 : f32
      %228 = vector.broadcast %cst_137 : f32 to vector<9x8xf32>
      %229 = vector.broadcast %cst_138 : f32 to vector<9x8xf32>
      %230 = arith.select %206, %228, %229 : vector<9x8xi1>, vector<9x8xf32>
      %cst_139 = arith.constant dense<0xFF800000> : vector<8xf32>
      %231 = vector.multi_reduction <maximumf>, %230, %cst_139 [0] : vector<9x8xf32> to vector<8xf32>
      %cst_140 = arith.constant 0.000000e+00 : f32
      %232 = vector.broadcast %cst_140 : f32 to vector<8xf32>
      %233 = arith.cmpf ogt, %231, %232 : vector<8xf32>
      %234 = vector.shape_cast %233 : vector<8xi1> to vector<1x8xi1>
      %cst_141 = arith.constant 0.000000e+00 : f32
      %235 = vector.shape_cast %234 : vector<1x8xi1> to vector<1x8xi1>
      %236 = vector.broadcast %235 : vector<1x8xi1> to vector<9x8xi1>
      %237 = vector.broadcast %cst_141 : f32 to vector<9x8xf32>
      %238 = arith.select %236, %227, %237 : vector<9x8xi1>, vector<9x8xf32>
      %239 = vector.shape_cast %238 : vector<9x8xf32> to vector<9x8x1xf32>
      %240 = vector.broadcast %239 : vector<9x8x1xf32> to vector<9x8x128xf32>
      %241 = arith.mulf %240, %188 : vector<9x8x128xf32>
      %cst_142 = arith.constant dense<0.000000e+00> : vector<8x128xf32>
      %242 = vector.multi_reduction <add>, %241, %cst_142 [0] : vector<9x8x128xf32> to vector<8x128xf32>
      %243 = arith.truncf %178 : vector<8x128xf32> to vector<8x128xbf16>
      %c0_143 = arith.constant 0 : index
      %c0_144 = arith.constant 0 : index
      %244 = vector.load %arg13[%c0_143, %c0_144] : memref<256x128xbf16, #tpu.memory_space<vmem>>, vector<128x128xbf16>
      %cst_145 = arith.constant dense<0.000000e+00> : vector<8x128xf32>
      %245 = tpu.matmul %243, %244, %cst_145 {dimension_numbers = #tpu.dot_dimension_numbers<[1], [0], [0], [1], [0, 0, 1, 1], [], []>} : vector<8x128xbf16>, vector<128x128xbf16>, vector<8x128xf32> -> vector<8x128xf32>
      %246 = arith.truncf %242 : vector<8x128xf32> to vector<8x128xbf16>
      %c128_146 = arith.constant 128 : index
      %c0_147 = arith.constant 0 : index
      %247 = vector.load %arg13[%c128_146, %c0_147] : memref<256x128xbf16, #tpu.memory_space<vmem>>, vector<128x128xbf16>
      %cst_148 = arith.constant dense<0.000000e+00> : vector<8x128xf32>
      %248 = tpu.matmul %246, %247, %cst_148 {dimension_numbers = #tpu.dot_dimension_numbers<[1], [0], [0], [1], [0, 0, 1, 1], [], []>} : vector<8x128xbf16>, vector<128x128xbf16>, vector<8x128xf32> -> vector<8x128xf32>
      %249 = arith.addf %245, %248 : vector<8x128xf32>
      %250 = math.tanh %249 : vector<8x128xf32>
      %c0_149 = arith.constant 0 : index
      %c0_150 = arith.constant 0 : index
      %251 = vector.load %arg15[%c0_149, %c0_150] : memref<8x128xf32, #tpu.memory_space<vmem>>, vector<8x128xf32>
      tpu.vector_store %arg15[%c0_149, %c0_150], %250 {strides = array<i32>} : memref<8x128xf32, #tpu.memory_space<vmem>>, vector<8x128xf32>,
      %252 = arith.truncf %250 : vector<8x128xf32> to vector<8x128xbf16>
      %c0_151 = arith.constant 0 : index
      %c0_152 = arith.constant 0 : index
      %253 = vector.load %arg21[%c0_151, %c0_152] : memref<8x128xbf16, #tpu.memory_space<vmem>>, vector<8x128xbf16>
      tpu.vector_store %arg21[%c0_151, %c0_152], %252 {strides = array<i32>} : memref<8x128xbf16, #tpu.memory_space<vmem>>, vector<8x128xbf16>,
    } else {
    }
    %c0 = arith.constant 0 : index
    %c0_1 = arith.constant 0 : index
    %3 = vector.load %arg21[%c0, %c0_1] : memref<8x128xbf16, #tpu.memory_space<vmem>>, vector<8x128xbf16>
    %c0_2 = arith.constant 0 : index
    %c0_3 = arith.constant 0 : index
    %4 = vector.load %arg14[%c0_2, %c0_3] : memref<128x128xbf16, #tpu.memory_space<vmem>>, vector<128x128xbf16>
    %cst = arith.constant dense<0.000000e+00> : vector<8x128xf32>
    %5 = tpu.matmul %3, %4, %cst {dimension_numbers = #tpu.dot_dimension_numbers<[1], [0], [0], [1], [0, 0, 1, 1], [], []>} : vector<8x128xbf16>, vector<128x128xbf16>, vector<8x128xf32> -> vector<8x128xf32>
    %c0_4 = arith.constant 0 : index
    %c0_5 = arith.constant 0 : index
    %6 = vector.load %arg18[%c0_4, %c0_5] : memref<8x128xf32, #tpu.memory_space<vmem>>, vector<8x128xf32>
    tpu.vector_store %arg18[%c0_4, %c0_5], %5 {strides = array<i32>} : memref<8x128xf32, #tpu.memory_space<vmem>>, vector<8x128xf32>,
    return
  }
  func.func @transform_1(%arg0: i32, %arg1: memref<1xi32, #tpu.memory_space<smem>>, %arg2: memref<8xi32, #tpu.memory_space<smem>>) -> (i32, i32) {
    %c0_i32 = arith.constant 0 : i32
    %c0_i32_0 = arith.constant 0 : i32
    %c0_i32_1 = arith.constant 0 : i32
    return %c0_i32, %c0_i32_0 : i32, i32
  }
  func.func @transform_2(%arg0: i32, %arg1: memref<1xi32, #tpu.memory_space<smem>>, %arg2: memref<8xi32, #tpu.memory_space<smem>>) -> (i32, i32, i32) {
    %c0_i32 = arith.constant 0 : i32
    %c0_i32_0 = arith.constant 0 : i32
    %c0_i32_1 = arith.constant 0 : i32
    %c0_i32_2 = arith.constant 0 : i32
    return %c0_i32, %c0_i32_0, %c0_i32_1 : i32, i32, i32
  }
  func.func @transform_3(%arg0: i32, %arg1: memref<1xi32, #tpu.memory_space<smem>>, %arg2: memref<8xi32, #tpu.memory_space<smem>>) -> (i32, i32, i32) {
    %c0_i32 = arith.constant 0 : i32
    %c0_i32_0 = arith.constant 0 : i32
    %c0_i32_1 = arith.constant 0 : i32
    %c0_i32_2 = arith.constant 0 : i32
    return %c0_i32, %c0_i32_0, %c0_i32_1 : i32, i32, i32
  }
  func.func @transform_4(%arg0: i32, %arg1: memref<1xi32, #tpu.memory_space<smem>>, %arg2: memref<8xi32, #tpu.memory_space<smem>>) -> (i32, i32, i32) {
    %c0_i32 = arith.constant 0 : i32
    %c0_i32_0 = arith.constant 0 : i32
    %c0_i32_1 = arith.constant 0 : i32
    %c0_i32_2 = arith.constant 0 : i32
    return %c0_i32, %c0_i32_0, %c0_i32_1 : i32, i32, i32
  }
  func.func @transform_5(%arg0: i32, %arg1: memref<1xi32, #tpu.memory_space<smem>>, %arg2: memref<8xi32, #tpu.memory_space<smem>>) -> (i32, i32, i32) {
    %c0_i32 = arith.constant 0 : i32
    %c0_i32_0 = arith.constant 0 : i32
    %c0_i32_1 = arith.constant 0 : i32
    %c0_i32_2 = arith.constant 0 : i32
    return %c0_i32, %c0_i32_0, %c0_i32_1 : i32, i32, i32
  }
  func.func @transform_6(%arg0: i32, %arg1: memref<1xi32, #tpu.memory_space<smem>>, %arg2: memref<8xi32, #tpu.memory_space<smem>>) -> (i32, i32, i32) {
    %c0_i32 = arith.constant 0 : i32
    %c0_i32_0 = arith.constant 0 : i32
    %c0_i32_1 = arith.constant 0 : i32
    %c0_i32_2 = arith.constant 0 : i32
    return %c0_i32, %c0_i32_0, %c0_i32_1 : i32, i32, i32
  }
  func.func @transform_7(%arg0: i32, %arg1: memref<1xi32, #tpu.memory_space<smem>>, %arg2: memref<8xi32, #tpu.memory_space<smem>>) -> (i32, i32) {
    %c0_i32 = arith.constant 0 : i32
    %c0_i32_0 = arith.constant 0 : i32
    %c0_i32_1 = arith.constant 0 : i32
    return %c0_i32, %c0_i32_0 : i32, i32
  }
  func.func @transform_9(%arg0: i32, %arg1: memref<1xi32, #tpu.memory_space<smem>>, %arg2: memref<8xi32, #tpu.memory_space<smem>>) -> (i32, i32) {
    %c0_i32 = arith.constant 0 : i32
    %c0_i32_0 = arith.constant 0 : i32
    %c0_i32_1 = arith.constant 0 : i32
    return %c0_i32, %c0_i32_0 : i32, i32
  }
  func.func @transform_10(%arg0: i32, %arg1: memref<1xi32, #tpu.memory_space<smem>>, %arg2: memref<8xi32, #tpu.memory_space<smem>>) -> (i32, i32) {
    %c0_i32 = arith.constant 0 : i32
    %c0_i32_0 = arith.constant 0 : i32
    %c0_i32_1 = arith.constant 0 : i32
    return %c0_i32, %c0_i32_0 : i32, i32
  }
  func.func @transform_11(%arg0: i32, %arg1: memref<1xi32, #tpu.memory_space<smem>>, %arg2: memref<8xi32, #tpu.memory_space<smem>>) -> (i32, i32) {
    %c0_i32 = arith.constant 0 : i32
    %c0_i32_0 = arith.constant 0 : i32
    return %c0_i32, %arg0 : i32, i32
  }
  func.func @transform_12(%arg0: i32, %arg1: memref<1xi32, #tpu.memory_space<smem>>, %arg2: memref<8xi32, #tpu.memory_space<smem>>) -> (i32, i32) {
    %c0_i32 = arith.constant 0 : i32
    %c0_i32_0 = arith.constant 0 : i32
    %c0_i32_1 = arith.constant 0 : i32
    return %c0_i32, %c0_i32_0 : i32, i32
  }
  func.func @transform_13(%arg0: i32, %arg1: memref<1xi32, #tpu.memory_space<smem>>, %arg2: memref<8xi32, #tpu.memory_space<smem>>) -> (i32, i32, i32) {
    %c0_i32 = arith.constant 0 : i32
    %c0_i32_0 = arith.constant 0 : i32
    %c0_i32_1 = arith.constant 0 : i32
    %c0_i32_2 = arith.constant 0 : i32
    return %c0_i32, %c0_i32_0, %c0_i32_1 : i32, i32, i32
  }
  func.func @transform_14(%arg0: i32, %arg1: memref<1xi32, #tpu.memory_space<smem>>, %arg2: memref<8xi32, #tpu.memory_space<smem>>) -> (i32, i32, i32) {
    %c0_i32 = arith.constant 0 : i32
    %c0_i32_0 = arith.constant 0 : i32
    %c0_i32_1 = arith.constant 0 : i32
    %c0_i32_2 = arith.constant 0 : i32
    return %c0_i32, %c0_i32_0, %c0_i32_1 : i32, i32, i32
  }
  func.func @transform_15(%arg0: i32, %arg1: memref<1xi32, #tpu.memory_space<smem>>, %arg2: memref<8xi32, #tpu.memory_space<smem>>) -> (i32, i32) {
    %c0_i32 = arith.constant 0 : i32
    %c0_i32_0 = arith.constant 0 : i32
    return %c0_i32, %arg0 : i32, i32
  }
}

</mosaic_0001>

<llo_original>
// kernel: tpu_custom_call.1
$region0: #{tpu_custom_call.1}
  #allocation0 [shape = 'u32[]', space=smem, size = 0x4, offset = 0x4, fixed_abs, tag = 'smem constant byte address 0x4 - core index']
  #allocation1 [shape = 'u32[144,128]{1,0:T(1,128)}', space=vmem, size = 0x12000, scoped, tag = 'internal scratch']
  #allocation2 [shape = 'f32[8,128]{1,0:T(8,128)}', space=vmem, size = 0x1000, scoped, tag = 'scratch operand']
  #allocation3 [shape = 'f32[9,8,128]{2,1,0:T(8,128)}', space=vmem, size = 0x9000, scoped, tag = 'scratch operand']
  #allocation4 [shape = 'bf16[8,128]{1,0:T(8,128)(2,1)}', space=vmem, size = 0x800, scoped, tag = 'scratch operand']
  #allocation5 [shape = 's32[8]{0}', space=sflag, size = 0x20, scoped, tag = 'scratch operand']
  #allocation6 [shape = 's32[1]{0}', space=sflag, size = 0x4, scoped, tag = 'scratch operand']
  #allocation7 [shape = 's32[1]{0}', space=sflag, size = 0x4, scoped, tag = 'scoped memory for tpu_custom_call.1']
  #allocation8 [shape = 's32[1]{0:T(128)S(6)}', space=smem, size = 0x200, scoped, tag = 'prefetched SMEM operand 0']
  #allocation9 [shape = 'u8[512]{0}', space=smem, size = 0x200, scoped, tag = 'prefetched SMEM operand 1']
  #allocation25 [shape = 's32[]', space=sflag, size = 0x4, offset = 0, fixed_abs, tag = 'sflag constant byte address 0x0 - dummy sync flag']
  #allocation26 [shape = 's32[]', space=sflag, size = 0x4, offset = 0, fixed_abs, tag = 'sflag constant byte address 0x0 - dummy sync flag']
  #allocation27 [shape = 'u32[]', space=smem, size = 0x4, offset = 0x44, fixed_abs, tag = 'smem constant byte address 0x44 - assertion arg 0']
  #allocation28 [shape = 'u32[]', space=smem, size = 0x4, offset = 0x48, fixed_abs, tag = 'smem constant byte address 0x48 - assertion arg 1']
  #allocation29 [shape = 's32[]', space=sflag, size = 0x4, offset = 0, fixed_abs, tag = 'sflag constant byte address 0x0 - dummy sync flag']
  #allocation30 [shape = 's32[]', space=sflag, size = 0x4, offset = 0, fixed_abs, tag = 'sflag constant byte address 0x0 - dummy sync flag']
  #allocation31 [shape = 's32[]', space=sflag, size = 0x4, offset = 0, fixed_abs, tag = 'sflag constant byte address 0x0 - dummy sync flag']
  #allocation32 [shape = 's32[]', space=sflag, size = 0x4, offset = 0, fixed_abs, tag = 'sflag constant byte address 0x0 - dummy sync flag']
  #allocation33 [shape = 's32[]', space=sflag, size = 0x4, offset = 0, fixed_abs, tag = 'sflag constant byte address 0x0 - dummy sync flag']
  #allocation34 [shape = 's32[]', space=sflag, size = 0x4, offset = 0, fixed_abs, tag = 'sflag constant byte address 0x0 - dummy sync flag']
  #allocation35 [shape = 's32[]', space=sflag, size = 0x4, offset = 0, fixed_abs, tag = 'sflag constant byte address 0x0 - dummy sync flag']
  #allocation36 [shape = 's32[]', space=sflag, size = 0x4, offset = 0, fixed_abs, tag = 'sflag constant byte address 0x0 - dummy sync flag']
  #allocation37 [shape = 's32[]', space=sflag, size = 0x4, offset = 0, fixed_abs, tag = 'sflag constant byte address 0x0 - dummy sync flag']
  #allocation38 [shape = 's32[]', space=sflag, size = 0x4, offset = 0, fixed_abs, tag = 'sflag constant byte address 0x0 - dummy sync flag']
  #allocation39 [shape = 's32[]', space=sflag, size = 0x4, offset = 0, fixed_abs, tag = 'sflag constant byte address 0x0 - dummy sync flag']
  #allocation40 [shape = 's32[]', space=sflag, size = 0x4, offset = 0, fixed_abs, tag = 'sflag constant byte address 0x0 - dummy sync flag']
  #allocation41 [shape = 's32[]', space=sflag, size = 0x4, offset = 0, fixed_abs, tag = 'sflag constant byte address 0x0 - dummy sync flag']
  #allocation42 [shape = 's32[]', space=sflag, size = 0x4, offset = 0, fixed_abs, tag = 'sflag constant byte address 0x0 - dummy sync flag']
  #allocation43 [shape = 's32[]', space=sflag, size = 0x4, offset = 0, fixed_abs, tag = 'sflag constant byte address 0x0 - dummy sync flag']
  #allocation44 [shape = 's32[]', space=sflag, size = 0x4, offset = 0, fixed_abs, tag = 'sflag constant byte address 0x0 - dummy sync flag']
  %s0 = inlined_call_operand.<no memory space> [shape: s32[1], index: 0, kind: input, shape index: {}]
  %s1 = inlined_call_operand.vmem [shape: s32[8], index: 1, kind: input, shape index: {}]
  %s2 = inlined_call_operand.hbm [shape: f32[256,128], index: 2, kind: input, shape index: {}]
  %s3 = inlined_call_operand.hbm [shape: bf16[256,512], index: 3, kind: input, shape index: {}]
  %s4 = inlined_call_operand.hbm [shape: bf16[1,128,512], index: 4, kind: input, shape index: {}]
  %s5 = inlined_call_operand.hbm [shape: bf16[2,128,512], index: 5, kind: input, shape index: {}]
  %s6 = inlined_call_operand.vmem [shape: bf16[2,1,512], index: 6, kind: input, shape index: {}]
  %s7 = inlined_call_operand.vmem [shape: f32[2,8,128], index: 7, kind: input, shape index: {}]
  %s8 = inlined_call_operand.vmem [shape: f32[2,8,128], index: 8, kind: input, shape index: {}]
  %s9 = inlined_call_operand.vmem [shape: f32[8,128], index: 9, kind: input, shape index: {}]
  %s10 = inlined_call_operand.hbm [shape: f32[16,8,128], index: 10, kind: input, shape index: {}]
  %s11 = inlined_call_operand.vmem [shape: s32[1,8], index: 11, kind: input, shape index: {}]
  %s12 = inlined_call_operand.hbm [shape: bf16[256,128], index: 12, kind: input, shape index: {}]
  %s13 = inlined_call_operand.hbm [shape: bf16[128,256], index: 13, kind: input, shape index: {}]
  %s14 = inlined_call_operand.hbm [shape: f32[8,128], index: 14, kind: output, shape index: {0}]
  %s15 = inlined_call_operand.hbm [shape: f32[2,8,128], index: 15, kind: output, shape index: {1}]
  %s16 = inlined_call_operand.hbm [shape: f32[2,8,128], index: 16, kind: output, shape index: {2}]
  %s17 = inlined_call_operand.hbm [shape: f32[8,256], index: 17, kind: output, shape index: {3}]
  %18 = xla_tuple %s14, %s15, %s16, %s17
  %s19 = sld [smem:[#allocation0]]
  $region157: #{tpu_custom_call.1} parent=0
    _
  %s21 = ssub.s32 1, %s19
  %s22 = scalar_select 0, %s21, %s19
  %23 = sst [smem:[#allocation8]] %s0
  %s24 = sshll.u32 %s1, 4
  %s25 = int_to_ptr.vmem [resolvable:$true] %s24
  %27 = dma.vmem_to_smem %s25, 16, [#allocation9], [#allocation7]
  %28 = dma.done [#allocation7], 16
  %29 = sfence
  $region1: #{tpu_custom_call.1} parent=0
    #allocation10 [shape = 'u8[262144]{0}', space=vmem, size = 0x40000, scoped, tag = 'input window, operand 3, single buffered']
    #allocation11 [shape = 's32[2]{0}', space=sflag, size = 0x8, scoped, tag = 'scoped memory for tpu_custom_call.1']
    #allocation12 [shape = 's32[2]{0}', space=sflag, size = 0x8, scoped, tag = 'scoped memory for tpu_custom_call.1']
    #allocation13 [shape = 'u8[131072]{0}', space=vmem, size = 0x20000, scoped, tag = 'input window, operand 4, single buffered']
    #allocation14 [shape = 's32[1]{0}', space=sflag, size = 0x4, scoped, tag = 'scoped memory for tpu_custom_call.1']
    #allocation15 [shape = 'u8[262144]{0}', space=vmem, size = 0x40000, scoped, tag = 'input window, operand 5, single buffered']
    #allocation16 [shape = 'u8[65536]{0}', space=vmem, size = 0x10000, scoped, tag = 'input window, operand 12, single buffered']
    #allocation17 [shape = 's32[1]{0}', space=sflag, size = 0x4, scoped, tag = 'scoped memory for tpu_custom_call.1']
    #allocation18 [shape = 'u8[65536]{0}', space=vmem, size = 0x10000, scoped, tag = 'input window, operand 13']
    #allocation19 [shape = 'u8[4096]{0}', space=vmem, size = 0x1000, scoped, tag = 'output window, operand 0, single buffered']
    #allocation20 [shape = 'u8[8192]{0}', space=vmem, size = 0x2000, scoped, tag = 'output window, operand 1, single buffered']
    #allocation21 [shape = 's32[1]{0}', space=sflag, size = 0x4, scoped, tag = 'scoped memory for tpu_custom_call.1']
    #allocation22 [shape = 'u8[8192]{0}', space=vmem, size = 0x2000, scoped, tag = 'output window, operand 2, single buffered']
    #allocation23 [shape = 'u8[8192]{0}', space=vmem, size = 0x2000, scoped, tag = 'output window, operand 3']
    #allocation24 [shape = 's32[2]{0}', space=sflag, size = 0x8, scoped, tag = 'scoped memory for tpu_custom_call.1']
    %30 = vsyncpa [#allocation11], 0
    %31 = vsyncpa [#allocation14], 0
    %32 = vsyncpa [#allocation17], 0
    %33 = vsyncpa [#allocation12], 0
    %34 = vsyncpa [#allocation21], 0
    %35 = vsyncpa [#allocation24], 0
    %s36 = scalar_lea.sflag [#allocation24], 1
    %37 = vsyncpa %s36, 0
    loop: start=0, step=1, limit=4
    $region2: #{tpu_custom_call.1} parent=1 // loop_pre_header
      _
    $region3: #{tpu_custom_call.1} parent=1 // loop_header
      %s39 = sphi 0, %s43
      %p40 = scmp.ge.s32.totalorder %s39, 4
      %s47 = sphi 0, %s47
      %s49 = sphi 0, %s47
      %s50 = sphi 0, %s49
      %s64 = sphi 0, %s50
      %s68 = sphi 0, %s68
      %s70 = sphi 0, %s68
      %s71 = sphi 0, %s70
      %s85 = sphi 0, %s71
      %s89 = sphi 0, %s89
      %s91 = sphi 0, %s89
      %s92 = sphi 0, %s91
      %s106 = sphi 0, %s92
      %s110 = sphi 0, %s110
      %s112 = sphi 0, %s110
      %s113 = sphi 0, %s112
      %s127 = sphi 0, %s113
      %s131 = sphi 0, %s131
      %s133 = sphi 0, %s131
      %s134 = sphi 0, %s133
      %s148 = sphi 0, %s134
      %s152 = sphi 0, %s152
      %s154 = sphi 0, %s152
      %s155 = sphi 0, %s154
      %s169 = sphi 0, %s155
      %s173 = sphi 0, %s173
      %s175 = sphi 0, %s173
      %s176 = sphi 0, %s175
      %s190 = sphi 0, %s176
      %s194 = sphi 0, %s194
      %s196 = sphi 0, %s194
      %s197 = sphi 0, %s196
      %s211 = sphi 0, %s197
      %s215 = sphi 0, %s215
      %s217 = sphi 0, %s215
      %s218 = sphi 0, %s217
      %s232 = sphi 0, %s218
      %s238 = sphi 0, %s240
      %s241 = sphi 0, %s238
      %s242 = sphi 0, %s241
      %s258 = sphi 0, %s242
      %s262 = sphi 0, %s262
      %s264 = sphi 0, %s262
      %s265 = sphi 0, %s264
      %s279 = sphi 0, %s265
      %s283 = sphi 0, %s283
      %s285 = sphi 0, %s283
      %s286 = sphi 0, %s285
      %s300 = sphi 0, %s286
      %s304 = sphi 0, %s304
      %s306 = sphi 0, %s304
      %s307 = sphi 0, %s306
      %s321 = sphi 0, %s307
      %s327 = sphi 0, %s329
      %s330 = sphi 0, %s327
      %s331 = sphi 0, %s330
      %s347 = sphi 0, %s331
    $region4: #{tpu_custom_call.1} parent=1 // loop_header_branch
      %42 = sbr.rel (%p40) target = $region8
    $region5: #{tpu_custom_call.1} parent=1 // loop_body
      %s44 = ssub.s32 %s39, 1
      %s45 = ssub.s32 %s39, 2
      %s46 = sadd.s32 %s39, 1
      %s48 = sadd.s32 %s47, 1
      %p51 = scmp.eq.s32.totalorder %s39, 1
      %p52 = scmp.ne.s32.totalorder %s47, %s49
      %p53 = scmp.eq.s32.totalorder %s39, 0
      %p54 = por %p52, %p53
      %p55 = scmp.ne.s32.totalorder %s47, %s49
      %p56 = scmp.eq.s32.totalorder %s44, 1
      %p57 = por %p55, %p56
      %p58 = scmp.ne.s32.totalorder %s49, %s50
      %p59 = scmp.eq.s32.totalorder %s44, 0
      %p60 = por %p58, %p59
      %p61 = scmp.ne.s32.totalorder %s49, %s50
      %p62 = scmp.eq.s32.totalorder %s45, 1
      %p63 = por %p61, %p62
      %p65 = scmp.ne.s32.totalorder %s50, %s64
      %p66 = scmp.eq.s32.totalorder %s45, 0
      %p67 = por %p65, %p66
      %s69 = sadd.s32 %s68, 1
      %p72 = scmp.eq.s32.totalorder %s39, 1
      %p73 = scmp.ne.s32.totalorder %s68, %s70
      %p74 = scmp.eq.s32.totalorder %s39, 0
      %p75 = por %p73, %p74
      %p76 = scmp.ne.s32.totalorder %s68, %s70
      %p77 = scmp.eq.s32.totalorder %s44, 1
      %p78 = por %p76, %p77
      %p79 = scmp.ne.s32.totalorder %s70, %s71
      %p80 = scmp.eq.s32.totalorder %s44, 0
      %p81 = por %p79, %p80
      %p82 = scmp.ne.s32.totalorder %s70, %s71
      %p83 = scmp.eq.s32.totalorder %s45, 1
      %p84 = por %p82, %p83
      %p86 = scmp.ne.s32.totalorder %s71, %s85
      %p87 = scmp.eq.s32.totalorder %s45, 0
      %p88 = por %p86, %p87
      %s90 = sadd.s32 %s89, 1
      %p93 = scmp.eq.s32.totalorder %s39, 1
      %p94 = scmp.ne.s32.totalorder %s89, %s91
      %p95 = scmp.eq.s32.totalorder %s39, 0
      %p96 = por %p94, %p95
      %p97 = scmp.ne.s32.totalorder %s89, %s91
      %p98 = scmp.eq.s32.totalorder %s44, 1
      %p99 = por %p97, %p98
      %p100 = scmp.ne.s32.totalorder %s91, %s92
      %p101 = scmp.eq.s32.totalorder %s44, 0
      %p102 = por %p100, %p101
      %p103 = scmp.ne.s32.totalorder %s91, %s92
      %p104 = scmp.eq.s32.totalorder %s45, 1
      %p105 = por %p103, %p104
      %p107 = scmp.ne.s32.totalorder %s92, %s106
      %p108 = scmp.eq.s32.totalorder %s45, 0
      %p109 = por %p107, %p108
      %s111 = sadd.s32 %s110, 1
      %p114 = scmp.eq.s32.totalorder %s39, 1
      %p115 = scmp.ne.s32.totalorder %s110, %s112
      %p116 = scmp.eq.s32.totalorder %s39, 0
      %p117 = por %p115, %p116
      %p118 = scmp.ne.s32.totalorder %s110, %s112
      %p119 = scmp.eq.s32.totalorder %s44, 1
      %p120 = por %p118, %p119
      %p121 = scmp.ne.s32.totalorder %s112, %s113
      %p122 = scmp.eq.s32.totalorder %s44, 0
      %p123 = por %p121, %p122
      %p124 = scmp.ne.s32.totalorder %s112, %s113
      %p125 = scmp.eq.s32.totalorder %s45, 1
      %p126 = por %p124, %p125
      %p128 = scmp.ne.s32.totalorder %s113, %s127
      %p129 = scmp.eq.s32.totalorder %s45, 0
      %p130 = por %p128, %p129
      %s132 = sadd.s32 %s131, 1
      %p135 = scmp.eq.s32.totalorder %s39, 1
      %p136 = scmp.ne.s32.totalorder %s131, %s133
      %p137 = scmp.eq.s32.totalorder %s39, 0
      %p138 = por %p136, %p137
      %p139 = scmp.ne.s32.totalorder %s131, %s133
      %p140 = scmp.eq.s32.totalorder %s44, 1
      %p141 = por %p139, %p140
      %p142 = scmp.ne.s32.totalorder %s133, %s134
      %p143 = scmp.eq.s32.totalorder %s44, 0
      %p144 = por %p142, %p143
      %p145 = scmp.ne.s32.totalorder %s133, %s134
      %p146 = scmp.eq.s32.totalorder %s45, 1
      %p147 = por %p145, %p146
      %p149 = scmp.ne.s32.totalorder %s134, %s148
      %p150 = scmp.eq.s32.totalorder %s45, 0
      %p151 = por %p149, %p150
      %s153 = sadd.s32 %s152, 1
      %p156 = scmp.eq.s32.totalorder %s39, 1
      %p157 = scmp.ne.s32.totalorder %s152, %s154
      %p158 = scmp.eq.s32.totalorder %s39, 0
      %p159 = por %p157, %p158
      %p160 = scmp.ne.s32.totalorder %s152, %s154
      %p161 = scmp.eq.s32.totalorder %s44, 1
      %p162 = por %p160, %p161
      %p163 = scmp.ne.s32.totalorder %s154, %s155
      %p164 = scmp.eq.s32.totalorder %s44, 0
      %p165 = por %p163, %p164
      %p166 = scmp.ne.s32.totalorder %s154, %s155
      %p167 = scmp.eq.s32.totalorder %s45, 1
      %p168 = por %p166, %p167
      %p170 = scmp.ne.s32.totalorder %s155, %s169
      %p171 = scmp.eq.s32.totalorder %s45, 0
      %p172 = por %p170, %p171
      %s174 = sadd.s32 %s173, 1
      %p177 = scmp.eq.s32.totalorder %s39, 1
      %p178 = scmp.ne.s32.totalorder %s173, %s175
      %p179 = scmp.eq.s32.totalorder %s39, 0
      %p180 = por %p178, %p179
      %p181 = scmp.ne.s32.totalorder %s173, %s175
      %p182 = scmp.eq.s32.totalorder %s44, 1
      %p183 = por %p181, %p182
      %p184 = scmp.ne.s32.totalorder %s175, %s176
      %p185 = scmp.eq.s32.totalorder %s44, 0
      %p186 = por %p184, %p185
      %p187 = scmp.ne.s32.totalorder %s175, %s176
      %p188 = scmp.eq.s32.totalorder %s45, 1
      %p189 = por %p187, %p188
      %p191 = scmp.ne.s32.totalorder %s176, %s190
      %p192 = scmp.eq.s32.totalorder %s45, 0
      %p193 = por %p191, %p192
      %s195 = sadd.s32 %s194, 1
      %p198 = scmp.eq.s32.totalorder %s39, 1
      %p199 = scmp.ne.s32.totalorder %s194, %s196
      %p200 = scmp.eq.s32.totalorder %s39, 0
      %p201 = por %p199, %p200
      %p202 = scmp.ne.s32.totalorder %s194, %s196
      %p203 = scmp.eq.s32.totalorder %s44, 1
      %p204 = por %p202, %p203
      %p205 = scmp.ne.s32.totalorder %s196, %s197
      %p206 = scmp.eq.s32.totalorder %s44, 0
      %p207 = por %p205, %p206
      %p208 = scmp.ne.s32.totalorder %s196, %s197
      %p209 = scmp.eq.s32.totalorder %s45, 1
      %p210 = por %p208, %p209
      %p212 = scmp.ne.s32.totalorder %s197, %s211
      %p213 = scmp.eq.s32.totalorder %s45, 0
      %p214 = por %p212, %p213
      %s216 = sadd.s32 %s215, 1
      %p219 = scmp.eq.s32.totalorder %s39, 1
      %p220 = scmp.ne.s32.totalorder %s215, %s217
      %p221 = scmp.eq.s32.totalorder %s39, 0
      %p222 = por %p220, %p221
      %p223 = scmp.ne.s32.totalorder %s215, %s217
      %p224 = scmp.eq.s32.totalorder %s44, 1
      %p225 = por %p223, %p224
      %p226 = scmp.ne.s32.totalorder %s217, %s218
      %p227 = scmp.eq.s32.totalorder %s44, 0
      %p228 = por %p226, %p227
      %p229 = scmp.ne.s32.totalorder %s217, %s218
      %p230 = scmp.eq.s32.totalorder %s45, 1
      %p231 = por %p229, %p230
      %p233 = scmp.ne.s32.totalorder %s218, %s232
      %p234 = scmp.eq.s32.totalorder %s45, 0
      %p235 = por %p233, %p234
      %s236 = ssub.s32 %s39, %s46
      %p237 = scmp.eq.s32.totalorder %s236, 0
      %s239 = sadd.s32 %s238, 1
      %s240 = scalar_select %p237, %s238, %s239
      %p243 = pneg %p237
      %p244 = scmp.eq.s32.totalorder %s39, 1
      %p245 = por %p243, %p244
      %p246 = scmp.ne.s32.totalorder %s238, %s241
      %p247 = scmp.eq.s32.totalorder %s39, 0
      %p248 = por %p246, %p247
      %p249 = scmp.ne.s32.totalorder %s238, %s241
      %p250 = scmp.eq.s32.totalorder %s44, 1
      %p251 = por %p249, %p250
      %p252 = scmp.ne.s32.totalorder %s241, %s242
      %p253 = scmp.eq.s32.totalorder %s44, 0
      %p254 = por %p252, %p253
      %p255 = scmp.ne.s32.totalorder %s241, %s242
      %p256 = scmp.eq.s32.totalorder %s45, 1
      %p257 = por %p255, %p256
      %p259 = scmp.ne.s32.totalorder %s242, %s258
      %p260 = scmp.eq.s32.totalorder %s45, 0
      %p261 = por %p259, %p260
      %s263 = sadd.s32 %s262, 1
      %p266 = scmp.eq.s32.totalorder %s39, 1
      %p267 = scmp.ne.s32.totalorder %s262, %s264
      %p268 = scmp.eq.s32.totalorder %s39, 0
      %p269 = por %p267, %p268
      %p270 = scmp.ne.s32.totalorder %s262, %s264
      %p271 = scmp.eq.s32.totalorder %s44, 1
      %p272 = por %p270, %p271
      %p273 = scmp.ne.s32.totalorder %s264, %s265
      %p274 = scmp.eq.s32.totalorder %s44, 0
      %p275 = por %p273, %p274
      %p276 = scmp.ne.s32.totalorder %s264, %s265
      %p277 = scmp.eq.s32.totalorder %s45, 1
      %p278 = por %p276, %p277
      %p280 = scmp.ne.s32.totalorder %s265, %s279
      %p281 = scmp.eq.s32.totalorder %s45, 0
      %p282 = por %p280, %p281
      %s284 = sadd.s32 %s283, 1
      %p287 = scmp.eq.s32.totalorder %s39, 1
      %p288 = scmp.ne.s32.totalorder %s283, %s285
      %p289 = scmp.eq.s32.totalorder %s39, 0
      %p290 = por %p288, %p289
      %p291 = scmp.ne.s32.totalorder %s283, %s285
      %p292 = scmp.eq.s32.totalorder %s44, 1
      %p293 = por %p291, %p292
      %p294 = scmp.ne.s32.totalorder %s285, %s286
      %p295 = scmp.eq.s32.totalorder %s44, 0
      %p296 = por %p294, %p295
      %p297 = scmp.ne.s32.totalorder %s285, %s286
      %p298 = scmp.eq.s32.totalorder %s45, 1
      %p299 = por %p297, %p298
      %p301 = scmp.ne.s32.totalorder %s286, %s300
      %p302 = scmp.eq.s32.totalorder %s45, 0
      %p303 = por %p301, %p302
      %s305 = sadd.s32 %s304, 1
      %p308 = scmp.eq.s32.totalorder %s39, 1
      %p309 = scmp.ne.s32.totalorder %s304, %s306
      %p310 = scmp.eq.s32.totalorder %s39, 0
      %p311 = por %p309, %p310
      %p312 = scmp.ne.s32.totalorder %s304, %s306
      %p313 = scmp.eq.s32.totalorder %s44, 1
      %p314 = por %p312, %p313
      %p315 = scmp.ne.s32.totalorder %s306, %s307
      %p316 = scmp.eq.s32.totalorder %s44, 0
      %p317 = por %p315, %p316
      %p318 = scmp.ne.s32.totalorder %s306, %s307
      %p319 = scmp.eq.s32.totalorder %s45, 1
      %p320 = por %p318, %p319
      %p322 = scmp.ne.s32.totalorder %s307, %s321
      %p323 = scmp.eq.s32.totalorder %s45, 0
      %p324 = por %p322, %p323
      %s325 = ssub.s32 %s39, %s46
      %p326 = scmp.eq.s32.totalorder %s325, 0
      %s328 = sadd.s32 %s327, 1
      %s329 = scalar_select %p326, %s327, %s328
      %p332 = pneg %p326
      %p333 = scmp.eq.s32.totalorder %s39, 1
      %p334 = por %p332, %p333
      %p335 = scmp.ne.s32.totalorder %s327, %s330
      %p336 = scmp.eq.s32.totalorder %s39, 0
      %p337 = por %p335, %p336
      %p338 = scmp.ne.s32.totalorder %s327, %s330
      %p339 = scmp.eq.s32.totalorder %s44, 1
      %p340 = por %p338, %p339
      %p341 = scmp.ne.s32.totalorder %s330, %s331
      %p342 = scmp.eq.s32.totalorder %s44, 0
      %p343 = por %p341, %p342
      %p344 = scmp.ne.s32.totalorder %s330, %s331
      %p345 = scmp.eq.s32.totalorder %s45, 1
      %p346 = por %p344, %p345
      %p348 = scmp.ne.s32.totalorder %s331, %s347
      %p349 = scmp.eq.s32.totalorder %s45, 0
      %p350 = por %p348, %p349
      %p351 = scmp.le.s32.totalorder 1, %s39
      %p352 = scmp.lt.s32.totalorder %s39, 3
      %p353 = pnand %p351, %p352
      %p354 = pneg %p353
      // Predicated region
      $region9: #{tpu_custom_call.1} parent=5 // pred_check
        _
      $region10: #{tpu_custom_call.1} parent=5 // pred_check_branch
        %356 = sbr.rel (%p353) target = $region12
      $region11: #{tpu_custom_call.1} parent=5 // pred_region
        %s357 = ssub.s32 %s39, 1
        // Predicated region
        $region13: #{tpu_custom_call.1} parent=11 // pred_check
          %p358 = pneg %p60
        $region14: #{tpu_custom_call.1} parent=11 // pred_check_branch
          %360 = sbr.rel (%p358) target = $region16
        $region15: #{tpu_custom_call.1} parent=11 // pred_region
          %s362 = ssub.s32 8192, 8192
          %363 = vsyncadd [#allocation11], %s362
          %s364 = sshll.u32 [#allocation10], 4
          %s365 = int_to_ptr.vmem [resolvable:$true] %s364
          %370 = dma.hbm_to_vmem [thread:$0]  %s3, 8192, %s365, [#allocation11], 256, 256, 16
        $region16: #{tpu_custom_call.1} parent=11 // pred_fallthru
          _
        // Predicated region
        $region17: #{tpu_custom_call.1} parent=11 // pred_check
          %p371 = pneg %p81
        $region18: #{tpu_custom_call.1} parent=11 // pred_check_branch
          %373 = sbr.rel (%p371) target = $region20
        $region19: #{tpu_custom_call.1} parent=11 // pred_region
          %s375 = ssub.s32 4096, 4096
          %376 = vsyncadd [#allocation14], %s375
          %s377 = sshll.u32 [#allocation13], 4
          %s378 = int_to_ptr.vmem [resolvable:$true] %s377
          %383 = dma.hbm_to_vmem [thread:$0]  %s4, 4096, %s378, [#allocation14], 256, 256, 16
        $region20: #{tpu_custom_call.1} parent=11 // pred_fallthru
          _
        // Predicated region
        $region21: #{tpu_custom_call.1} parent=11 // pred_check
          %p384 = pneg %p102
        $region22: #{tpu_custom_call.1} parent=11 // pred_check_branch
          %386 = sbr.rel (%p384) target = $region24
        $region23: #{tpu_custom_call.1} parent=11 // pred_region
          %s388 = ssub.s32 8192, 8192
          %389 = vsyncadd [#allocation14], %s388
          %s390 = sshll.u32 [#allocation15], 4
          %s391 = int_to_ptr.vmem [resolvable:$true] %s390
          %396 = dma.hbm_to_vmem [thread:$0]  %s5, 8192, %s391, [#allocation14], 256, 256, 16
        $region24: #{tpu_custom_call.1} parent=11 // pred_fallthru
          _
        // Predicated region
        $region25: #{tpu_custom_call.1} parent=11 // pred_check
          %p397 = pneg %p123
        $region26: #{tpu_custom_call.1} parent=11 // pred_check_branch
          %399 = sbr.rel (%p397) target = $region28
        $region27: #{tpu_custom_call.1} parent=11 // pred_region
          _
        $region28: #{tpu_custom_call.1} parent=11 // pred_fallthru
          _
        // Predicated region
        $region29: #{tpu_custom_call.1} parent=11 // pred_check
          %p400 = pneg %p144
        $region30: #{tpu_custom_call.1} parent=11 // pred_check_branch
          %402 = sbr.rel (%p400) target = $region32
        $region31: #{tpu_custom_call.1} parent=11 // pred_region
          _
        $region32: #{tpu_custom_call.1} parent=11 // pred_fallthru
          _
        // Predicated region
        $region33: #{tpu_custom_call.1} parent=11 // pred_check
          %p403 = pneg %p165
        $region34: #{tpu_custom_call.1} parent=11 // pred_check_branch
          %405 = sbr.rel (%p403) target = $region36
        $region35: #{tpu_custom_call.1} parent=11 // pred_region
          _
        $region36: #{tpu_custom_call.1} parent=11 // pred_fallthru
          _
        // Predicated region
        $region37: #{tpu_custom_call.1} parent=11 // pred_check
          %p406 = pneg %p186
        $region38: #{tpu_custom_call.1} parent=11 // pred_check_branch
          %408 = sbr.rel (%p406) target = $region40
        $region39: #{tpu_custom_call.1} parent=11 // pred_region
          _
        $region40: #{tpu_custom_call.1} parent=11 // pred_fallthru
          _
        // Predicated region
        $region41: #{tpu_custom_call.1} parent=11 // pred_check
          %p409 = pneg %p207
        $region42: #{tpu_custom_call.1} parent=11 // pred_check_branch
          %411 = sbr.rel (%p409) target = $region44
        $region43: #{tpu_custom_call.1} parent=11 // pred_region
          _
        $region44: #{tpu_custom_call.1} parent=11 // pred_fallthru
          _
        // Predicated region
        $region45: #{tpu_custom_call.1} parent=11 // pred_check
          %p412 = pneg %p228
        $region46: #{tpu_custom_call.1} parent=11 // pred_check_branch
          %414 = sbr.rel (%p412) target = $region48
        $region47: #{tpu_custom_call.1} parent=11 // pred_region
          %s416 = ssub.s32 2048, 2048
          %417 = vsyncadd [#allocation17], %s416
          %s418 = sshll.u32 [#allocation16], 4
          %s419 = int_to_ptr.vmem [resolvable:$true] %s418
          %424 = dma.hbm_to_vmem [thread:$0]  %s12, 2048, %s419, [#allocation17], 64, 64, 4
        $region48: #{tpu_custom_call.1} parent=11 // pred_fallthru
          _
      $region12: #{tpu_custom_call.1} parent=5 // pred_fallthru
        _
      %p425 = scmp.lt.s32.totalorder %s39, 2
      // Predicated region
      $region49: #{tpu_custom_call.1} parent=5 // pred_check
        %p426 = pneg %p425
      $region50: #{tpu_custom_call.1} parent=5 // pred_check_branch
        %428 = sbr.rel (%p426) target = $region52
      $region51: #{tpu_custom_call.1} parent=5 // pred_region
        // Predicated region
        $region53: #{tpu_custom_call.1} parent=51 // pred_check
          %p429 = pneg %p248
        $region54: #{tpu_custom_call.1} parent=51 // pred_check_branch
          %431 = sbr.rel (%p429) target = $region56
        $region55: #{tpu_custom_call.1} parent=51 // pred_region
          %s432 = sand.u32 %s39, 1
          %s433 = scalar_lea.sflag [#allocation11], %s432
          %s434 = sand.u32 %s238, 1
          %s435 = smul.addr %s434, 64
          %s436 = scalar_lea.vmem [#allocation18], %s435
          %s438 = ssub.s32 1024, 1024
          %439 = vsyncadd %s433, %s438
          %s440 = smul.addr %s39, 64
          %s441 = scalar_lea.hbm %s13, %s440
          %s442 = sshll.u32 %s436, 4
          %s443 = int_to_ptr.vmem [resolvable:$true] %s442
          %448 = dma.hbm_to_vmem [thread:$0]  %s441, 1024, %s443, %s433, 128, 64, 4
        $region56: #{tpu_custom_call.1} parent=51 // pred_fallthru
          _
      $region52: #{tpu_custom_call.1} parent=5 // pred_fallthru
        _
      %p449 = scmp.le.s32.totalorder 1, %s39
      %p450 = scmp.lt.s32.totalorder %s39, 3
      %p451 = pnand %p449, %p450
      %p452 = pneg %p451
      // Predicated region
      $region57: #{tpu_custom_call.1} parent=5 // pred_check
        _
      $region58: #{tpu_custom_call.1} parent=5 // pred_check_branch
        %454 = sbr.rel (%p451) target = $region60
      $region59: #{tpu_custom_call.1} parent=5 // pred_region
        %s455 = ssub.s32 %s39, 1
        // Predicated region
        $region61: #{tpu_custom_call.1} parent=59 // pred_check
          %p456 = pneg %p60
        $region62: #{tpu_custom_call.1} parent=59 // pred_check_branch
          %458 = sbr.rel (%p456) target = $region64
        $region63: #{tpu_custom_call.1} parent=59 // pred_region
          %459 = dma.done [#allocation11], 8192
        $region64: #{tpu_custom_call.1} parent=59 // pred_fallthru
          _
        // Predicated region
        $region65: #{tpu_custom_call.1} parent=59 // pred_check
          %p460 = pneg %p81
        $region66: #{tpu_custom_call.1} parent=59 // pred_check_branch
          %462 = sbr.rel (%p460) target = $region68
        $region67: #{tpu_custom_call.1} parent=59 // pred_region
          %463 = dma.done [#allocation14], 4096
        $region68: #{tpu_custom_call.1} parent=59 // pred_fallthru
          _
        // Predicated region
        $region69: #{tpu_custom_call.1} parent=59 // pred_check
          %p464 = pneg %p102
        $region70: #{tpu_custom_call.1} parent=59 // pred_check_branch
          %466 = sbr.rel (%p464) target = $region72
        $region71: #{tpu_custom_call.1} parent=59 // pred_region
          %467 = dma.done [#allocation14], 8192
        $region72: #{tpu_custom_call.1} parent=59 // pred_fallthru
          _
        // Predicated region
        $region73: #{tpu_custom_call.1} parent=59 // pred_check
          %p468 = pneg %p228
        $region74: #{tpu_custom_call.1} parent=59 // pred_check_branch
          %470 = sbr.rel (%p468) target = $region76
        $region75: #{tpu_custom_call.1} parent=59 // pred_region
          %471 = dma.done [#allocation17], 2048
        $region76: #{tpu_custom_call.1} parent=59 // pred_fallthru
          _
        %s472 = sand.u32 %s44, 1
        %s473 = scalar_lea.sflag [#allocation11], %s472
        %s474 = sand.u32 %s241, 1
        %s475 = smul.addr %s474, 64
        %s476 = scalar_lea.vmem [#allocation18], %s475
        // Predicated region
        $region77: #{tpu_custom_call.1} parent=59 // pred_check
          %p477 = pneg %p254
        $region78: #{tpu_custom_call.1} parent=59 // pred_check_branch
          %479 = sbr.rel (%p477) target = $region80
        $region79: #{tpu_custom_call.1} parent=59 // pred_region
          %480 = dma.done %s473, 1024
        $region80: #{tpu_custom_call.1} parent=59 // pred_fallthru
          _
        %p481 = pneg %p60
        %p482 = pneg %p57
        %p483 = pneg %p81
        %p484 = pneg %p78
        %p485 = pneg %p102
        %p486 = pneg %p99
        %p487 = pneg %p123
        %p488 = pneg %p120
        %p489 = pneg %p144
        %p490 = pneg %p141
        %p491 = pneg %p165
        %p492 = pneg %p162
        %p493 = pneg %p186
        %p494 = pneg %p183
        %p495 = pneg %p207
        %p496 = pneg %p204
        %p497 = pneg %p228
        %p498 = pneg %p225
        %s499 = sand.u32 %s44, 1
        %s500 = scalar_lea.sflag [#allocation11], %s499
        %s501 = sand.u32 %s241, 1
        %s502 = smul.addr %s501, 64
        %s503 = scalar_lea.vmem [#allocation18], %s502
        %p504 = pneg %p254
        %p505 = pneg %p251
        %p506 = pneg %p275
        %p507 = pneg %p272
        %p508 = pneg %p296
        %p509 = pneg %p293
        %p510 = pneg %p317
        %p511 = pneg %p314
        %p512 = pneg %p343
        %p513 = pneg %p340
        %s514 = sand.u32 %s330, 1
        %s515 = scalar_lea.sflag [#allocation24], %s514
        %s516 = sand.u32 %s330, 1
        %s517 = smul.addr %s516, 8
        %s518 = scalar_lea.vmem [#allocation23], %s517
        %p520 = scmp.eq.s32.totalorder %s44, 0
        // Predicated region
        $region81: #{tpu_custom_call.1} parent=59 // pred_check
          %p521 = pneg %p520
        $region82: #{tpu_custom_call.1} parent=59 // pred_check_branch
          %523 = sbr.rel (%p521) target = $region84
        $region83: #{tpu_custom_call.1} parent=59 // pred_region
          %s524 = sld [smem:[#allocation8]]
          %s525 = ssub.s32 %s524, 4
          %p526 = scmp.gt.s32.totalorder %s525, 0
          %s527 = scalar_select %p526, %s525, 0
          %p528 = scmp.lt.s32.totalorder %s527, 7
          %s529 = scalar_select %p528, %s527, 7
          %s530 = smul.u32 %s529, 8
          %s531 = smul.addr %s530, 16
          %s532 = scalar_lea.hbm %s10, %s531
          // Predicated region
          $region85: #{tpu_custom_call.1} parent=83 // pred_check
            _
          $region86: #{tpu_custom_call.1} parent=83 // pred_check_branch
            %534 = sbr.rel target = $region88
          $region87: #{tpu_custom_call.1} parent=83 // pred_region
            %535 = sst [smem:[#allocation27]] [#allocation26]
            %536 = sst [smem:[#allocation28]] [#allocation25]
          $region88: #{tpu_custom_call.1} parent=83 // pred_fallthru
            _
          %538 = shalt.err (0)
          %s540 = sshll.u32 [#allocation3], 4
          %s541 = int_to_ptr.vmem [resolvable:$true] %s540
          %543 = dma.hbm_to_vmem [thread:$0]  %s532, 1152, %s541, [#allocation6]
          %s544 = sld [smem:[#allocation9]]
          %s545 = smul.addr %s544, 16
          %s546 = scalar_lea.hbm %s2, %s545
          // Predicated region
          $region89: #{tpu_custom_call.1} parent=83 // pred_check
            _
          $region90: #{tpu_custom_call.1} parent=83 // pred_check_branch
            %548 = sbr.rel target = $region92
          $region91: #{tpu_custom_call.1} parent=83 // pred_region
            %549 = sst [smem:[#allocation27]] [#allocation30]
            %550 = sst [smem:[#allocation28]] [#allocation29]
          $region92: #{tpu_custom_call.1} parent=83 // pred_fallthru
            _
          %552 = shalt.err (0)
          %s554 = sshll.u32 [#allocation2], 4
          %s555 = int_to_ptr.vmem [resolvable:$true] %s554
          %557 = dma.hbm_to_vmem [thread:$0]  %s546, 16, %s555, [#allocation5]
          %s558 = sld [smem:[#allocation9 + $0x1]]
          %s559 = smul.addr %s558, 16
          %s560 = scalar_lea.hbm %s2, %s559
          %s561 = scalar_lea.vmem [#allocation2], 1
          %s562 = scalar_lea.sflag [#allocation5], 1
          // Predicated region
          $region93: #{tpu_custom_call.1} parent=83 // pred_check
            _
          $region94: #{tpu_custom_call.1} parent=83 // pred_check_branch
            %564 = sbr.rel target = $region96
          $region95: #{tpu_custom_call.1} parent=83 // pred_region
            %565 = sst [smem:[#allocation27]] [#allocation32]
            %566 = sst [smem:[#allocation28]] [#allocation31]
          $region96: #{tpu_custom_call.1} parent=83 // pred_fallthru
            _
          %568 = shalt.err (0)
          %s570 = sshll.u32 %s561, 4
          %s571 = int_to_ptr.vmem [resolvable:$true] %s570
          %573 = dma.hbm_to_vmem [thread:$0]  %s560, 16, %s571, %s562
          %s574 = sld [smem:[#allocation9 + $0x2]]
          %s575 = smul.addr %s574, 16
          %s576 = scalar_lea.hbm %s2, %s575
          %s577 = scalar_lea.vmem [#allocation2], 2
          %s578 = scalar_lea.sflag [#allocation5], 2
          // Predicated region
          $region97: #{tpu_custom_call.1} parent=83 // pred_check
            _
          $region98: #{tpu_custom_call.1} parent=83 // pred_check_branch
            %580 = sbr.rel target = $region100
          $region99: #{tpu_custom_call.1} parent=83 // pred_region
            %581 = sst [smem:[#allocation27]] [#allocation34]
            %582 = sst [smem:[#allocation28]] [#allocation33]
          $region100: #{tpu_custom_call.1} parent=83 // pred_fallthru
            _
          %584 = shalt.err (0)
          %s586 = sshll.u32 %s577, 4
          %s587 = int_to_ptr.vmem [resolvable:$true] %s586
          %589 = dma.hbm_to_vmem [thread:$0]  %s576, 16, %s587, %s578
          %s590 = sld [smem:[#allocation9 + $0x3]]
          %s591 = smul.addr %s590, 16
          %s592 = scalar_lea.hbm %s2, %s591
          %s593 = scalar_lea.vmem [#allocation2], 3
          %s594 = scalar_lea.sflag [#allocation5], 3
          // Predicated region
          $region101: #{tpu_custom_call.1} parent=83 // pred_check
            _
          $region102: #{tpu_custom_call.1} parent=83 // pred_check_branch
            %596 = sbr.rel target = $region104
          $region103: #{tpu_custom_call.1} parent=83 // pred_region
            %597 = sst [smem:[#allocation27]] [#allocation36]
            %598 = sst [smem:[#allocation28]] [#allocation35]
          $region104: #{tpu_custom_call.1} parent=83 // pred_fallthru
            _
          %600 = shalt.err (0)
          %s602 = sshll.u32 %s593, 4
          %s603 = int_to_ptr.vmem [resolvable:$true] %s602
          %605 = dma.hbm_to_vmem [thread:$0]  %s592, 16, %s603, %s594
          %s606 = sld [smem:[#allocation9 + $0x4]]
          %s607 = smul.addr %s606, 16
          %s608 = scalar_lea.hbm %s2, %s607
          %s609 = scalar_lea.vmem [#allocation2], 4
          %s610 = scalar_lea.sflag [#allocation5], 4
          // Predicated region
          $region105: #{tpu_custom_call.1} parent=83 // pred_check
            _
          $region106: #{tpu_custom_call.1} parent=83 // pred_check_branch
            %612 = sbr.rel target = $region108
          $region107: #{tpu_custom_call.1} parent=83 // pred_region
            %613 = sst [smem:[#allocation27]] [#allocation38]
            %614 = sst [smem:[#allocation28]] [#allocation37]
          $region108: #{tpu_custom_call.1} parent=83 // pred_fallthru
            _
          %616 = shalt.err (0)
          %s618 = sshll.u32 %s609, 4
          %s619 = int_to_ptr.vmem [resolvable:$true] %s618
          %621 = dma.hbm_to_vmem [thread:$0]  %s608, 16, %s619, %s610
          %s622 = sld [smem:[#allocation9 + $0x5]]
          %s623 = smul.addr %s622, 16
          %s624 = scalar_lea.hbm %s2, %s623
          %s625 = scalar_lea.vmem [#allocation2], 5
          %s626 = scalar_lea.sflag [#allocation5], 5
          // Predicated region
          $region109: #{tpu_custom_call.1} parent=83 // pred_check
            _
          $region110: #{tpu_custom_call.1} parent=83 // pred_check_branch
            %628 = sbr.rel target = $region112
          $region111: #{tpu_custom_call.1} parent=83 // pred_region
            %629 = sst [smem:[#allocation27]] [#allocation40]
            %630 = sst [smem:[#allocation28]] [#allocation39]
          $region112: #{tpu_custom_call.1} parent=83 // pred_fallthru
            _
          %632 = shalt.err (0)
          %s634 = sshll.u32 %s625, 4
          %s635 = int_to_ptr.vmem [resolvable:$true] %s634
          %637 = dma.hbm_to_vmem [thread:$0]  %s624, 16, %s635, %s626
          %s638 = sld [smem:[#allocation9 + $0x6]]
          %s639 = smul.addr %s638, 16
          %s640 = scalar_lea.hbm %s2, %s639
          %s641 = scalar_lea.vmem [#allocation2], 6
          %s642 = scalar_lea.sflag [#allocation5], 6
          // Predicated region
          $region113: #{tpu_custom_call.1} parent=83 // pred_check
            _
          $region114: #{tpu_custom_call.1} parent=83 // pred_check_branch
            %644 = sbr.rel target = $region116
          $region115: #{tpu_custom_call.1} parent=83 // pred_region
            %645 = sst [smem:[#allocation27]] [#allocation42]
            %646 = sst [smem:[#allocation28]] [#allocation41]
          $region116: #{tpu_custom_call.1} parent=83 // pred_fallthru
            _
          %648 = shalt.err (0)
          %s650 = sshll.u32 %s641, 4
          %s651 = int_to_ptr.vmem [resolvable:$true] %s650
          %653 = dma.hbm_to_vmem [thread:$0]  %s640, 16, %s651, %s642
          %s654 = sld [smem:[#allocation9 + $0x7]]
          %s655 = smul.addr %s654, 16
          %s656 = scalar_lea.hbm %s2, %s655
          %s657 = scalar_lea.vmem [#allocation2], 7
          %s658 = scalar_lea.sflag [#allocation5], 7
          // Predicated region
          $region117: #{tpu_custom_call.1} parent=83 // pred_check
            _
          $region118: #{tpu_custom_call.1} parent=83 // pred_check_branch
            %660 = sbr.rel target = $region120
          $region119: #{tpu_custom_call.1} parent=83 // pred_region
            %661 = sst [smem:[#allocation27]] [#allocation44]
            %662 = sst [smem:[#allocation28]] [#allocation43]
          $region120: #{tpu_custom_call.1} parent=83 // pred_fallthru
            _
          %664 = shalt.err (0)
          %s666 = sshll.u32 %s657, 4
          %s667 = int_to_ptr.vmem [resolvable:$true] %s666
          %669 = dma.hbm_to_vmem [thread:$0]  %s656, 16, %s667, %s658
          %v670 = vld [vmem:[%s7] sm:$0xff]
          %v671 = vld [vmem:[%s7 + $0x8] sm:$0xff]
          %v672 = vpack.c.bf16 %v670, %v670
          %v673 = vpack.c.bf16 %v671, %v671
          %v674 = vld [vmem:[#allocation15] sm:$0xff]
          %v675 = vld [vmem:[#allocation15 + $0x8] sm:$0xff]
          %v676 = vld [vmem:[#allocation15 + $0x10] sm:$0xff]
          %v677 = vld [vmem:[#allocation15 + $0x18] sm:$0xff]
          %v678 = vld [vmem:[#allocation15 + $0x20] sm:$0xff]
          %v679 = vld [vmem:[#allocation15 + $0x28] sm:$0xff]
          %v680 = vld [vmem:[#allocation15 + $0x30] sm:$0xff]
          %v681 = vld [vmem:[#allocation15 + $0x38] sm:$0xff]
          %v682 = vld [vmem:[#allocation15 + $0x40] sm:$0xff]
          %v683 = vld [vmem:[#allocation15 + $0x48] sm:$0xff]
          %v684 = vld [vmem:[#allocation15 + $0x50] sm:$0xff]
          %v685 = vld [vmem:[#allocation15 + $0x58] sm:$0xff]
          %v686 = vld [vmem:[#allocation15 + $0x60] sm:$0xff]
          %v687 = vld [vmem:[#allocation15 + $0x68] sm:$0xff]
          %v688 = vld [vmem:[#allocation15 + $0x70] sm:$0xff]
          %v689 = vld [vmem:[#allocation15 + $0x78] sm:$0xff]
          %v690 = vld [vmem:[#allocation15 + $0x80] sm:$0xff]
          %v691 = vld [vmem:[#allocation15 + $0x88] sm:$0xff]
          %v692 = vld [vmem:[#allocation15 + $0x90] sm:$0xff]
          %v693 = vld [vmem:[#allocation15 + $0x98] sm:$0xff]
          %v694 = vld [vmem:[#allocation15 + $0xa0] sm:$0xff]
          %v695 = vld [vmem:[#allocation15 + $0xa8] sm:$0xff]
          %v696 = vld [vmem:[#allocation15 + $0xb0] sm:$0xff]
          %v697 = vld [vmem:[#allocation15 + $0xb8] sm:$0xff]
          %v698 = vld [vmem:[#allocation15 + $0xc0] sm:$0xff]
          %v699 = vld [vmem:[#allocation15 + $0xc8] sm:$0xff]
          %v700 = vld [vmem:[#allocation15 + $0xd0] sm:$0xff]
          %v701 = vld [vmem:[#allocation15 + $0xd8] sm:$0xff]
          %v702 = vld [vmem:[#allocation15 + $0xe0] sm:$0xff]
          %v703 = vld [vmem:[#allocation15 + $0xe8] sm:$0xff]
          %v704 = vld [vmem:[#allocation15 + $0xf0] sm:$0xff]
          %v705 = vld [vmem:[#allocation15 + $0xf8] sm:$0xff]
          %v706 = vld [vmem:[#allocation15 + $0x100] sm:$0xff]
          %v707 = vld [vmem:[#allocation15 + $0x108] sm:$0xff]
          %v708 = vld [vmem:[#allocation15 + $0x110] sm:$0xff]
          %v709 = vld [vmem:[#allocation15 + $0x118] sm:$0xff]
          %v710 = vld [vmem:[#allocation15 + $0x120] sm:$0xff]
          %v711 = vld [vmem:[#allocation15 + $0x128] sm:$0xff]
          %v712 = vld [vmem:[#allocation15 + $0x130] sm:$0xff]
          %v713 = vld [vmem:[#allocation15 + $0x138] sm:$0xff]
          %v714 = vld [vmem:[#allocation15 + $0x140] sm:$0xff]
          %v715 = vld [vmem:[#allocation15 + $0x148] sm:$0xff]
          %v716 = vld [vmem:[#allocation15 + $0x150] sm:$0xff]
          %v717 = vld [vmem:[#allocation15 + $0x158] sm:$0xff]
          %v718 = vld [vmem:[#allocation15 + $0x160] sm:$0xff]
          %v719 = vld [vmem:[#allocation15 + $0x168] sm:$0xff]
          %v720 = vld [vmem:[#allocation15 + $0x170] sm:$0xff]
          %v721 = vld [vmem:[#allocation15 + $0x178] sm:$0xff]
          %v722 = vld [vmem:[#allocation15 + $0x180] sm:$0xff]
          %v723 = vld [vmem:[#allocation15 + $0x188] sm:$0xff]
          %v724 = vld [vmem:[#allocation15 + $0x190] sm:$0xff]
          %v725 = vld [vmem:[#allocation15 + $0x198] sm:$0xff]
          %v726 = vld [vmem:[#allocation15 + $0x1a0] sm:$0xff]
          %v727 = vld [vmem:[#allocation15 + $0x1a8] sm:$0xff]
          %v728 = vld [vmem:[#allocation15 + $0x1b0] sm:$0xff]
          %v729 = vld [vmem:[#allocation15 + $0x1b8] sm:$0xff]
          %v730 = vld [vmem:[#allocation15 + $0x1c0] sm:$0xff]
          %v731 = vld [vmem:[#allocation15 + $0x1c8] sm:$0xff]
          %v732 = vld [vmem:[#allocation15 + $0x1d0] sm:$0xff]
          %v733 = vld [vmem:[#allocation15 + $0x1d8] sm:$0xff]
          %v734 = vld [vmem:[#allocation15 + $0x1e0] sm:$0xff]
          %v735 = vld [vmem:[#allocation15 + $0x1e8] sm:$0xff]
          %v736 = vld [vmem:[#allocation15 + $0x1f0] sm:$0xff]
          %v737 = vld [vmem:[#allocation15 + $0x1f8] sm:$0xff]
          %v770 = vunpack.c.l.b16 %v674
          %v771 = vunpack.c.h.b16 %v674
          %v772 = vunpack.c.l.b16 %v675
          %v773 = vunpack.c.h.b16 %v675
          %v774 = vunpack.c.l.b16 %v676
          %v775 = vunpack.c.h.b16 %v676
          %v776 = vunpack.c.l.b16 %v677
          %v777 = vunpack.c.h.b16 %v677
          %v778 = vunpack.c.l.b16 %v678
          %v779 = vunpack.c.h.b16 %v678
          %v780 = vunpack.c.l.b16 %v679
          %v781 = vunpack.c.h.b16 %v679
          %v782 = vunpack.c.l.b16 %v680
          %v783 = vunpack.c.h.b16 %v680
          %v784 = vunpack.c.l.b16 %v681
          %v785 = vunpack.c.h.b16 %v681
          %v786 = vunpack.c.l.b16 %v682
          %v787 = vunpack.c.h.b16 %v682
          %v788 = vunpack.c.l.b16 %v683
          %v789 = vunpack.c.h.b16 %v683
          %v790 = vunpack.c.l.b16 %v684
          %v791 = vunpack.c.h.b16 %v684
          %v792 = vunpack.c.l.b16 %v685
          %v793 = vunpack.c.h.b16 %v685
          %v794 = vunpack.c.l.b16 %v686
          %v795 = vunpack.c.h.b16 %v686
          %v796 = vunpack.c.l.b16 %v687
          %v797 = vunpack.c.h.b16 %v687
          %v798 = vunpack.c.l.b16 %v688
          %v799 = vunpack.c.h.b16 %v688
          %v800 = vunpack.c.l.b16 %v689
          %v801 = vunpack.c.h.b16 %v689
          %v802 = vunpack.c.l.b16 %v690
          %v803 = vunpack.c.h.b16 %v690
          %v804 = vunpack.c.l.b16 %v691
          %v805 = vunpack.c.h.b16 %v691
          %v806 = vunpack.c.l.b16 %v692
          %v807 = vunpack.c.h.b16 %v692
          %v808 = vunpack.c.l.b16 %v693
          %v809 = vunpack.c.h.b16 %v693
          %v810 = vunpack.c.l.b16 %v694
          %v811 = vunpack.c.h.b16 %v694
          %v812 = vunpack.c.l.b16 %v695
          %v813 = vunpack.c.h.b16 %v695
          %v814 = vunpack.c.l.b16 %v696
          %v815 = vunpack.c.h.b16 %v696
          %v816 = vunpack.c.l.b16 %v697
          %v817 = vunpack.c.h.b16 %v697
          %v818 = vunpack.c.l.b16 %v698
          %v819 = vunpack.c.h.b16 %v698
          %v820 = vunpack.c.l.b16 %v699
          %v821 = vunpack.c.h.b16 %v699
          %v822 = vunpack.c.l.b16 %v700
          %v823 = vunpack.c.h.b16 %v700
          %v824 = vunpack.c.l.b16 %v701
          %v825 = vunpack.c.h.b16 %v701
          %v826 = vunpack.c.l.b16 %v702
          %v827 = vunpack.c.h.b16 %v702
          %v828 = vunpack.c.l.b16 %v703
          %v829 = vunpack.c.h.b16 %v703
          %v830 = vunpack.c.l.b16 %v704
          %v831 = vunpack.c.h.b16 %v704
          %v832 = vunpack.c.l.b16 %v705
          %v833 = vunpack.c.h.b16 %v705
          %v834 = vpack.c.b16 %v774, %v770
          %v835 = vpack.c.b16 %v775, %v771
          %v836 = vpack.c.b16 %v776, %v772
          %v837 = vpack.c.b16 %v777, %v773
          %v838 = vpack.c.b16 %v782, %v778
          %v839 = vpack.c.b16 %v783, %v779
          %v840 = vpack.c.b16 %v784, %v780
          %v841 = vpack.c.b16 %v785, %v781
          %v842 = vpack.c.b16 %v790, %v786
          %v843 = vpack.c.b16 %v791, %v787
          %v844 = vpack.c.b16 %v792, %v788
          %v845 = vpack.c.b16 %v793, %v789
          %v846 = vpack.c.b16 %v798, %v794
          %v847 = vpack.c.b16 %v799, %v795
          %v848 = vpack.c.b16 %v800, %v796
          %v849 = vpack.c.b16 %v801, %v797
          %v850 = vpack.c.b16 %v806, %v802
          %v851 = vpack.c.b16 %v807, %v803
          %v852 = vpack.c.b16 %v808, %v804
          %v853 = vpack.c.b16 %v809, %v805
          %v854 = vpack.c.b16 %v814, %v810
          %v855 = vpack.c.b16 %v815, %v811
          %v856 = vpack.c.b16 %v816, %v812
          %v857 = vpack.c.b16 %v817, %v813
          %v858 = vpack.c.b16 %v822, %v818
          %v859 = vpack.c.b16 %v823, %v819
          %v860 = vpack.c.b16 %v824, %v820
          %v861 = vpack.c.b16 %v825, %v821
          %v862 = vpack.c.b16 %v830, %v826
          %v863 = vpack.c.b16 %v831, %v827
          %v864 = vpack.c.b16 %v832, %v828
          %v865 = vpack.c.b16 %v833, %v829
          %898 = vmatprep.subr.bf16.mxu0 %v835
          %899 = vmatpush1.bf16.msra.mxu0 %v834
          %900 = vmatprep.subr.bf16.mxu0 %v839
          %901 = vmatpush1.bf16.msra.mxu0 %v838
          %902 = vmatprep.subr.bf16.mxu0 %v843
          %903 = vmatpush1.bf16.msra.mxu0 %v842
          %904 = vmatprep.subr.bf16.mxu0 %v847
          %905 = vmatpush1.bf16.msra.mxu0 %v846
          %906 = vmatprep.subr.bf16.mxu0 %v851
          %907 = vmatpush1.bf16.msra.mxu0 %v850
          %908 = vmatprep.subr.bf16.mxu0 %v855
          %909 = vmatpush1.bf16.msra.mxu0 %v854
          %910 = vmatprep.subr.bf16.mxu0 %v859
          %911 = vmatpush1.bf16.msra.mxu0 %v858
          %912 = vmatprep.subr.bf16.mxu0 %v863
          %913 = vmatpush1.bf16.msra.mxu0 %v862
          %914 = vmatprep.subr.bf16.mxu0 0
          %915 = vmatpush1.bf16.msra.mxu0 0
          %916 = vmatprep.subr.bf16.mxu0 0
          %917 = vmatpush1.bf16.msra.mxu0 0
          %918 = vmatprep.subr.bf16.mxu0 0
          %919 = vmatpush1.bf16.msra.mxu0 0
          %920 = vmatprep.subr.bf16.mxu0 0
          %921 = vmatpush1.bf16.msra.mxu0 0
          %922 = vmatprep.subr.bf16.mxu0 0
          %923 = vmatpush1.bf16.msra.mxu0 0
          %924 = vmatprep.subr.bf16.mxu0 0
          %925 = vmatpush1.bf16.msra.mxu0 0
          %926 = vmatprep.subr.bf16.mxu0 0
          %927 = vmatpush1.bf16.msra.mxu0 0
          %928 = vmatprep.subr.bf16.mxu0 0
          %929 = vmatpush1.bf16.msra.mxu0 0
          %930 = vmatprep.mubr.bf16.mxu0 0
          %931 = vmatmul.mubr.bf16.gmra.mrb[0].mxu0 %v672
          %v932 = vpop.f32.mrb[0].mxu0
          %v933 = vadd.f32 0.0, %v932
          %v934 = vpop.f32.mrb[0].mxu0
          %v935 = vadd.f32 0.0, %v934
          %v936 = vpop.f32.mrb[0].mxu0
          %v937 = vpop.f32.mrb[0].mxu0
          %938 = vdwg.mxu0
          %939 = vmatprep.subr.bf16.mxu0 %v837
          %940 = vmatpush1.bf16.msra.mxu0 %v836
          %941 = vmatprep.subr.bf16.mxu0 %v841
          %942 = vmatpush1.bf16.msra.mxu0 %v840
          %943 = vmatprep.subr.bf16.mxu0 %v845
          %944 = vmatpush1.bf16.msra.mxu0 %v844
          %945 = vmatprep.subr.bf16.mxu0 %v849
          %946 = vmatpush1.bf16.msra.mxu0 %v848
          %947 = vmatprep.subr.bf16.mxu0 %v853
          %948 = vmatpush1.bf16.msra.mxu0 %v852
          %949 = vmatprep.subr.bf16.mxu0 %v857
          %950 = vmatpush1.bf16.msra.mxu0 %v856
          %951 = vmatprep.subr.bf16.mxu0 %v861
          %952 = vmatpush1.bf16.msra.mxu0 %v860
          %953 = vmatprep.subr.bf16.mxu0 %v865
          %954 = vmatpush1.bf16.msra.mxu0 %v864
          %955 = vmatprep.subr.bf16.mxu0 0
          %956 = vmatpush1.bf16.msra.mxu0 0
          %957 = vmatprep.subr.bf16.mxu0 0
          %958 = vmatpush1.bf16.msra.mxu0 0
          %959 = vmatprep.subr.bf16.mxu0 0
          %960 = vmatpush1.bf16.msra.mxu0 0
          %961 = vmatprep.subr.bf16.mxu0 0
          %962 = vmatpush1.bf16.msra.mxu0 0
          %963 = vmatprep.subr.bf16.mxu0 0
          %964 = vmatpush1.bf16.msra.mxu0 0
          %965 = vmatprep.subr.bf16.mxu0 0
          %966 = vmatpush1.bf16.msra.mxu0 0
          %967 = vmatprep.subr.bf16.mxu0 0
          %968 = vmatpush1.bf16.msra.mxu0 0
          %969 = vmatprep.subr.bf16.mxu0 0
          %970 = vmatpush1.bf16.msra.mxu0 0
          %971 = vmatprep.mubr.bf16.mxu0 0
          %972 = vmatmul.mubr.bf16.gmra.mrb[0].mxu0 %v672
          %v973 = vpop.f32.mrb[0].mxu0
          %v974 = vadd.f32 0.0, %v973
          %v975 = vpop.f32.mrb[0].mxu0
          %v976 = vadd.f32 0.0, %v975
          %v977 = vpop.f32.mrb[0].mxu0
          %v978 = vpop.f32.mrb[0].mxu0
          %979 = vdwg.mxu0
          %v1012 = vunpack.c.l.b16 %v706
          %v1013 = vunpack.c.h.b16 %v706
          %v1014 = vunpack.c.l.b16 %v707
          %v1015 = vunpack.c.h.b16 %v707
          %v1016 = vunpack.c.l.b16 %v708
          %v1017 = vunpack.c.h.b16 %v708
          %v1018 = vunpack.c.l.b16 %v709
          %v1019 = vunpack.c.h.b16 %v709
          %v1020 = vunpack.c.l.b16 %v710
          %v1021 = vunpack.c.h.b16 %v710
          %v1022 = vunpack.c.l.b16 %v711
          %v1023 = vunpack.c.h.b16 %v711
          %v1024 = vunpack.c.l.b16 %v712
          %v1025 = vunpack.c.h.b16 %v712
          %v1026 = vunpack.c.l.b16 %v713
          %v1027 = vunpack.c.h.b16 %v713
          %v1028 = vunpack.c.l.b16 %v714
          %v1029 = vunpack.c.h.b16 %v714
          %v1030 = vunpack.c.l.b16 %v715
          %v1031 = vunpack.c.h.b16 %v715
          %v1032 = vunpack.c.l.b16 %v716
          %v1033 = vunpack.c.h.b16 %v716
          %v1034 = vunpack.c.l.b16 %v717
          %v1035 = vunpack.c.h.b16 %v717
          %v1036 = vunpack.c.l.b16 %v718
          %v1037 = vunpack.c.h.b16 %v718
          %v1038 = vunpack.c.l.b16 %v719
          %v1039 = vunpack.c.h.b16 %v719
          %v1040 = vunpack.c.l.b16 %v720
          %v1041 = vunpack.c.h.b16 %v720
          %v1042 = vunpack.c.l.b16 %v721
          %v1043 = vunpack.c.h.b16 %v721
          %v1044 = vunpack.c.l.b16 %v722
          %v1045 = vunpack.c.h.b16 %v722
          %v1046 = vunpack.c.l.b16 %v723
          %v1047 = vunpack.c.h.b16 %v723
          %v1048 = vunpack.c.l.b16 %v724
          %v1049 = vunpack.c.h.b16 %v724
          %v1050 = vunpack.c.l.b16 %v725
          %v1051 = vunpack.c.h.b16 %v725
          %v1052 = vunpack.c.l.b16 %v726
          %v1053 = vunpack.c.h.b16 %v726
          %v1054 = vunpack.c.l.b16 %v727
          %v1055 = vunpack.c.h.b16 %v727
          %v1056 = vunpack.c.l.b16 %v728
          %v1057 = vunpack.c.h.b16 %v728
          %v1058 = vunpack.c.l.b16 %v729
          %v1059 = vunpack.c.h.b16 %v729
          %v1060 = vunpack.c.l.b16 %v730
          %v1061 = vunpack.c.h.b16 %v730
          %v1062 = vunpack.c.l.b16 %v731
          %v1063 = vunpack.c.h.b16 %v731
          %v1064 = vunpack.c.l.b16 %v732
          %v1065 = vunpack.c.h.b16 %v732
          %v1066 = vunpack.c.l.b16 %v733
          %v1067 = vunpack.c.h.b16 %v733
          %v1068 = vunpack.c.l.b16 %v734
          %v1069 = vunpack.c.h.b16 %v734
          %v1070 = vunpack.c.l.b16 %v735
          %v1071 = vunpack.c.h.b16 %v735
          %v1072 = vunpack.c.l.b16 %v736
          %v1073 = vunpack.c.h.b16 %v736
          %v1074 = vunpack.c.l.b16 %v737
          %v1075 = vunpack.c.h.b16 %v737
          %v1076 = vpack.c.b16 %v1016, %v1012
          %v1077 = vpack.c.b16 %v1017, %v1013
          %v1078 = vpack.c.b16 %v1018, %v1014
          %v1079 = vpack.c.b16 %v1019, %v1015
          %v1080 = vpack.c.b16 %v1024, %v1020
          %v1081 = vpack.c.b16 %v1025, %v1021
          %v1082 = vpack.c.b16 %v1026, %v1022
          %v1083 = vpack.c.b16 %v1027, %v1023
          %v1084 = vpack.c.b16 %v1032, %v1028
          %v1085 = vpack.c.b16 %v1033, %v1029
          %v1086 = vpack.c.b16 %v1034, %v1030
          %v1087 = vpack.c.b16 %v1035, %v1031
          %v1088 = vpack.c.b16 %v1040, %v1036
          %v1089 = vpack.c.b16 %v1041, %v1037
          %v1090 = vpack.c.b16 %v1042, %v1038
          %v1091 = vpack.c.b16 %v1043, %v1039
          %v1092 = vpack.c.b16 %v1048, %v1044
          %v1093 = vpack.c.b16 %v1049, %v1045
          %v1094 = vpack.c.b16 %v1050, %v1046
          %v1095 = vpack.c.b16 %v1051, %v1047
          %v1096 = vpack.c.b16 %v1056, %v1052
          %v1097 = vpack.c.b16 %v1057, %v1053
          %v1098 = vpack.c.b16 %v1058, %v1054
          %v1099 = vpack.c.b16 %v1059, %v1055
          %v1100 = vpack.c.b16 %v1064, %v1060
          %v1101 = vpack.c.b16 %v1065, %v1061
          %v1102 = vpack.c.b16 %v1066, %v1062
          %v1103 = vpack.c.b16 %v1067, %v1063
          %v1104 = vpack.c.b16 %v1072, %v1068
          %v1105 = vpack.c.b16 %v1073, %v1069
          %v1106 = vpack.c.b16 %v1074, %v1070
          %v1107 = vpack.c.b16 %v1075, %v1071
          %1140 = vmatprep.subr.bf16.mxu0 %v1077
          %1141 = vmatpush1.bf16.msra.mxu0 %v1076
          %1142 = vmatprep.subr.bf16.mxu0 %v1081
          %1143 = vmatpush1.bf16.msra.mxu0 %v1080
          %1144 = vmatprep.subr.bf16.mxu0 %v1085
          %1145 = vmatpush1.bf16.msra.mxu0 %v1084
          %1146 = vmatprep.subr.bf16.mxu0 %v1089
          %1147 = vmatpush1.bf16.msra.mxu0 %v1088
          %1148 = vmatprep.subr.bf16.mxu0 %v1093
          %1149 = vmatpush1.bf16.msra.mxu0 %v1092
          %1150 = vmatprep.subr.bf16.mxu0 %v1097
          %1151 = vmatpush1.bf16.msra.mxu0 %v1096
          %1152 = vmatprep.subr.bf16.mxu0 %v1101
          %1153 = vmatpush1.bf16.msra.mxu0 %v1100
          %1154 = vmatprep.subr.bf16.mxu0 %v1105
          %1155 = vmatpush1.bf16.msra.mxu0 %v1104
          %1156 = vmatprep.subr.bf16.mxu0 0
          %1157 = vmatpush1.bf16.msra.mxu0 0
          %1158 = vmatprep.subr.bf16.mxu0 0
          %1159 = vmatpush1.bf16.msra.mxu0 0
          %1160 = vmatprep.subr.bf16.mxu0 0
          %1161 = vmatpush1.bf16.msra.mxu0 0
          %1162 = vmatprep.subr.bf16.mxu0 0
          %1163 = vmatpush1.bf16.msra.mxu0 0
          %1164 = vmatprep.subr.bf16.mxu0 0
          %1165 = vmatpush1.bf16.msra.mxu0 0
          %1166 = vmatprep.subr.bf16.mxu0 0
          %1167 = vmatpush1.bf16.msra.mxu0 0
          %1168 = vmatprep.subr.bf16.mxu0 0
          %1169 = vmatpush1.bf16.msra.mxu0 0
          %1170 = vmatprep.subr.bf16.mxu0 0
          %1171 = vmatpush1.bf16.msra.mxu0 0
          %1172 = vmatprep.mubr.bf16.mxu0 0
          %1173 = vmatmul.mubr.bf16.gmra.mrb[0].mxu0 %v673
          %v1174 = vpop.f32.mrb[0].mxu0
          %v1175 = vadd.f32 0.0, %v1174
          %v1176 = vpop.f32.mrb[0].mxu0
          %v1177 = vadd.f32 0.0, %v1176
          %v1178 = vpop.f32.mrb[0].mxu0
          %v1179 = vpop.f32.mrb[0].mxu0
          %1180 = vdwg.mxu0
          %1181 = vmatprep.subr.bf16.mxu0 %v1079
          %1182 = vmatpush1.bf16.msra.mxu0 %v1078
          %1183 = vmatprep.subr.bf16.mxu0 %v1083
          %1184 = vmatpush1.bf16.msra.mxu0 %v1082
          %1185 = vmatprep.subr.bf16.mxu0 %v1087
          %1186 = vmatpush1.bf16.msra.mxu0 %v1086
          %1187 = vmatprep.subr.bf16.mxu0 %v1091
          %1188 = vmatpush1.bf16.msra.mxu0 %v1090
          %1189 = vmatprep.subr.bf16.mxu0 %v1095
          %1190 = vmatpush1.bf16.msra.mxu0 %v1094
          %1191 = vmatprep.subr.bf16.mxu0 %v1099
          %1192 = vmatpush1.bf16.msra.mxu0 %v1098
          %1193 = vmatprep.subr.bf16.mxu0 %v1103
          %1194 = vmatpush1.bf16.msra.mxu0 %v1102
          %1195 = vmatprep.subr.bf16.mxu0 %v1107
          %1196 = vmatpush1.bf16.msra.mxu0 %v1106
          %1197 = vmatprep.subr.bf16.mxu0 0
          %1198 = vmatpush1.bf16.msra.mxu0 0
          %1199 = vmatprep.subr.bf16.mxu0 0
          %1200 = vmatpush1.bf16.msra.mxu0 0
          %1201 = vmatprep.subr.bf16.mxu0 0
          %1202 = vmatpush1.bf16.msra.mxu0 0
          %1203 = vmatprep.subr.bf16.mxu0 0
          %1204 = vmatpush1.bf16.msra.mxu0 0
          %1205 = vmatprep.subr.bf16.mxu0 0
          %1206 = vmatpush1.bf16.msra.mxu0 0
          %1207 = vmatprep.subr.bf16.mxu0 0
          %1208 = vmatpush1.bf16.msra.mxu0 0
          %1209 = vmatprep.subr.bf16.mxu0 0
          %1210 = vmatpush1.bf16.msra.mxu0 0
          %1211 = vmatprep.subr.bf16.mxu0 0
          %1212 = vmatpush1.bf16.msra.mxu0 0
          %1213 = vmatprep.mubr.bf16.mxu0 0
          %1214 = vmatmul.mubr.bf16.gmra.mrb[0].mxu0 %v673
          %v1215 = vpop.f32.mrb[0].mxu0
          %v1216 = vadd.f32 0.0, %v1215
          %v1217 = vpop.f32.mrb[0].mxu0
          %v1218 = vadd.f32 0.0, %v1217
          %v1219 = vpop.f32.mrb[0].mxu0
          %v1220 = vpop.f32.mrb[0].mxu0
          %1221 = vdwg.mxu0
          %v1222 = vld [vmem:[%s9] sm:$0xff]
          %v1223 = vpack.c.bf16 %v1222, %v1222
          %v1224 = vld [vmem:[#allocation10 + $0x100] sm:$0xff]
          %v1225 = vld [vmem:[#allocation10 + $0x108] sm:$0xff]
          %v1226 = vld [vmem:[#allocation10 + $0x110] sm:$0xff]
          %v1227 = vld [vmem:[#allocation10 + $0x118] sm:$0xff]
          %v1228 = vld [vmem:[#allocation10 + $0x120] sm:$0xff]
          %v1229 = vld [vmem:[#allocation10 + $0x128] sm:$0xff]
          %v1230 = vld [vmem:[#allocation10 + $0x130] sm:$0xff]
          %v1231 = vld [vmem:[#allocation10 + $0x138] sm:$0xff]
          %v1232 = vld [vmem:[#allocation10 + $0x140] sm:$0xff]
          %v1233 = vld [vmem:[#allocation10 + $0x148] sm:$0xff]
          %v1234 = vld [vmem:[#allocation10 + $0x150] sm:$0xff]
          %v1235 = vld [vmem:[#allocation10 + $0x158] sm:$0xff]
          %v1236 = vld [vmem:[#allocation10 + $0x160] sm:$0xff]
          %v1237 = vld [vmem:[#allocation10 + $0x168] sm:$0xff]
          %v1238 = vld [vmem:[#allocation10 + $0x170] sm:$0xff]
          %v1239 = vld [vmem:[#allocation10 + $0x178] sm:$0xff]
          %v1240 = vld [vmem:[#allocation10 + $0x180] sm:$0xff]
          %v1241 = vld [vmem:[#allocation10 + $0x188] sm:$0xff]
          %v1242 = vld [vmem:[#allocation10 + $0x190] sm:$0xff]
          %v1243 = vld [vmem:[#allocation10 + $0x198] sm:$0xff]
          %v1244 = vld [vmem:[#allocation10 + $0x1a0] sm:$0xff]
          %v1245 = vld [vmem:[#allocation10 + $0x1a8] sm:$0xff]
          %v1246 = vld [vmem:[#allocation10 + $0x1b0] sm:$0xff]
          %v1247 = vld [vmem:[#allocation10 + $0x1b8] sm:$0xff]
          %v1248 = vld [vmem:[#allocation10 + $0x1c0] sm:$0xff]
          %v1249 = vld [vmem:[#allocation10 + $0x1c8] sm:$0xff]
          %v1250 = vld [vmem:[#allocation10 + $0x1d0] sm:$0xff]
          %v1251 = vld [vmem:[#allocation10 + $0x1d8] sm:$0xff]
          %v1252 = vld [vmem:[#allocation10 + $0x1e0] sm:$0xff]
          %v1253 = vld [vmem:[#allocation10 + $0x1e8] sm:$0xff]
          %v1254 = vld [vmem:[#allocation10 + $0x1f0] sm:$0xff]
          %v1255 = vld [vmem:[#allocation10 + $0x1f8] sm:$0xff]
          %v1288 = vunpack.c.l.b16 %v1224
          %v1289 = vunpack.c.h.b16 %v1224
          %v1290 = vunpack.c.l.b16 %v1225
          %v1291 = vunpack.c.h.b16 %v1225
          %v1292 = vunpack.c.l.b16 %v1226
          %v1293 = vunpack.c.h.b16 %v1226
          %v1294 = vunpack.c.l.b16 %v1227
          %v1295 = vunpack.c.h.b16 %v1227
          %v1296 = vunpack.c.l.b16 %v1228
          %v1297 = vunpack.c.h.b16 %v1228
          %v1298 = vunpack.c.l.b16 %v1229
          %v1299 = vunpack.c.h.b16 %v1229
          %v1300 = vunpack.c.l.b16 %v1230
          %v1301 = vunpack.c.h.b16 %v1230
          %v1302 = vunpack.c.l.b16 %v1231
          %v1303 = vunpack.c.h.b16 %v1231
          %v1304 = vunpack.c.l.b16 %v1232
          %v1305 = vunpack.c.h.b16 %v1232
          %v1306 = vunpack.c.l.b16 %v1233
          %v1307 = vunpack.c.h.b16 %v1233
          %v1308 = vunpack.c.l.b16 %v1234
          %v1309 = vunpack.c.h.b16 %v1234
          %v1310 = vunpack.c.l.b16 %v1235
          %v1311 = vunpack.c.h.b16 %v1235
          %v1312 = vunpack.c.l.b16 %v1236
          %v1313 = vunpack.c.h.b16 %v1236
          %v1314 = vunpack.c.l.b16 %v1237
          %v1315 = vunpack.c.h.b16 %v1237
          %v1316 = vunpack.c.l.b16 %v1238
          %v1317 = vunpack.c.h.b16 %v1238
          %v1318 = vunpack.c.l.b16 %v1239
          %v1319 = vunpack.c.h.b16 %v1239
          %v1320 = vunpack.c.l.b16 %v1240
          %v1321 = vunpack.c.h.b16 %v1240
          %v1322 = vunpack.c.l.b16 %v1241
          %v1323 = vunpack.c.h.b16 %v1241
          %v1324 = vunpack.c.l.b16 %v1242
          %v1325 = vunpack.c.h.b16 %v1242
          %v1326 = vunpack.c.l.b16 %v1243
          %v1327 = vunpack.c.h.b16 %v1243
          %v1328 = vunpack.c.l.b16 %v1244
          %v1329 = vunpack.c.h.b16 %v1244
          %v1330 = vunpack.c.l.b16 %v1245
          %v1331 = vunpack.c.h.b16 %v1245
          %v1332 = vunpack.c.l.b16 %v1246
          %v1333 = vunpack.c.h.b16 %v1246
          %v1334 = vunpack.c.l.b16 %v1247
          %v1335 = vunpack.c.h.b16 %v1247
          %v1336 = vunpack.c.l.b16 %v1248
          %v1337 = vunpack.c.h.b16 %v1248
          %v1338 = vunpack.c.l.b16 %v1249
          %v1339 = vunpack.c.h.b16 %v1249
          %v1340 = vunpack.c.l.b16 %v1250
          %v1341 = vunpack.c.h.b16 %v1250
          %v1342 = vunpack.c.l.b16 %v1251
          %v1343 = vunpack.c.h.b16 %v1251
          %v1344 = vunpack.c.l.b16 %v1252
          %v1345 = vunpack.c.h.b16 %v1252
          %v1346 = vunpack.c.l.b16 %v1253
          %v1347 = vunpack.c.h.b16 %v1253
          %v1348 = vunpack.c.l.b16 %v1254
          %v1349 = vunpack.c.h.b16 %v1254
          %v1350 = vunpack.c.l.b16 %v1255
          %v1351 = vunpack.c.h.b16 %v1255
          %v1352 = vpack.c.b16 %v1292, %v1288
          %v1353 = vpack.c.b16 %v1293, %v1289
          %v1354 = vpack.c.b16 %v1294, %v1290
          %v1355 = vpack.c.b16 %v1295, %v1291
          %v1356 = vpack.c.b16 %v1300, %v1296
          %v1357 = vpack.c.b16 %v1301, %v1297
          %v1358 = vpack.c.b16 %v1302, %v1298
          %v1359 = vpack.c.b16 %v1303, %v1299
          %v1360 = vpack.c.b16 %v1308, %v1304
          %v1361 = vpack.c.b16 %v1309, %v1305
          %v1362 = vpack.c.b16 %v1310, %v1306
          %v1363 = vpack.c.b16 %v1311, %v1307
          %v1364 = vpack.c.b16 %v1316, %v1312
          %v1365 = vpack.c.b16 %v1317, %v1313
          %v1366 = vpack.c.b16 %v1318, %v1314
          %v1367 = vpack.c.b16 %v1319, %v1315
          %v1368 = vpack.c.b16 %v1324, %v1320
          %v1369 = vpack.c.b16 %v1325, %v1321
          %v1370 = vpack.c.b16 %v1326, %v1322
          %v1371 = vpack.c.b16 %v1327, %v1323
          %v1372 = vpack.c.b16 %v1332, %v1328
          %v1373 = vpack.c.b16 %v1333, %v1329
          %v1374 = vpack.c.b16 %v1334, %v1330
          %v1375 = vpack.c.b16 %v1335, %v1331
          %v1376 = vpack.c.b16 %v1340, %v1336
          %v1377 = vpack.c.b16 %v1341, %v1337
          %v1378 = vpack.c.b16 %v1342, %v1338
          %v1379 = vpack.c.b16 %v1343, %v1339
          %v1380 = vpack.c.b16 %v1348, %v1344
          %v1381 = vpack.c.b16 %v1349, %v1345
          %v1382 = vpack.c.b16 %v1350, %v1346
          %v1383 = vpack.c.b16 %v1351, %v1347
          %1416 = vmatprep.subr.bf16.mxu0 %v1353
          %1417 = vmatpush1.bf16.msra.mxu0 %v1352
          %1418 = vmatprep.subr.bf16.mxu0 %v1357
          %1419 = vmatpush1.bf16.msra.mxu0 %v1356
          %1420 = vmatprep.subr.bf16.mxu0 %v1361
          %1421 = vmatpush1.bf16.msra.mxu0 %v1360
          %1422 = vmatprep.subr.bf16.mxu0 %v1365
          %1423 = vmatpush1.bf16.msra.mxu0 %v1364
          %1424 = vmatprep.subr.bf16.mxu0 %v1369
          %1425 = vmatpush1.bf16.msra.mxu0 %v1368
          %1426 = vmatprep.subr.bf16.mxu0 %v1373
          %1427 = vmatpush1.bf16.msra.mxu0 %v1372
          %1428 = vmatprep.subr.bf16.mxu0 %v1377
          %1429 = vmatpush1.bf16.msra.mxu0 %v1376
          %1430 = vmatprep.subr.bf16.mxu0 %v1381
          %1431 = vmatpush1.bf16.msra.mxu0 %v1380
          %1432 = vmatprep.subr.bf16.mxu0 0
          %1433 = vmatpush1.bf16.msra.mxu0 0
          %1434 = vmatprep.subr.bf16.mxu0 0
          %1435 = vmatpush1.bf16.msra.mxu0 0
          %1436 = vmatprep.subr.bf16.mxu0 0
          %1437 = vmatpush1.bf16.msra.mxu0 0
          %1438 = vmatprep.subr.bf16.mxu0 0
          %1439 = vmatpush1.bf16.msra.mxu0 0
          %1440 = vmatprep.subr.bf16.mxu0 0
          %1441 = vmatpush1.bf16.msra.mxu0 0
          %1442 = vmatprep.subr.bf16.mxu0 0
          %1443 = vmatpush1.bf16.msra.mxu0 0
          %1444 = vmatprep.subr.bf16.mxu0 0
          %1445 = vmatpush1.bf16.msra.mxu0 0
          %1446 = vmatprep.subr.bf16.mxu0 0
          %1447 = vmatpush1.bf16.msra.mxu0 0
          %1448 = vmatprep.mubr.bf16.mxu0 0
          %1449 = vmatmul.mubr.bf16.gmra.mrb[0].mxu0 %v1223
          %v1450 = vpop.f32.mrb[0].mxu0
          %v1451 = vadd.f32 %v933, %v1450
          %v1452 = vpop.f32.mrb[0].mxu0
          %v1453 = vadd.f32 %v935, %v1452
          %v1454 = vpop.f32.mrb[0].mxu0
          %v1455 = vpop.f32.mrb[0].mxu0
          %1456 = vdwg.mxu0
          %1457 = vmatprep.subr.bf16.mxu0 %v1355
          %1458 = vmatpush1.bf16.msra.mxu0 %v1354
          %1459 = vmatprep.subr.bf16.mxu0 %v1359
          %1460 = vmatpush1.bf16.msra.mxu0 %v1358
          %1461 = vmatprep.subr.bf16.mxu0 %v1363
          %1462 = vmatpush1.bf16.msra.mxu0 %v1362
          %1463 = vmatprep.subr.bf16.mxu0 %v1367
          %1464 = vmatpush1.bf16.msra.mxu0 %v1366
          %1465 = vmatprep.subr.bf16.mxu0 %v1371
          %1466 = vmatpush1.bf16.msra.mxu0 %v1370
          %1467 = vmatprep.subr.bf16.mxu0 %v1375
          %1468 = vmatpush1.bf16.msra.mxu0 %v1374
          %1469 = vmatprep.subr.bf16.mxu0 %v1379
          %1470 = vmatpush1.bf16.msra.mxu0 %v1378
          %1471 = vmatprep.subr.bf16.mxu0 %v1383
          %1472 = vmatpush1.bf16.msra.mxu0 %v1382
          %1473 = vmatprep.subr.bf16.mxu0 0
          %1474 = vmatpush1.bf16.msra.mxu0 0
          %1475 = vmatprep.subr.bf16.mxu0 0
          %1476 = vmatpush1.bf16.msra.mxu0 0
          %1477 = vmatprep.subr.bf16.mxu0 0
          %1478 = vmatpush1.bf16.msra.mxu0 0
          %1479 = vmatprep.subr.bf16.mxu0 0
          %1480 = vmatpush1.bf16.msra.mxu0 0
          %1481 = vmatprep.subr.bf16.mxu0 0
          %1482 = vmatpush1.bf16.msra.mxu0 0
          %1483 = vmatprep.subr.bf16.mxu0 0
          %1484 = vmatpush1.bf16.msra.mxu0 0
          %1485 = vmatprep.subr.bf16.mxu0 0
          %1486 = vmatpush1.bf16.msra.mxu0 0
          %1487 = vmatprep.subr.bf16.mxu0 0
          %1488 = vmatpush1.bf16.msra.mxu0 0
          %1489 = vmatprep.mubr.bf16.mxu0 0
          %1490 = vmatmul.mubr.bf16.gmra.mrb[0].mxu0 %v1223
          %v1491 = vpop.f32.mrb[0].mxu0
          %v1492 = vadd.f32 %v974, %v1491
          %v1493 = vpop.f32.mrb[0].mxu0
          %v1494 = vadd.f32 %v976, %v1493
          %v1495 = vpop.f32.mrb[0].mxu0
          %v1496 = vpop.f32.mrb[0].mxu0
          %1497 = vdwg.mxu0
          %v1498 = vld [vmem:[%s6] sm:$0xf]
          %v1499 = vunpack.c.l.bf16 %v1498
          %v1501 = vlaneseq
          %v1502 = vshrl.u32 %v1501, 7
          %v1503 = vsub.s32 0, %v1502
          %v1504 = vrot.slane %v1499, %v1503
          %v1505 = vlaneseq
          %v1506 = vshrl.u32 %v1505, 7
          %v1507 = vsub.s32 2, %v1506
          %v1508 = vrot.slane %v1499, %v1507
          %v1509 = vlaneseq
          %v1510 = vshrl.u32 %v1509, 7
          %v1511 = vsub.s32 4, %v1510
          %v1512 = vrot.slane %v1499, %v1511
          %v1513 = vlaneseq
          %v1514 = vshrl.u32 %v1513, 7
          %v1515 = vsub.s32 6, %v1514
          %v1516 = vrot.slane %v1499, %v1515
          %v1521 = vlaneseq
          %v1522 = vshrl.u32 %v1521, 7
          %v1523 = vsub.s32 0, %v1522
          %v1524 = vrot.slane %v1504, %v1523
          %v1525 = vlaneseq
          %v1526 = vshrl.u32 %v1525, 7
          %v1527 = vsub.s32 0, %v1526
          %v1528 = vrot.slane %v1508, %v1527
          %v1529 = vlaneseq
          %v1530 = vshrl.u32 %v1529, 7
          %v1531 = vsub.s32 0, %v1530
          %v1532 = vrot.slane %v1512, %v1531
          %v1533 = vlaneseq
          %v1534 = vshrl.u32 %v1533, 7
          %v1535 = vsub.s32 0, %v1534
          %v1536 = vrot.slane %v1516, %v1535
          %v1537 = vadd.f32 %v1451, %v1524
          %v1538 = vadd.f32 %v1453, %v1528
          %v1539 = vadd.f32 %v1492, %v1532
          %v1540 = vadd.f32 %v1494, %v1536
          %s1541 = smul.u32 1, 1
          %s1542 = sshll.u32 %s1541, 4
          %1543 = dma.done [#allocation5], %s1542
          %s1544 = sshll.u32 %s1541, 4
          %1545 = dma.done %s562, %s1544
          %s1546 = sshll.u32 %s1541, 4
          %1547 = dma.done %s578, %s1546
          %s1548 = sshll.u32 %s1541, 4
          %1549 = dma.done %s594, %s1548
          %s1550 = sshll.u32 %s1541, 4
          %1551 = dma.done %s610, %s1550
          %s1552 = sshll.u32 %s1541, 4
          %1553 = dma.done %s626, %s1552
          %s1554 = sshll.u32 %s1541, 4
          %1555 = dma.done %s642, %s1554
          %s1556 = sshll.u32 %s1541, 4
          %1557 = dma.done %s658, %s1556
          %v1558 = vld [vmem:[#allocation2] sm:$0xff]
          %v1559 = vpack.c.bf16 %v1558, %v1558
          %v1560 = vld [vmem:[#allocation10] sm:$0xff]
          %v1561 = vld [vmem:[#allocation10 + $0x8] sm:$0xff]
          %v1562 = vld [vmem:[#allocation10 + $0x10] sm:$0xff]
          %v1563 = vld [vmem:[#allocation10 + $0x18] sm:$0xff]
          %v1564 = vld [vmem:[#allocation10 + $0x20] sm:$0xff]
          %v1565 = vld [vmem:[#allocation10 + $0x28] sm:$0xff]
          %v1566 = vld [vmem:[#allocation10 + $0x30] sm:$0xff]
          %v1567 = vld [vmem:[#allocation10 + $0x38] sm:$0xff]
          %v1568 = vld [vmem:[#allocation10 + $0x40] sm:$0xff]
          %v1569 = vld [vmem:[#allocation10 + $0x48] sm:$0xff]
          %v1570 = vld [vmem:[#allocation10 + $0x50] sm:$0xff]
          %v1571 = vld [vmem:[#allocation10 + $0x58] sm:$0xff]
          %v1572 = vld [vmem:[#allocation10 + $0x60] sm:$0xff]
          %v1573 = vld [vmem:[#allocation10 + $0x68] sm:$0xff]
          %v1574 = vld [vmem:[#allocation10 + $0x70] sm:$0xff]
          %v1575 = vld [vmem:[#allocation10 + $0x78] sm:$0xff]
          %v1576 = vld [vmem:[#allocation10 + $0x80] sm:$0xff]
          %v1577 = vld [vmem:[#allocation10 + $0x88] sm:$0xff]
          %v1578 = vld [vmem:[#allocation10 + $0x90] sm:$0xff]
          %v1579 = vld [vmem:[#allocation10 + $0x98] sm:$0xff]
          %v1580 = vld [vmem:[#allocation10 + $0xa0] sm:$0xff]
          %v1581 = vld [vmem:[#allocation10 + $0xa8] sm:$0xff]
          %v1582 = vld [vmem:[#allocation10 + $0xb0] sm:$0xff]
          %v1583 = vld [vmem:[#allocation10 + $0xb8] sm:$0xff]
          %v1584 = vld [vmem:[#allocation10 + $0xc0] sm:$0xff]
          %v1585 = vld [vmem:[#allocation10 + $0xc8] sm:$0xff]
          %v1586 = vld [vmem:[#allocation10 + $0xd0] sm:$0xff]
          %v1587 = vld [vmem:[#allocation10 + $0xd8] sm:$0xff]
          %v1588 = vld [vmem:[#allocation10 + $0xe0] sm:$0xff]
          %v1589 = vld [vmem:[#allocation10 + $0xe8] sm:$0xff]
          %v1590 = vld [vmem:[#allocation10 + $0xf0] sm:$0xff]
          %v1591 = vld [vmem:[#allocation10 + $0xf8] sm:$0xff]
          %v1624 = vunpack.c.l.b16 %v1560
          %v1625 = vunpack.c.h.b16 %v1560
          %v1626 = vunpack.c.l.b16 %v1561
          %v1627 = vunpack.c.h.b16 %v1561
          %v1628 = vunpack.c.l.b16 %v1562
          %v1629 = vunpack.c.h.b16 %v1562
          %v1630 = vunpack.c.l.b16 %v1563
          %v1631 = vunpack.c.h.b16 %v1563
          %v1632 = vunpack.c.l.b16 %v1564
          %v1633 = vunpack.c.h.b16 %v1564
          %v1634 = vunpack.c.l.b16 %v1565
          %v1635 = vunpack.c.h.b16 %v1565
          %v1636 = vunpack.c.l.b16 %v1566
          %v1637 = vunpack.c.h.b16 %v1566
          %v1638 = vunpack.c.l.b16 %v1567
          %v1639 = vunpack.c.h.b16 %v1567
          %v1640 = vunpack.c.l.b16 %v1568
          %v1641 = vunpack.c.h.b16 %v1568
          %v1642 = vunpack.c.l.b16 %v1569
          %v1643 = vunpack.c.h.b16 %v1569
          %v1644 = vunpack.c.l.b16 %v1570
          %v1645 = vunpack.c.h.b16 %v1570
          %v1646 = vunpack.c.l.b16 %v1571
          %v1647 = vunpack.c.h.b16 %v1571
          %v1648 = vunpack.c.l.b16 %v1572
          %v1649 = vunpack.c.h.b16 %v1572
          %v1650 = vunpack.c.l.b16 %v1573
          %v1651 = vunpack.c.h.b16 %v1573
          %v1652 = vunpack.c.l.b16 %v1574
          %v1653 = vunpack.c.h.b16 %v1574
          %v1654 = vunpack.c.l.b16 %v1575
          %v1655 = vunpack.c.h.b16 %v1575
          %v1656 = vunpack.c.l.b16 %v1576
          %v1657 = vunpack.c.h.b16 %v1576
          %v1658 = vunpack.c.l.b16 %v1577
          %v1659 = vunpack.c.h.b16 %v1577
          %v1660 = vunpack.c.l.b16 %v1578
          %v1661 = vunpack.c.h.b16 %v1578
          %v1662 = vunpack.c.l.b16 %v1579
          %v1663 = vunpack.c.h.b16 %v1579
          %v1664 = vunpack.c.l.b16 %v1580
          %v1665 = vunpack.c.h.b16 %v1580
          %v1666 = vunpack.c.l.b16 %v1581
          %v1667 = vunpack.c.h.b16 %v1581
          %v1668 = vunpack.c.l.b16 %v1582
          %v1669 = vunpack.c.h.b16 %v1582
          %v1670 = vunpack.c.l.b16 %v1583
          %v1671 = vunpack.c.h.b16 %v1583
          %v1672 = vunpack.c.l.b16 %v1584
          %v1673 = vunpack.c.h.b16 %v1584
          %v1674 = vunpack.c.l.b16 %v1585
          %v1675 = vunpack.c.h.b16 %v1585
          %v1676 = vunpack.c.l.b16 %v1586
          %v1677 = vunpack.c.h.b16 %v1586
          %v1678 = vunpack.c.l.b16 %v1587
          %v1679 = vunpack.c.h.b16 %v1587
          %v1680 = vunpack.c.l.b16 %v1588
          %v1681 = vunpack.c.h.b16 %v1588
          %v1682 = vunpack.c.l.b16 %v1589
          %v1683 = vunpack.c.h.b16 %v1589
          %v1684 = vunpack.c.l.b16 %v1590
          %v1685 = vunpack.c.h.b16 %v1590
          %v1686 = vunpack.c.l.b16 %v1591
          %v1687 = vunpack.c.h.b16 %v1591
          %v1688 = vpack.c.b16 %v1628, %v1624
          %v1689 = vpack.c.b16 %v1629, %v1625
          %v1690 = vpack.c.b16 %v1630, %v1626
          %v1691 = vpack.c.b16 %v1631, %v1627
          %v1692 = vpack.c.b16 %v1636, %v1632
          %v1693 = vpack.c.b16 %v1637, %v1633
          %v1694 = vpack.c.b16 %v1638, %v1634
          %v1695 = vpack.c.b16 %v1639, %v1635
          %v1696 = vpack.c.b16 %v1644, %v1640
          %v1697 = vpack.c.b16 %v1645, %v1641
          %v1698 = vpack.c.b16 %v1646, %v1642
          %v1699 = vpack.c.b16 %v1647, %v1643
          %v1700 = vpack.c.b16 %v1652, %v1648
          %v1701 = vpack.c.b16 %v1653, %v1649
          %v1702 = vpack.c.b16 %v1654, %v1650
          %v1703 = vpack.c.b16 %v1655, %v1651
          %v1704 = vpack.c.b16 %v1660, %v1656
          %v1705 = vpack.c.b16 %v1661, %v1657
          %v1706 = vpack.c.b16 %v1662, %v1658
          %v1707 = vpack.c.b16 %v1663, %v1659
          %v1708 = vpack.c.b16 %v1668, %v1664
          %v1709 = vpack.c.b16 %v1669, %v1665
          %v1710 = vpack.c.b16 %v1670, %v1666
          %v1711 = vpack.c.b16 %v1671, %v1667
          %v1712 = vpack.c.b16 %v1676, %v1672
          %v1713 = vpack.c.b16 %v1677, %v1673
          %v1714 = vpack.c.b16 %v1678, %v1674
          %v1715 = vpack.c.b16 %v1679, %v1675
          %v1716 = vpack.c.b16 %v1684, %v1680
          %v1717 = vpack.c.b16 %v1685, %v1681
          %v1718 = vpack.c.b16 %v1686, %v1682
          %v1719 = vpack.c.b16 %v1687, %v1683
          %1752 = vmatprep.subr.bf16.mxu0 %v1689
          %1753 = vmatpush1.bf16.msra.mxu0 %v1688
          %1754 = vmatprep.subr.bf16.mxu0 %v1693
          %1755 = vmatpush1.bf16.msra.mxu0 %v1692
          %1756 = vmatprep.subr.bf16.mxu0 %v1697
          %1757 = vmatpush1.bf16.msra.mxu0 %v1696
          %1758 = vmatprep.subr.bf16.mxu0 %v1701
          %1759 = vmatpush1.bf16.msra.mxu0 %v1700
          %1760 = vmatprep.subr.bf16.mxu0 %v1705
          %1761 = vmatpush1.bf16.msra.mxu0 %v1704
          %1762 = vmatprep.subr.bf16.mxu0 %v1709
          %1763 = vmatpush1.bf16.msra.mxu0 %v1708
          %1764 = vmatprep.subr.bf16.mxu0 %v1713
          %1765 = vmatpush1.bf16.msra.mxu0 %v1712
          %1766 = vmatprep.subr.bf16.mxu0 %v1717
          %1767 = vmatpush1.bf16.msra.mxu0 %v1716
          %1768 = vmatprep.subr.bf16.mxu0 0
          %1769 = vmatpush1.bf16.msra.mxu0 0
          %1770 = vmatprep.subr.bf16.mxu0 0
          %1771 = vmatpush1.bf16.msra.mxu0 0
          %1772 = vmatprep.subr.bf16.mxu0 0
          %1773 = vmatpush1.bf16.msra.mxu0 0
          %1774 = vmatprep.subr.bf16.mxu0 0
          %1775 = vmatpush1.bf16.msra.mxu0 0
          %1776 = vmatprep.subr.bf16.mxu0 0
          %1777 = vmatpush1.bf16.msra.mxu0 0
          %1778 = vmatprep.subr.bf16.mxu0 0
          %1779 = vmatpush1.bf16.msra.mxu0 0
          %1780 = vmatprep.subr.bf16.mxu0 0
          %1781 = vmatpush1.bf16.msra.mxu0 0
          %1782 = vmatprep.subr.bf16.mxu0 0
          %1783 = vmatpush1.bf16.msra.mxu0 0
          %1784 = vmatprep.mubr.bf16.mxu0 0
          %1785 = vmatmul.mubr.bf16.gmra.mrb[0].mxu0 %v1559
          %v1786 = vpop.f32.mrb[0].mxu0
          %v1787 = vadd.f32 0.0, %v1786
          %v1788 = vpop.f32.mrb[0].mxu0
          %v1789 = vadd.f32 0.0, %v1788
          %v1790 = vpop.f32.mrb[0].mxu0
          %v1791 = vpop.f32.mrb[0].mxu0
          %1792 = vdwg.mxu0
          %1793 = vmatprep.subr.bf16.mxu0 %v1691
          %1794 = vmatpush1.bf16.msra.mxu0 %v1690
          %1795 = vmatprep.subr.bf16.mxu0 %v1695
          %1796 = vmatpush1.bf16.msra.mxu0 %v1694
          %1797 = vmatprep.subr.bf16.mxu0 %v1699
          %1798 = vmatpush1.bf16.msra.mxu0 %v1698
          %1799 = vmatprep.subr.bf16.mxu0 %v1703
          %1800 = vmatpush1.bf16.msra.mxu0 %v1702
          %1801 = vmatprep.subr.bf16.mxu0 %v1707
          %1802 = vmatpush1.bf16.msra.mxu0 %v1706
          %1803 = vmatprep.subr.bf16.mxu0 %v1711
          %1804 = vmatpush1.bf16.msra.mxu0 %v1710
          %1805 = vmatprep.subr.bf16.mxu0 %v1715
          %1806 = vmatpush1.bf16.msra.mxu0 %v1714
          %1807 = vmatprep.subr.bf16.mxu0 %v1719
          %1808 = vmatpush1.bf16.msra.mxu0 %v1718
          %1809 = vmatprep.subr.bf16.mxu0 0
          %1810 = vmatpush1.bf16.msra.mxu0 0
          %1811 = vmatprep.subr.bf16.mxu0 0
          %1812 = vmatpush1.bf16.msra.mxu0 0
          %1813 = vmatprep.subr.bf16.mxu0 0
          %1814 = vmatpush1.bf16.msra.mxu0 0
          %1815 = vmatprep.subr.bf16.mxu0 0
          %1816 = vmatpush1.bf16.msra.mxu0 0
          %1817 = vmatprep.subr.bf16.mxu0 0
          %1818 = vmatpush1.bf16.msra.mxu0 0
          %1819 = vmatprep.subr.bf16.mxu0 0
          %1820 = vmatpush1.bf16.msra.mxu0 0
          %1821 = vmatprep.subr.bf16.mxu0 0
          %1822 = vmatpush1.bf16.msra.mxu0 0
          %1823 = vmatprep.subr.bf16.mxu0 0
          %1824 = vmatpush1.bf16.msra.mxu0 0
          %1825 = vmatprep.mubr.bf16.mxu0 0
          %1826 = vmatmul.mubr.bf16.gmra.mrb[0].mxu0 %v1559
          %v1827 = vpop.f32.mrb[0].mxu0
          %v1828 = vadd.f32 0.0, %v1827
          %v1829 = vpop.f32.mrb[0].mxu0
          %v1830 = vadd.f32 0.0, %v1829
          %v1831 = vpop.f32.mrb[0].mxu0
          %v1832 = vpop.f32.mrb[0].mxu0
          %1833 = vdwg.mxu0
          %v1834 = vadd.f32 %v1537, %v1787
          %v1835 = vadd.f32 %v1538, %v1789
          %v1836 = vadd.f32 %v1539, %v1828
          %v1837 = vadd.f32 %v1540, %v1830
          %v1838 = vxor.u32 %v1834, 2147483648
          %v1839 = vmul.f32 %v1838, 1.442695
          %v1840 = vpow.pop %v1839
          %v1841 = vadd.f32 %v1840, 1.0
          %v1842 = vrcp.pop %v1841
          %v1843 = vmul.f32 1.0, %v1842
          %v1844 = vxor.u32 %v1835, 2147483648
          %v1845 = vmul.f32 %v1844, 1.442695
          %v1846 = vpow.pop %v1845
          %v1847 = vadd.f32 %v1846, 1.0
          %v1848 = vrcp.pop %v1847
          %v1849 = vmul.f32 1.0, %v1848
          %v1850 = vtanh.pop %v1836
          %v1851 = vxor.u32 %v1837, 2147483648
          %v1852 = vmul.f32 %v1851, 1.442695
          %v1853 = vpow.pop %v1852
          %v1854 = vadd.f32 %v1853, 1.0
          %v1855 = vrcp.pop %v1854
          %v1856 = vmul.f32 1.0, %v1855
          %v1857 = vld [vmem:[%s8] sm:$0xff]
          %v1858 = vmul.f32 %v1849, %v1857
          %v1859 = vmul.f32 %v1843, %v1850
          %v1860 = vadd.f32 %v1858, %v1859
          %v1861 = vtanh.pop %v1860
          %v1862 = vmul.f32 %v1856, %v1861
          %1863 = vst [vmem:[#allocation20] sm:$0xff] %v1862
          %1864 = vst [vmem:[#allocation22] sm:$0xff] %v1860
          %v1865 = vpack.c.bf16 %v1862, %v1862
          %v1866 = vld [vmem:[#allocation13] sm:$0xff]
          %v1867 = vld [vmem:[#allocation13 + $0x8] sm:$0xff]
          %v1868 = vld [vmem:[#allocation13 + $0x10] sm:$0xff]
          %v1869 = vld [vmem:[#allocation13 + $0x18] sm:$0xff]
          %v1870 = vld [vmem:[#allocation13 + $0x20] sm:$0xff]
          %v1871 = vld [vmem:[#allocation13 + $0x28] sm:$0xff]
          %v1872 = vld [vmem:[#allocation13 + $0x30] sm:$0xff]
          %v1873 = vld [vmem:[#allocation13 + $0x38] sm:$0xff]
          %v1874 = vld [vmem:[#allocation13 + $0x40] sm:$0xff]
          %v1875 = vld [vmem:[#allocation13 + $0x48] sm:$0xff]
          %v1876 = vld [vmem:[#allocation13 + $0x50] sm:$0xff]
          %v1877 = vld [vmem:[#allocation13 + $0x58] sm:$0xff]
          %v1878 = vld [vmem:[#allocation13 + $0x60] sm:$0xff]
          %v1879 = vld [vmem:[#allocation13 + $0x68] sm:$0xff]
          %v1880 = vld [vmem:[#allocation13 + $0x70] sm:$0xff]
          %v1881 = vld [vmem:[#allocation13 + $0x78] sm:$0xff]
          %v1882 = vld [vmem:[#allocation13 + $0x80] sm:$0xff]
          %v1883 = vld [vmem:[#allocation13 + $0x88] sm:$0xff]
          %v1884 = vld [vmem:[#allocation13 + $0x90] sm:$0xff]
          %v1885 = vld [vmem:[#allocation13 + $0x98] sm:$0xff]
          %v1886 = vld [vmem:[#allocation13 + $0xa0] sm:$0xff]
          %v1887 = vld [vmem:[#allocation13 + $0xa8] sm:$0xff]
          %v1888 = vld [vmem:[#allocation13 + $0xb0] sm:$0xff]
          %v1889 = vld [vmem:[#allocation13 + $0xb8] sm:$0xff]
          %v1890 = vld [vmem:[#allocation13 + $0xc0] sm:$0xff]
          %v1891 = vld [vmem:[#allocation13 + $0xc8] sm:$0xff]
          %v1892 = vld [vmem:[#allocation13 + $0xd0] sm:$0xff]
          %v1893 = vld [vmem:[#allocation13 + $0xd8] sm:$0xff]
          %v1894 = vld [vmem:[#allocation13 + $0xe0] sm:$0xff]
          %v1895 = vld [vmem:[#allocation13 + $0xe8] sm:$0xff]
          %v1896 = vld [vmem:[#allocation13 + $0xf0] sm:$0xff]
          %v1897 = vld [vmem:[#allocation13 + $0xf8] sm:$0xff]
          %v1930 = vunpack.c.l.b16 %v1866
          %v1931 = vunpack.c.h.b16 %v1866
          %v1932 = vunpack.c.l.b16 %v1867
          %v1933 = vunpack.c.h.b16 %v1867
          %v1934 = vunpack.c.l.b16 %v1868
          %v1935 = vunpack.c.h.b16 %v1868
          %v1936 = vunpack.c.l.b16 %v1869
          %v1937 = vunpack.c.h.b16 %v1869
          %v1938 = vunpack.c.l.b16 %v1870
          %v1939 = vunpack.c.h.b16 %v1870
          %v1940 = vunpack.c.l.b16 %v1871
          %v1941 = vunpack.c.h.b16 %v1871
          %v1942 = vunpack.c.l.b16 %v1872
          %v1943 = vunpack.c.h.b16 %v1872
          %v1944 = vunpack.c.l.b16 %v1873
          %v1945 = vunpack.c.h.b16 %v1873
          %v1946 = vunpack.c.l.b16 %v1874
          %v1947 = vunpack.c.h.b16 %v1874
          %v1948 = vunpack.c.l.b16 %v1875
          %v1949 = vunpack.c.h.b16 %v1875
          %v1950 = vunpack.c.l.b16 %v1876
          %v1951 = vunpack.c.h.b16 %v1876
          %v1952 = vunpack.c.l.b16 %v1877
          %v1953 = vunpack.c.h.b16 %v1877
          %v1954 = vunpack.c.l.b16 %v1878
          %v1955 = vunpack.c.h.b16 %v1878
          %v1956 = vunpack.c.l.b16 %v1879
          %v1957 = vunpack.c.h.b16 %v1879
          %v1958 = vunpack.c.l.b16 %v1880
          %v1959 = vunpack.c.h.b16 %v1880
          %v1960 = vunpack.c.l.b16 %v1881
          %v1961 = vunpack.c.h.b16 %v1881
          %v1962 = vunpack.c.l.b16 %v1882
          %v1963 = vunpack.c.h.b16 %v1882
          %v1964 = vunpack.c.l.b16 %v1883
          %v1965 = vunpack.c.h.b16 %v1883
          %v1966 = vunpack.c.l.b16 %v1884
          %v1967 = vunpack.c.h.b16 %v1884
          %v1968 = vunpack.c.l.b16 %v1885
          %v1969 = vunpack.c.h.b16 %v1885
          %v1970 = vunpack.c.l.b16 %v1886
          %v1971 = vunpack.c.h.b16 %v1886
          %v1972 = vunpack.c.l.b16 %v1887
          %v1973 = vunpack.c.h.b16 %v1887
          %v1974 = vunpack.c.l.b16 %v1888
          %v1975 = vunpack.c.h.b16 %v1888
          %v1976 = vunpack.c.l.b16 %v1889
          %v1977 = vunpack.c.h.b16 %v1889
          %v1978 = vunpack.c.l.b16 %v1890
          %v1979 = vunpack.c.h.b16 %v1890
          %v1980 = vunpack.c.l.b16 %v1891
          %v1981 = vunpack.c.h.b16 %v1891
          %v1982 = vunpack.c.l.b16 %v1892
          %v1983 = vunpack.c.h.b16 %v1892
          %v1984 = vunpack.c.l.b16 %v1893
          %v1985 = vunpack.c.h.b16 %v1893
          %v1986 = vunpack.c.l.b16 %v1894
          %v1987 = vunpack.c.h.b16 %v1894
          %v1988 = vunpack.c.l.b16 %v1895
          %v1989 = vunpack.c.h.b16 %v1895
          %v1990 = vunpack.c.l.b16 %v1896
          %v1991 = vunpack.c.h.b16 %v1896
          %v1992 = vunpack.c.l.b16 %v1897
          %v1993 = vunpack.c.h.b16 %v1897
          %v1994 = vpack.c.b16 %v1934, %v1930
          %v1995 = vpack.c.b16 %v1935, %v1931
          %v1996 = vpack.c.b16 %v1936, %v1932
          %v1997 = vpack.c.b16 %v1937, %v1933
          %v1998 = vpack.c.b16 %v1942, %v1938
          %v1999 = vpack.c.b16 %v1943, %v1939
          %v2000 = vpack.c.b16 %v1944, %v1940
          %v2001 = vpack.c.b16 %v1945, %v1941
          %v2002 = vpack.c.b16 %v1950, %v1946
          %v2003 = vpack.c.b16 %v1951, %v1947
          %v2004 = vpack.c.b16 %v1952, %v1948
          %v2005 = vpack.c.b16 %v1953, %v1949
          %v2006 = vpack.c.b16 %v1958, %v1954
          %v2007 = vpack.c.b16 %v1959, %v1955
          %v2008 = vpack.c.b16 %v1960, %v1956
          %v2009 = vpack.c.b16 %v1961, %v1957
          %v2010 = vpack.c.b16 %v1966, %v1962
          %v2011 = vpack.c.b16 %v1967, %v1963
          %v2012 = vpack.c.b16 %v1968, %v1964
          %v2013 = vpack.c.b16 %v1969, %v1965
          %v2014 = vpack.c.b16 %v1974, %v1970
          %v2015 = vpack.c.b16 %v1975, %v1971
          %v2016 = vpack.c.b16 %v1976, %v1972
          %v2017 = vpack.c.b16 %v1977, %v1973
          %v2018 = vpack.c.b16 %v1982, %v1978
          %v2019 = vpack.c.b16 %v1983, %v1979
          %v2020 = vpack.c.b16 %v1984, %v1980
          %v2021 = vpack.c.b16 %v1985, %v1981
          %v2022 = vpack.c.b16 %v1990, %v1986
          %v2023 = vpack.c.b16 %v1991, %v1987
          %v2024 = vpack.c.b16 %v1992, %v1988
          %v2025 = vpack.c.b16 %v1993, %v1989
          %2058 = vmatprep.subr.bf16.mxu0 %v1995
          %2059 = vmatpush1.bf16.msra.mxu0 %v1994
          %2060 = vmatprep.subr.bf16.mxu0 %v1999
          %2061 = vmatpush1.bf16.msra.mxu0 %v1998
          %2062 = vmatprep.subr.bf16.mxu0 %v2003
          %2063 = vmatpush1.bf16.msra.mxu0 %v2002
          %2064 = vmatprep.subr.bf16.mxu0 %v2007
          %2065 = vmatpush1.bf16.msra.mxu0 %v2006
          %2066 = vmatprep.subr.bf16.mxu0 %v2011
          %2067 = vmatpush1.bf16.msra.mxu0 %v2010
          %2068 = vmatprep.subr.bf16.mxu0 %v2015
          %2069 = vmatpush1.bf16.msra.mxu0 %v2014
          %2070 = vmatprep.subr.bf16.mxu0 %v2019
          %2071 = vmatpush1.bf16.msra.mxu0 %v2018
          %2072 = vmatprep.subr.bf16.mxu0 %v2023
          %2073 = vmatpush1.bf16.msra.mxu0 %v2022
          %2074 = vmatprep.subr.bf16.mxu0 0
          %2075 = vmatpush1.bf16.msra.mxu0 0
          %2076 = vmatprep.subr.bf16.mxu0 0
          %2077 = vmatpush1.bf16.msra.mxu0 0
          %2078 = vmatprep.subr.bf16.mxu0 0
          %2079 = vmatpush1.bf16.msra.mxu0 0
          %2080 = vmatprep.subr.bf16.mxu0 0
          %2081 = vmatpush1.bf16.msra.mxu0 0
          %2082 = vmatprep.subr.bf16.mxu0 0
          %2083 = vmatpush1.bf16.msra.mxu0 0
          %2084 = vmatprep.subr.bf16.mxu0 0
          %2085 = vmatpush1.bf16.msra.mxu0 0
          %2086 = vmatprep.subr.bf16.mxu0 0
          %2087 = vmatpush1.bf16.msra.mxu0 0
          %2088 = vmatprep.subr.bf16.mxu0 0
          %2089 = vmatpush1.bf16.msra.mxu0 0
          %2090 = vmatprep.mubr.bf16.mxu0 0
          %2091 = vmatmul.mubr.bf16.gmra.mrb[0].mxu0 %v1865
          %v2092 = vpop.f32.mrb[0].mxu0
          %v2093 = vadd.f32 %v1175, %v2092
          %v2094 = vpop.f32.mrb[0].mxu0
          %v2095 = vadd.f32 %v1177, %v2094
          %v2096 = vpop.f32.mrb[0].mxu0
          %v2097 = vpop.f32.mrb[0].mxu0
          %2098 = vdwg.mxu0
          %2099 = vmatprep.subr.bf16.mxu0 %v1997
          %2100 = vmatpush1.bf16.msra.mxu0 %v1996
          %2101 = vmatprep.subr.bf16.mxu0 %v2001
          %2102 = vmatpush1.bf16.msra.mxu0 %v2000
          %2103 = vmatprep.subr.bf16.mxu0 %v2005
          %2104 = vmatpush1.bf16.msra.mxu0 %v2004
          %2105 = vmatprep.subr.bf16.mxu0 %v2009
          %2106 = vmatpush1.bf16.msra.mxu0 %v2008
          %2107 = vmatprep.subr.bf16.mxu0 %v2013
          %2108 = vmatpush1.bf16.msra.mxu0 %v2012
          %2109 = vmatprep.subr.bf16.mxu0 %v2017
          %2110 = vmatpush1.bf16.msra.mxu0 %v2016
          %2111 = vmatprep.subr.bf16.mxu0 %v2021
          %2112 = vmatpush1.bf16.msra.mxu0 %v2020
          %2113 = vmatprep.subr.bf16.mxu0 %v2025
          %2114 = vmatpush1.bf16.msra.mxu0 %v2024
          %2115 = vmatprep.subr.bf16.mxu0 0
          %2116 = vmatpush1.bf16.msra.mxu0 0
          %2117 = vmatprep.subr.bf16.mxu0 0
          %2118 = vmatpush1.bf16.msra.mxu0 0
          %2119 = vmatprep.subr.bf16.mxu0 0
          %2120 = vmatpush1.bf16.msra.mxu0 0
          %2121 = vmatprep.subr.bf16.mxu0 0
          %2122 = vmatpush1.bf16.msra.mxu0 0
          %2123 = vmatprep.subr.bf16.mxu0 0
          %2124 = vmatpush1.bf16.msra.mxu0 0
          %2125 = vmatprep.subr.bf16.mxu0 0
          %2126 = vmatpush1.bf16.msra.mxu0 0
          %2127 = vmatprep.subr.bf16.mxu0 0
          %2128 = vmatpush1.bf16.msra.mxu0 0
          %2129 = vmatprep.subr.bf16.mxu0 0
          %2130 = vmatpush1.bf16.msra.mxu0 0
          %2131 = vmatprep.mubr.bf16.mxu0 0
          %2132 = vmatmul.mubr.bf16.gmra.mrb[0].mxu0 %v1865
          %v2133 = vpop.f32.mrb[0].mxu0
          %v2134 = vadd.f32 %v1216, %v2133
          %v2135 = vpop.f32.mrb[0].mxu0
          %v2136 = vadd.f32 %v1218, %v2135
          %v2137 = vpop.f32.mrb[0].mxu0
          %v2138 = vpop.f32.mrb[0].mxu0
          %2139 = vdwg.mxu0
          %s2140 = scalar_lea.vmem %s6, 4
          %v2141 = vld [vmem:[%s2140] sm:$0xf]
          %v2142 = vunpack.c.l.bf16 %v2141
          %v2144 = vlaneseq
          %v2145 = vshrl.u32 %v2144, 7
          %v2146 = vsub.s32 0, %v2145
          %v2147 = vrot.slane %v2142, %v2146
          %v2148 = vlaneseq
          %v2149 = vshrl.u32 %v2148, 7
          %v2150 = vsub.s32 2, %v2149
          %v2151 = vrot.slane %v2142, %v2150
          %v2152 = vlaneseq
          %v2153 = vshrl.u32 %v2152, 7
          %v2154 = vsub.s32 4, %v2153
          %v2155 = vrot.slane %v2142, %v2154
          %v2156 = vlaneseq
          %v2157 = vshrl.u32 %v2156, 7
          %v2158 = vsub.s32 6, %v2157
          %v2159 = vrot.slane %v2142, %v2158
          %v2164 = vlaneseq
          %v2165 = vshrl.u32 %v2164, 7
          %v2166 = vsub.s32 0, %v2165
          %v2167 = vrot.slane %v2147, %v2166
          %v2168 = vlaneseq
          %v2169 = vshrl.u32 %v2168, 7
          %v2170 = vsub.s32 0, %v2169
          %v2171 = vrot.slane %v2151, %v2170
          %v2172 = vlaneseq
          %v2173 = vshrl.u32 %v2172, 7
          %v2174 = vsub.s32 0, %v2173
          %v2175 = vrot.slane %v2155, %v2174
          %v2176 = vlaneseq
          %v2177 = vshrl.u32 %v2176, 7
          %v2178 = vsub.s32 0, %v2177
          %v2179 = vrot.slane %v2159, %v2178
          %v2180 = vadd.f32 %v2093, %v2167
          %v2181 = vadd.f32 %v2095, %v2171
          %v2182 = vadd.f32 %v2134, %v2175
          %v2183 = vadd.f32 %v2136, %v2179
          %v2184 = vxor.u32 %v2180, 2147483648
          %v2185 = vmul.f32 %v2184, 1.442695
          %v2186 = vpow.pop %v2185
          %v2187 = vadd.f32 %v2186, 1.0
          %v2188 = vrcp.pop %v2187
          %v2189 = vmul.f32 1.0, %v2188
          %v2190 = vxor.u32 %v2181, 2147483648
          %v2191 = vmul.f32 %v2190, 1.442695
          %v2192 = vpow.pop %v2191
          %v2193 = vadd.f32 %v2192, 1.0
          %v2194 = vrcp.pop %v2193
          %v2195 = vmul.f32 1.0, %v2194
          %v2196 = vtanh.pop %v2182
          %v2197 = vxor.u32 %v2183, 2147483648
          %v2198 = vmul.f32 %v2197, 1.442695
          %v2199 = vpow.pop %v2198
          %v2200 = vadd.f32 %v2199, 1.0
          %v2201 = vrcp.pop %v2200
          %v2202 = vmul.f32 1.0, %v2201
          %s2203 = scalar_lea.vmem %s8, 8
          %v2204 = vld [vmem:[%s2203] sm:$0xff]
          %v2205 = vmul.f32 %v2195, %v2204
          %v2206 = vmul.f32 %v2189, %v2196
          %v2207 = vadd.f32 %v2205, %v2206
          %v2208 = vtanh.pop %v2207
          %v2209 = vmul.f32 %v2202, %v2208
          %s2210 = scalar_lea.vmem [#allocation20], 8
          %2211 = vst [vmem:[%s2210] sm:$0xff] %v2209
          %s2212 = scalar_lea.vmem [#allocation22], 8
          %2213 = vst [vmem:[%s2212] sm:$0xff] %v2207
          %s2214 = smul.u32 9, 8
          %s2215 = smul.u32 %s2214, 1
          %s2216 = sshll.u32 %s2215, 4
          %2217 = dma.done [#allocation6], %s2216
          %v2218 = vld [vmem:[#allocation3] sm:$0xff]
          %v2219 = vld [vmem:[#allocation3 + $0x8] sm:$0xff]
          %v2220 = vld [vmem:[#allocation3 + $0x10] sm:$0xff]
          %v2221 = vld [vmem:[#allocation3 + $0x18] sm:$0xff]
          %v2222 = vld [vmem:[#allocation3 + $0x20] sm:$0xff]
          %v2223 = vld [vmem:[#allocation3 + $0x28] sm:$0xff]
          %v2224 = vld [vmem:[#allocation3 + $0x30] sm:$0xff]
          %v2225 = vld [vmem:[#allocation3 + $0x38] sm:$0xff]
          %v2226 = vld [vmem:[#allocation3 + $0x40] sm:$0xff]
          %v2227 = vmul.f32 %v2209, %v2218
          %v2228 = vmul.f32 %v2209, %v2219
          %v2229 = vmul.f32 %v2209, %v2220
          %v2230 = vmul.f32 %v2209, %v2221
          %v2231 = vmul.f32 %v2209, %v2222
          %v2232 = vmul.f32 %v2209, %v2223
          %v2233 = vmul.f32 %v2209, %v2224
          %v2234 = vmul.f32 %v2209, %v2225
          %v2235 = vmul.f32 %v2209, %v2226
          %2236 = vadd.xlane.f32.xlu0 %v2227
          %v2237 = vpop.xlane.xlu0 %2236
          %2238 = vadd.xlane.f32.xlu0 %v2228
          %v2239 = vpop.xlane.xlu0 %2238
          %2240 = vadd.xlane.f32.xlu0 %v2229
          %v2241 = vpop.xlane.xlu0 %2240
          %2242 = vadd.xlane.f32.xlu0 %v2230
          %v2243 = vpop.xlane.xlu0 %2242
          %2244 = vadd.xlane.f32.xlu0 %v2231
          %v2245 = vpop.xlane.xlu0 %2244
          %2246 = vadd.xlane.f32.xlu0 %v2232
          %v2247 = vpop.xlane.xlu0 %2246
          %2248 = vadd.xlane.f32.xlu0 %v2233
          %v2249 = vpop.xlane.xlu0 %2248
          %2250 = vadd.xlane.f32.xlu0 %v2234
          %v2251 = vpop.xlane.xlu0 %2250
          %2252 = vadd.xlane.f32.xlu0 %v2235
          %v2253 = vpop.xlane.xlu0 %2252
          %v2254 = vlaneseq
          %v2255 = vshrl.u32 %v2254, 7
          %v2256 = vadd.s32 %v2255, 8
          %v2257 = vstv %s529
          %v2258 = vadd.s32 %v2257, %v2255
          %v2259 = vadd.s32 %v2257, %v2256
          %v2260 = vld [vmem:[%s11] sm:$0x1]
          %v2261 = vlaneseq
          %v2262 = vshrl.u32 %v2261, 7
          %v2263 = vsub.s32 0, %v2262
          %v2264 = vrot.slane %v2260, %v2263
          %vm2265 = vcmp.lt.s32.totalorder %v2258, %v2264
          %vm2266 = vcmp.lt.s32.totalorder %v2259, %v2264
          %v2267 = vstv %s525
          %vm2268 = vcmp.ge.s32.totalorder %v2258, %v2267
          %vm2269 = vcmp.ge.s32.totalorder %v2259, %v2267
          %vm2270 = vmand %vm2265, %vm2268
          %vm2271 = vmand %vm2266, %vm2269
          %s2272 = sadd.s32 %s524, 4
          %v2273 = vstv %s2272
          %vm2274 = vcmp.le.s32.totalorder %v2258, %v2273
          %vm2275 = vcmp.le.s32.totalorder %v2259, %v2273
          %vm2276 = vmand %vm2270, %vm2274
          %vm2277 = vmand %vm2271, %vm2275
          %v2287 = vlaneseq
          %v2288 = vand.u32 %v2287, 127
          %v2289 = vlaneseq
          %v2290 = vshrl.u32 %v2289, 7
          %v2291 = vsub.s32 %v2288, %v2290
          %v2292 = vrot.slane %v2237, %v2291
          %v2293 = vlaneseq
          %v2294 = vshrl.u32 %v2293, 7
          %v2295 = vsub.s32 %v2288, %v2294
          %v2296 = vrot.slane %v2239, %v2295
          %v2297 = vlaneseq
          %v2298 = vshrl.u32 %v2297, 7
          %v2299 = vsub.s32 %v2288, %v2298
          %v2300 = vrot.slane %v2241, %v2299
          %v2301 = vlaneseq
          %v2302 = vshrl.u32 %v2301, 7
          %v2303 = vsub.s32 %v2288, %v2302
          %v2304 = vrot.slane %v2243, %v2303
          %v2305 = vlaneseq
          %v2306 = vshrl.u32 %v2305, 7
          %v2307 = vsub.s32 %v2288, %v2306
          %v2308 = vrot.slane %v2245, %v2307
          %v2309 = vlaneseq
          %v2310 = vshrl.u32 %v2309, 7
          %v2311 = vsub.s32 %v2288, %v2310
          %v2312 = vrot.slane %v2247, %v2311
          %v2313 = vlaneseq
          %v2314 = vshrl.u32 %v2313, 7
          %v2315 = vsub.s32 %v2288, %v2314
          %v2316 = vrot.slane %v2249, %v2315
          %v2317 = vlaneseq
          %v2318 = vshrl.u32 %v2317, 7
          %v2319 = vsub.s32 %v2288, %v2318
          %v2320 = vrot.slane %v2251, %v2319
          %v2321 = vlaneseq
          %v2322 = vshrl.u32 %v2321, 7
          %v2323 = vsub.s32 %v2288, %v2322
          %v2324 = vrot.slane %v2253, %v2323
          %vm2325 = vcmask 1041409
          %v2326 = vsel %vm2325, %v2296, %v2292
          %vm2327 = vcmask 1042434
          %v2328 = vsel %vm2327, %v2300, %v2326
          %vm2329 = vcmask 1043459
          %v2330 = vsel %vm2329, %v2304, %v2328
          %vm2331 = vcmask 1044484
          %v2332 = vsel %vm2331, %v2308, %v2330
          %vm2333 = vcmask 1045509
          %v2334 = vsel %vm2333, %v2312, %v2332
          %vm2335 = vcmask 1046534
          %v2336 = vsel %vm2335, %v2316, %v2334
          %vm2337 = vcmask 1047559
          %v2338 = vsel %vm2337, %v2320, %v2336
          %v2341 = vsel %vm2276, %v2338, -1e+30
          %v2342 = vsel %vm2277, %v2324, -1e+30
          %vm2343 = vcmask 64512
          %v2344 = vsel %vm2343, %v2341, -inf
          %vm2345 = vcmask 57344
          %v2346 = vsel %vm2345, %v2342, -inf
          %v2347 = vmax.f32 %v2344, %v2346
          %v2348 = vrot.slane %v2347, 4
          %v2349 = vmax.f32 %v2347, %v2348
          %v2350 = vrot.slane %v2349, 2
          %v2351 = vmax.f32 %v2349, %v2350
          %v2352 = vrot.slane %v2351, 1
          %v2353 = vmax.f32 %v2351, %v2352
          %v2354 = vsub.f32 %v2341, %v2353
          %v2355 = vsub.f32 %v2342, %v2353
          %v2356 = vmul.f32 %v2354, 1.442695
          %v2357 = vpow.pop %v2356
          %v2358 = vmul.f32 %v2355, 1.442695
          %v2359 = vpow.pop %v2358
          %v2360 = vsel %vm2343, %v2357, 0.0
          %v2361 = vsel %vm2345, %v2359, 0.0
          %v2362 = vadd.f32 %v2360, %v2361
          %v2363 = vrot.slane %v2362, 4
          %v2364 = vadd.f32 %v2362, %v2363
          %v2365 = vrot.slane %v2364, 2
          %v2366 = vadd.f32 %v2364, %v2365
          %v2367 = vrot.slane %v2366, 1
          %v2368 = vadd.f32 %v2366, %v2367
          %v2369 = vrcp.pop %v2368
          %v2370 = vmul.f32 %v2357, %v2369
          %v2371 = vmul.f32 %v2359, %v2369
          %v2372 = vstv %s524
          %v2373 = vsub.s32 %v2258, %v2372
          %v2374 = vsub.s32 %v2259, %v2372
          %v2375 = vcvt.s32.f32 %v2373
          %v2376 = vcvt.s32.f32 %v2374
          %v2377 = vmul.f32 %v2375, %v2375
          %v2378 = vmul.f32 %v2376, %v2376
          %v2379 = vsub.f32 0.0, %v2377
          %v2380 = vsub.f32 0.0, %v2378
          %v2381 = vrcp.pop 8.0
          %v2382 = vmul.f32 %v2379, %v2381
          %v2383 = vmul.f32 %v2380, %v2381
          %v2384 = vmul.f32 %v2382, 1.442695
          %v2385 = vpow.pop %v2384
          %v2386 = vmul.f32 %v2383, 1.442695
          %v2387 = vpow.pop %v2386
          %v2388 = vmul.f32 %v2370, %v2385
          %v2389 = vmul.f32 %v2371, %v2387
          %v2390 = vsel %vm2276, 1.0, 0.0
          %v2391 = vsel %vm2277, 1.0, 0.0
          %v2392 = vsel %vm2343, %v2390, -inf
          %v2393 = vsel %vm2345, %v2391, -inf
          %v2394 = vmax.f32 %v2392, %v2393
          %v2395 = vrot.slane %v2394, 4
          %v2396 = vmax.f32 %v2394, %v2395
          %v2397 = vrot.slane %v2396, 2
          %v2398 = vmax.f32 %v2396, %v2397
          %v2399 = vrot.slane %v2398, 1
          %v2400 = vmax.f32 %v2398, %v2399
          %vm2401 = vcmp.gt.f32.partialorder %v2400, 0.0
          %v2402 = vsel %vm2401, 1, 0
          %vm2403 = vcmp.eq.s32.totalorder %v2402, 1
          %v2406 = vrot.slane %v2388, 1
          %v2407 = vrot.slane %v2388, 2
          %v2408 = vrot.slane %v2388, 3
          %v2409 = vrot.slane %v2388, 4
          %v2410 = vrot.slane %v2388, 5
          %v2411 = vrot.slane %v2388, 6
          %v2412 = vrot.slane %v2388, 7
          %v2422 = vsel %vm2403, %v2388, 0.0
          %v2423 = vsel %vm2403, %v2406, 0.0
          %v2424 = vsel %vm2403, %v2407, 0.0
          %v2425 = vsel %vm2403, %v2408, 0.0
          %v2426 = vsel %vm2403, %v2409, 0.0
          %v2427 = vsel %vm2403, %v2410, 0.0
          %v2428 = vsel %vm2403, %v2411, 0.0
          %v2429 = vsel %vm2403, %v2412, 0.0
          %v2430 = vsel %vm2403, %v2389, 0.0
          %v2431 = vlaneseq
          %v2432 = vshrl.u32 %v2431, 7
          %v2433 = vsub.s32 0, %v2432
          %v2434 = vrot.slane %v2422, %v2433
          %2436 = vbcast.lane.b32.xlu0 %v2434, 256
          %v2437 = vpop.permute.xlu0 %2436
          %v2438 = vlaneseq
          %v2439 = vshrl.u32 %v2438, 7
          %v2440 = vsub.s32 0, %v2439
          %v2441 = vrot.slane %v2423, %v2440
          %2443 = vbcast.lane.b32.xlu0 %v2441, 256
          %v2444 = vpop.permute.xlu0 %2443
          %v2445 = vlaneseq
          %v2446 = vshrl.u32 %v2445, 7
          %v2447 = vsub.s32 0, %v2446
          %v2448 = vrot.slane %v2424, %v2447
          %2450 = vbcast.lane.b32.xlu0 %v2448, 256
          %v2451 = vpop.permute.xlu0 %2450
          %v2452 = vlaneseq
          %v2453 = vshrl.u32 %v2452, 7
          %v2454 = vsub.s32 0, %v2453
          %v2455 = vrot.slane %v2425, %v2454
          %2457 = vbcast.lane.b32.xlu0 %v2455, 256
          %v2458 = vpop.permute.xlu0 %2457
          %v2459 = vlaneseq
          %v2460 = vshrl.u32 %v2459, 7
          %v2461 = vsub.s32 0, %v2460
          %v2462 = vrot.slane %v2426, %v2461
          %2464 = vbcast.lane.b32.xlu0 %v2462, 256
          %v2465 = vpop.permute.xlu0 %2464
          %v2466 = vlaneseq
          %v2467 = vshrl.u32 %v2466, 7
          %v2468 = vsub.s32 0, %v2467
          %v2469 = vrot.slane %v2427, %v2468
          %2471 = vbcast.lane.b32.xlu0 %v2469, 256
          %v2472 = vpop.permute.xlu0 %2471
          %v2473 = vlaneseq
          %v2474 = vshrl.u32 %v2473, 7
          %v2475 = vsub.s32 0, %v2474
          %v2476 = vrot.slane %v2428, %v2475
          %2478 = vbcast.lane.b32.xlu0 %v2476, 256
          %v2479 = vpop.permute.xlu0 %2478
          %v2480 = vlaneseq
          %v2481 = vshrl.u32 %v2480, 7
          %v2482 = vsub.s32 0, %v2481
          %v2483 = vrot.slane %v2429, %v2482
          %2485 = vbcast.lane.b32.xlu0 %v2483, 256
          %v2486 = vpop.permute.xlu0 %2485
          %v2487 = vlaneseq
          %v2488 = vshrl.u32 %v2487, 7
          %v2489 = vsub.s32 0, %v2488
          %v2490 = vrot.slane %v2430, %v2489
          %2492 = vbcast.lane.b32.xlu0 %v2490, 256
          %v2493 = vpop.permute.xlu0 %2492
          %v2494 = vmul.f32 %v2437, %v2218
          %v2495 = vmul.f32 %v2444, %v2219
          %v2496 = vmul.f32 %v2451, %v2220
          %v2497 = vmul.f32 %v2458, %v2221
          %v2498 = vmul.f32 %v2465, %v2222
          %v2499 = vmul.f32 %v2472, %v2223
          %v2500 = vmul.f32 %v2479, %v2224
          %v2501 = vmul.f32 %v2486, %v2225
          %v2502 = vmul.f32 %v2493, %v2226
          %v2503 = vadd.f32 %v2494, %v2495
          %v2504 = vadd.f32 %v2503, %v2496
          %v2505 = vadd.f32 %v2504, %v2497
          %v2506 = vadd.f32 %v2505, %v2498
          %v2507 = vadd.f32 %v2506, %v2499
          %v2508 = vadd.f32 %v2507, %v2500
          %v2509 = vadd.f32 %v2508, %v2501
          %v2510 = vadd.f32 %v2509, %v2502
          %v2511 = vpack.c.bf16 %v2209, %v2209
          %v2512 = vld [vmem:[#allocation16] sm:$0xf]
          %v2513 = vld [vmem:[#allocation16 + $0x4] sm:$0xf]
          %v2514 = vld [vmem:[#allocation16 + $0x8] sm:$0xf]
          %v2515 = vld [vmem:[#allocation16 + $0xc] sm:$0xf]
          %v2516 = vld [vmem:[#allocation16 + $0x10] sm:$0xf]
          %v2517 = vld [vmem:[#allocation16 + $0x14] sm:$0xf]
          %v2518 = vld [vmem:[#allocation16 + $0x18] sm:$0xf]
          %v2519 = vld [vmem:[#allocation16 + $0x1c] sm:$0xf]
          %v2520 = vld [vmem:[#allocation16 + $0x20] sm:$0xf]
          %v2521 = vld [vmem:[#allocation16 + $0x24] sm:$0xf]
          %v2522 = vld [vmem:[#allocation16 + $0x28] sm:$0xf]
          %v2523 = vld [vmem:[#allocation16 + $0x2c] sm:$0xf]
          %v2524 = vld [vmem:[#allocation16 + $0x30] sm:$0xf]
          %v2525 = vld [vmem:[#allocation16 + $0x34] sm:$0xf]
          %v2526 = vld [vmem:[#allocation16 + $0x38] sm:$0xf]
          %v2527 = vld [vmem:[#allocation16 + $0x3c] sm:$0xf]
          %v2528 = vpack.c.bf16 %v2510, %v2510
          %v2529 = vld [vmem:[#allocation16 + $0x40] sm:$0xf]
          %v2530 = vld [vmem:[#allocation16 + $0x44] sm:$0xf]
          %v2531 = vld [vmem:[#allocation16 + $0x48] sm:$0xf]
          %v2532 = vld [vmem:[#allocation16 + $0x4c] sm:$0xf]
          %v2533 = vld [vmem:[#allocation16 + $0x50] sm:$0xf]
          %v2534 = vld [vmem:[#allocation16 + $0x54] sm:$0xf]
          %v2535 = vld [vmem:[#allocation16 + $0x58] sm:$0xf]
          %v2536 = vld [vmem:[#allocation16 + $0x5c] sm:$0xf]
          %v2537 = vld [vmem:[#allocation16 + $0x60] sm:$0xf]
          %v2538 = vld [vmem:[#allocation16 + $0x64] sm:$0xf]
          %v2539 = vld [vmem:[#allocation16 + $0x68] sm:$0xf]
          %v2540 = vld [vmem:[#allocation16 + $0x6c] sm:$0xf]
          %v2541 = vld [vmem:[#allocation16 + $0x70] sm:$0xf]
          %v2542 = vld [vmem:[#allocation16 + $0x74] sm:$0xf]
          %v2543 = vld [vmem:[#allocation16 + $0x78] sm:$0xf]
          %v2544 = vld [vmem:[#allocation16 + $0x7c] sm:$0xf]
          %v2561 = vunpack.c.l.b16 %v2529
          %v2562 = vunpack.c.l.b16 %v2530
          %v2563 = vunpack.c.l.b16 %v2531
          %v2564 = vunpack.c.l.b16 %v2532
          %v2565 = vunpack.c.l.b16 %v2533
          %v2566 = vunpack.c.l.b16 %v2534
          %v2567 = vunpack.c.l.b16 %v2535
          %v2568 = vunpack.c.l.b16 %v2536
          %v2569 = vunpack.c.l.b16 %v2537
          %v2570 = vunpack.c.l.b16 %v2538
          %v2571 = vunpack.c.l.b16 %v2539
          %v2572 = vunpack.c.l.b16 %v2540
          %v2573 = vunpack.c.l.b16 %v2541
          %v2574 = vunpack.c.l.b16 %v2542
          %v2575 = vunpack.c.l.b16 %v2543
          %v2576 = vunpack.c.l.b16 %v2544
          %v2577 = vpack.c.b16 %v2562, %v2561
          %v2578 = vpack.c.b16 %v2564, %v2563
          %v2579 = vpack.c.b16 %v2566, %v2565
          %v2580 = vpack.c.b16 %v2568, %v2567
          %v2581 = vpack.c.b16 %v2570, %v2569
          %v2582 = vpack.c.b16 %v2572, %v2571
          %v2583 = vpack.c.b16 %v2574, %v2573
          %v2584 = vpack.c.b16 %v2576, %v2575
          %2593 = vmatprep.subr.bf16.mxu0 0
          %2594 = vmatpush1.bf16.msra.mxu0 %v2577
          %2595 = vmatprep.subr.bf16.mxu0 0
          %2596 = vmatpush1.bf16.msra.mxu0 %v2578
          %2597 = vmatprep.subr.bf16.mxu0 0
          %2598 = vmatpush1.bf16.msra.mxu0 %v2579
          %2599 = vmatprep.subr.bf16.mxu0 0
          %2600 = vmatpush1.bf16.msra.mxu0 %v2580
          %2601 = vmatprep.subr.bf16.mxu0 0
          %2602 = vmatpush1.bf16.msra.mxu0 %v2581
          %2603 = vmatprep.subr.bf16.mxu0 0
          %2604 = vmatpush1.bf16.msra.mxu0 %v2582
          %2605 = vmatprep.subr.bf16.mxu0 0
          %2606 = vmatpush1.bf16.msra.mxu0 %v2583
          %2607 = vmatprep.subr.bf16.mxu0 0
          %2608 = vmatpush1.bf16.msra.mxu0 %v2584
          %2609 = vmatprep.subr.bf16.mxu0 0
          %2610 = vmatpush1.bf16.msra.mxu0 0
          %2611 = vmatprep.subr.bf16.mxu0 0
          %2612 = vmatpush1.bf16.msra.mxu0 0
          %2613 = vmatprep.subr.bf16.mxu0 0
          %2614 = vmatpush1.bf16.msra.mxu0 0
          %2615 = vmatprep.subr.bf16.mxu0 0
          %2616 = vmatpush1.bf16.msra.mxu0 0
          %2617 = vmatprep.subr.bf16.mxu0 0
          %2618 = vmatpush1.bf16.msra.mxu0 0
          %2619 = vmatprep.subr.bf16.mxu0 0
          %2620 = vmatpush1.bf16.msra.mxu0 0
          %2621 = vmatprep.subr.bf16.mxu0 0
          %2622 = vmatpush1.bf16.msra.mxu0 0
          %2623 = vmatprep.subr.bf16.mxu0 0
          %2624 = vmatpush1.bf16.msra.mxu0 0
          %2625 = vmatprep.mubr.bf16.mxu0 0
          %2626 = vmatmul.mubr.bf16.gmra.mrb[0].mxu0 %v2528
          %v2627 = vpop.f32.mrb[0].mxu0
          %v2628 = vadd.f32 0.0, %v2627
          %v2629 = vpop.f32.mrb[0].mxu0
          %v2630 = vpop.f32.mrb[0].mxu0
          %v2631 = vpop.f32.mrb[0].mxu0
          %2632 = vdwg.mxu0
          %v2649 = vunpack.c.l.b16 %v2512
          %v2650 = vunpack.c.l.b16 %v2513
          %v2651 = vunpack.c.l.b16 %v2514
          %v2652 = vunpack.c.l.b16 %v2515
          %v2653 = vunpack.c.l.b16 %v2516
          %v2654 = vunpack.c.l.b16 %v2517
          %v2655 = vunpack.c.l.b16 %v2518
          %v2656 = vunpack.c.l.b16 %v2519
          %v2657 = vunpack.c.l.b16 %v2520
          %v2658 = vunpack.c.l.b16 %v2521
          %v2659 = vunpack.c.l.b16 %v2522
          %v2660 = vunpack.c.l.b16 %v2523
          %v2661 = vunpack.c.l.b16 %v2524
          %v2662 = vunpack.c.l.b16 %v2525
          %v2663 = vunpack.c.l.b16 %v2526
          %v2664 = vunpack.c.l.b16 %v2527
          %v2665 = vpack.c.b16 %v2650, %v2649
          %v2666 = vpack.c.b16 %v2652, %v2651
          %v2667 = vpack.c.b16 %v2654, %v2653
          %v2668 = vpack.c.b16 %v2656, %v2655
          %v2669 = vpack.c.b16 %v2658, %v2657
          %v2670 = vpack.c.b16 %v2660, %v2659
          %v2671 = vpack.c.b16 %v2662, %v2661
          %v2672 = vpack.c.b16 %v2664, %v2663
          %2681 = vmatprep.subr.bf16.mxu0 0
          %2682 = vmatpush1.bf16.msra.mxu0 %v2665
          %2683 = vmatprep.subr.bf16.mxu0 0
          %2684 = vmatpush1.bf16.msra.mxu0 %v2666
          %2685 = vmatprep.subr.bf16.mxu0 0
          %2686 = vmatpush1.bf16.msra.mxu0 %v2667
          %2687 = vmatprep.subr.bf16.mxu0 0
          %2688 = vmatpush1.bf16.msra.mxu0 %v2668
          %2689 = vmatprep.subr.bf16.mxu0 0
          %2690 = vmatpush1.bf16.msra.mxu0 %v2669
          %2691 = vmatprep.subr.bf16.mxu0 0
          %2692 = vmatpush1.bf16.msra.mxu0 %v2670
          %2693 = vmatprep.subr.bf16.mxu0 0
          %2694 = vmatpush1.bf16.msra.mxu0 %v2671
          %2695 = vmatprep.subr.bf16.mxu0 0
          %2696 = vmatpush1.bf16.msra.mxu0 %v2672
          %2697 = vmatprep.subr.bf16.mxu0 0
          %2698 = vmatpush1.bf16.msra.mxu0 0
          %2699 = vmatprep.subr.bf16.mxu0 0
          %2700 = vmatpush1.bf16.msra.mxu0 0
          %2701 = vmatprep.subr.bf16.mxu0 0
          %2702 = vmatpush1.bf16.msra.mxu0 0
          %2703 = vmatprep.subr.bf16.mxu0 0
          %2704 = vmatpush1.bf16.msra.mxu0 0
          %2705 = vmatprep.subr.bf16.mxu0 0
          %2706 = vmatpush1.bf16.msra.mxu0 0
          %2707 = vmatprep.subr.bf16.mxu0 0
          %2708 = vmatpush1.bf16.msra.mxu0 0
          %2709 = vmatprep.subr.bf16.mxu0 0
          %2710 = vmatpush1.bf16.msra.mxu0 0
          %2711 = vmatprep.subr.bf16.mxu0 0
          %2712 = vmatpush1.bf16.msra.mxu0 0
          %2713 = vmatprep.mubr.bf16.mxu0 0
          %2714 = vmatmul.mubr.bf16.gmra.mrb[0].mxu0 %v2511
          %v2715 = vpop.f32.mrb[0].mxu0
          %v2716 = vadd.f32 %v2628, %v2715
          %v2717 = vpop.f32.mrb[0].mxu0
          %v2718 = vpop.f32.mrb[0].mxu0
          %v2719 = vpop.f32.mrb[0].mxu0
          %2720 = vdwg.mxu0
          %v2721 = vtanh.pop %v2716
          %2722 = vst [vmem:[#allocation19] sm:$0xff] %v2721
          %v2723 = vpack.c.bf16 %v2721, %v2721
          %2724 = vst [vmem:[#allocation4] sm:$0xf] %v2723
        $region84: #{tpu_custom_call.1} parent=59 // pred_fallthru
          _
        %v2725 = vld [vmem:[#allocation4] sm:$0xf]
        %v2726 = vld [vmem:[%s476] sm:$0xf]
        %v2727 = vld [vmem:[%s476 + $0x4] sm:$0xf]
        %v2728 = vld [vmem:[%s476 + $0x8] sm:$0xf]
        %v2729 = vld [vmem:[%s476 + $0xc] sm:$0xf]
        %v2730 = vld [vmem:[%s476 + $0x10] sm:$0xf]
        %v2731 = vld [vmem:[%s476 + $0x14] sm:$0xf]
        %v2732 = vld [vmem:[%s476 + $0x18] sm:$0xf]
        %v2733 = vld [vmem:[%s476 + $0x1c] sm:$0xf]
        %v2734 = vld [vmem:[%s476 + $0x20] sm:$0xf]
        %v2735 = vld [vmem:[%s476 + $0x24] sm:$0xf]
        %v2736 = vld [vmem:[%s476 + $0x28] sm:$0xf]
        %v2737 = vld [vmem:[%s476 + $0x2c] sm:$0xf]
        %v2738 = vld [vmem:[%s476 + $0x30] sm:$0xf]
        %v2739 = vld [vmem:[%s476 + $0x34] sm:$0xf]
        %v2740 = vld [vmem:[%s476 + $0x38] sm:$0xf]
        %v2741 = vld [vmem:[%s476 + $0x3c] sm:$0xf]
        %v2758 = vunpack.c.l.b16 %v2726
        %v2759 = vunpack.c.l.b16 %v2727
        %v2760 = vunpack.c.l.b16 %v2728
        %v2761 = vunpack.c.l.b16 %v2729
        %v2762 = vunpack.c.l.b16 %v2730
        %v2763 = vunpack.c.l.b16 %v2731
        %v2764 = vunpack.c.l.b16 %v2732
        %v2765 = vunpack.c.l.b16 %v2733
        %v2766 = vunpack.c.l.b16 %v2734
        %v2767 = vunpack.c.l.b16 %v2735
        %v2768 = vunpack.c.l.b16 %v2736
        %v2769 = vunpack.c.l.b16 %v2737
        %v2770 = vunpack.c.l.b16 %v2738
        %v2771 = vunpack.c.l.b16 %v2739
        %v2772 = vunpack.c.l.b16 %v2740
        %v2773 = vunpack.c.l.b16 %v2741
        %v2774 = vpack.c.b16 %v2759, %v2758
        %v2775 = vpack.c.b16 %v2761, %v2760
        %v2776 = vpack.c.b16 %v2763, %v2762
        %v2777 = vpack.c.b16 %v2765, %v2764
        %v2778 = vpack.c.b16 %v2767, %v2766
        %v2779 = vpack.c.b16 %v2769, %v2768
        %v2780 = vpack.c.b16 %v2771, %v2770
        %v2781 = vpack.c.b16 %v2773, %v2772
        %2790 = vmatprep.subr.bf16.mxu0 0
        %2791 = vmatpush1.bf16.msra.mxu0 %v2774
        %2792 = vmatprep.subr.bf16.mxu0 0
        %2793 = vmatpush1.bf16.msra.mxu0 %v2775
        %2794 = vmatprep.subr.bf16.mxu0 0
        %2795 = vmatpush1.bf16.msra.mxu0 %v2776
        %2796 = vmatprep.subr.bf16.mxu0 0
        %2797 = vmatpush1.bf16.msra.mxu0 %v2777
        %2798 = vmatprep.subr.bf16.mxu0 0
        %2799 = vmatpush1.bf16.msra.mxu0 %v2778
        %2800 = vmatprep.subr.bf16.mxu0 0
        %2801 = vmatpush1.bf16.msra.mxu0 %v2779
        %2802 = vmatprep.subr.bf16.mxu0 0
        %2803 = vmatpush1.bf16.msra.mxu0 %v2780
        %2804 = vmatprep.subr.bf16.mxu0 0
        %2805 = vmatpush1.bf16.msra.mxu0 %v2781
        %2806 = vmatprep.subr.bf16.mxu0 0
        %2807 = vmatpush1.bf16.msra.mxu0 0
        %2808 = vmatprep.subr.bf16.mxu0 0
        %2809 = vmatpush1.bf16.msra.mxu0 0
        %2810 = vmatprep.subr.bf16.mxu0 0
        %2811 = vmatpush1.bf16.msra.mxu0 0
        %2812 = vmatprep.subr.bf16.mxu0 0
        %2813 = vmatpush1.bf16.msra.mxu0 0
        %2814 = vmatprep.subr.bf16.mxu0 0
        %2815 = vmatpush1.bf16.msra.mxu0 0
        %2816 = vmatprep.subr.bf16.mxu0 0
        %2817 = vmatpush1.bf16.msra.mxu0 0
        %2818 = vmatprep.subr.bf16.mxu0 0
        %2819 = vmatpush1.bf16.msra.mxu0 0
        %2820 = vmatprep.subr.bf16.mxu0 0
        %2821 = vmatpush1.bf16.msra.mxu0 0
        %2822 = vmatprep.mubr.bf16.mxu0 0
        %2823 = vmatmul.mubr.bf16.gmra.mrb[0].mxu0 %v2725
        %v2824 = vpop.f32.mrb[0].mxu0
        %v2825 = vadd.f32 0.0, %v2824
        %v2826 = vpop.f32.mrb[0].mxu0
        %v2827 = vpop.f32.mrb[0].mxu0
        %v2828 = vpop.f32.mrb[0].mxu0
        %2829 = vdwg.mxu0
        %2830 = vst [vmem:[%s518] sm:$0xff] %v2825
        %s2831 = sand.u32 %s330, 1
        %s2832 = scalar_lea.sflag [#allocation24], %s2831
        %s2833 = sand.u32 %s330, 1
        %s2834 = smul.addr %s2833, 8
        %s2835 = scalar_lea.vmem [#allocation23], %s2834
        // Predicated region
        $region121: #{tpu_custom_call.1} parent=59 // pred_check
          %p2836 = pneg %p272
        $region122: #{tpu_custom_call.1} parent=59 // pred_check_branch
          %2838 = sbr.rel (%p2836) target = $region124
        $region123: #{tpu_custom_call.1} parent=59 // pred_region
          %s2840 = ssub.s32 128, 128
          %2841 = vsyncadd [#allocation12], %s2840
          %s2843 = sshll.u32 [#allocation19], 4
          %s2844 = int_to_ptr.vmem [resolvable:$true] %s2843
          %2846 = dma.vmem_to_hbm [thread:$0]  %s2844, 128, %s14, [#allocation12]
        $region124: #{tpu_custom_call.1} parent=59 // pred_fallthru
          _
        // Predicated region
        $region125: #{tpu_custom_call.1} parent=59 // pred_check
          %p2847 = pneg %p293
        $region126: #{tpu_custom_call.1} parent=59 // pred_check_branch
          %2849 = sbr.rel (%p2847) target = $region128
        $region127: #{tpu_custom_call.1} parent=59 // pred_region
          %s2851 = ssub.s32 256, 256
          %2852 = vsyncadd [#allocation21], %s2851
          %s2853 = sshll.u32 [#allocation20], 4
          %s2854 = int_to_ptr.vmem [resolvable:$true] %s2853
          %2859 = dma.vmem_to_hbm [thread:$0]  %s2854, 256, %s15, [#allocation21], 128, 128, 8
        $region128: #{tpu_custom_call.1} parent=59 // pred_fallthru
          _
        // Predicated region
        $region129: #{tpu_custom_call.1} parent=59 // pred_check
          %p2860 = pneg %p314
        $region130: #{tpu_custom_call.1} parent=59 // pred_check_branch
          %2862 = sbr.rel (%p2860) target = $region132
        $region131: #{tpu_custom_call.1} parent=59 // pred_region
          %s2864 = ssub.s32 256, 256
          %2865 = vsyncadd [#allocation21], %s2864
          %s2866 = sshll.u32 [#allocation22], 4
          %s2867 = int_to_ptr.vmem [resolvable:$true] %s2866
          %2872 = dma.vmem_to_hbm [thread:$0]  %s2867, 256, %s16, [#allocation21], 128, 128, 8
        $region132: #{tpu_custom_call.1} parent=59 // pred_fallthru
          _
        // Predicated region
        $region133: #{tpu_custom_call.1} parent=59 // pred_check
          %p2873 = pneg %p340
        $region134: #{tpu_custom_call.1} parent=59 // pred_check_branch
          %2875 = sbr.rel (%p2873) target = $region136
        $region135: #{tpu_custom_call.1} parent=59 // pred_region
          %s2877 = ssub.s32 128, 128
          %2878 = vsyncadd %s2832, %s2877
          %s2879 = smul.addr %s44, 128
          %s2880 = scalar_lea.hbm %s17, %s2879
          %s2882 = sshll.u32 %s2835, 4
          %s2883 = int_to_ptr.vmem [resolvable:$true] %s2882
          %2885 = dma.vmem_to_hbm [thread:$0]  %s2883, 128, %s2880, %s2832
        $region136: #{tpu_custom_call.1} parent=59 // pred_fallthru
          _
        // Predicated region
        $region137: #{tpu_custom_call.1} parent=59 // pred_check
          %p2886 = pneg %p272
        $region138: #{tpu_custom_call.1} parent=59 // pred_check_branch
          %2888 = sbr.rel (%p2886) target = $region140
        $region139: #{tpu_custom_call.1} parent=59 // pred_region
          %2889 = dma.done [#allocation12], 128
        $region140: #{tpu_custom_call.1} parent=59 // pred_fallthru
          _
        // Predicated region
        $region141: #{tpu_custom_call.1} parent=59 // pred_check
          %p2890 = pneg %p293
        $region142: #{tpu_custom_call.1} parent=59 // pred_check_branch
          %2892 = sbr.rel (%p2890) target = $region144
        $region143: #{tpu_custom_call.1} parent=59 // pred_region
          %2893 = dma.done [#allocation21], 256
        $region144: #{tpu_custom_call.1} parent=59 // pred_fallthru
          _
        // Predicated region
        $region145: #{tpu_custom_call.1} parent=59 // pred_check
          %p2894 = pneg %p314
        $region146: #{tpu_custom_call.1} parent=59 // pred_check_branch
          %2896 = sbr.rel (%p2894) target = $region148
        $region147: #{tpu_custom_call.1} parent=59 // pred_region
          %2897 = dma.done [#allocation21], 256
        $region148: #{tpu_custom_call.1} parent=59 // pred_fallthru
          _
      $region60: #{tpu_custom_call.1} parent=5 // pred_fallthru
        _
      %p2898 = scmp.le.s32.totalorder 2, %s39
      // Predicated region
      $region149: #{tpu_custom_call.1} parent=5 // pred_check
        %p2899 = pneg %p2898
      $region150: #{tpu_custom_call.1} parent=5 // pred_check_branch
        %2901 = sbr.rel (%p2899) target = $region152
      $region151: #{tpu_custom_call.1} parent=5 // pred_region
        %s2902 = ssub.s32 %s39, 2
        // Predicated region
        $region153: #{tpu_custom_call.1} parent=151 // pred_check
          %p2903 = pneg %p346
        $region154: #{tpu_custom_call.1} parent=151 // pred_check_branch
          %2905 = sbr.rel (%p2903) target = $region156
        $region155: #{tpu_custom_call.1} parent=151 // pred_region
          %s2906 = sand.u32 %s331, 1
          %s2907 = scalar_lea.sflag [#allocation24], %s2906
          %s2908 = sand.u32 %s331, 1
          %s2909 = smul.addr %s2908, 8
          %s2910 = scalar_lea.vmem [#allocation23], %s2909
          %2911 = dma.done %s2907, 128
        $region156: #{tpu_custom_call.1} parent=151 // pred_fallthru
          _
      $region152: #{tpu_custom_call.1} parent=5 // pred_fallthru
        _
    $region6: #{tpu_custom_call.1} parent=1 // loop_footer
      %s43 = sadd.s32 1, %s39
    $region7: #{tpu_custom_call.1} parent=1 // loop_footer_branch
      %38 = sbr.rel target = $region3
    $region8: #{tpu_custom_call.1} parent=1 // loop_exit
      _
    %2912 = vsyncpa [#allocation11], 1
    %s2913 = scalar_lea.sflag [#allocation11], 1
    %2914 = vsyncpa %s2913, 1
    %2915 = vsyncpa [#allocation14], 1
    %2916 = vsyncpa [#allocation17], 1
    %2917 = vsyncpa [#allocation12], 1
    %s2918 = scalar_lea.sflag [#allocation12], 1
    %2919 = vsyncpa %s2918, 1
    %2920 = vsyncpa [#allocation21], 1
    %2921 = vsyncpa [#allocation24], 1
    %s2922 = scalar_lea.sflag [#allocation24], 1
    %2923 = vsyncpa %s2922, 1
  %2924 = vsyncmov [#allocation5]
  %s2925 = vpop.sfrf %2924
  %p2926 = scmp.eq.s32.totalorder %s2925, 0
  %p2927 = pneg %p2926
  %2929 = shalt.err (%p2927)
  %s2930 = scalar_lea.sflag [#allocation5], 1
  %2931 = vsyncmov %s2930
  %s2932 = vpop.sfrf %2931
  %p2933 = scmp.eq.s32.totalorder %s2932, 0
  %p2934 = pneg %p2933
  %2936 = shalt.err (%p2934)
  %s2937 = scalar_lea.sflag [#allocation5], 2
  %2938 = vsyncmov %s2937
  %s2939 = vpop.sfrf %2938
  %p2940 = scmp.eq.s32.totalorder %s2939, 0
  %p2941 = pneg %p2940
  %2943 = shalt.err (%p2941)
  %s2944 = scalar_lea.sflag [#allocation5], 3
  %2945 = vsyncmov %s2944
  %s2946 = vpop.sfrf %2945
  %p2947 = scmp.eq.s32.totalorder %s2946, 0
  %p2948 = pneg %p2947
  %2950 = shalt.err (%p2948)
  %s2951 = scalar_lea.sflag [#allocation5], 4
  %2952 = vsyncmov %s2951
  %s2953 = vpop.sfrf %2952
  %p2954 = scmp.eq.s32.totalorder %s2953, 0
  %p2955 = pneg %p2954
  %2957 = shalt.err (%p2955)
  %s2958 = scalar_lea.sflag [#allocation5], 5
  %2959 = vsyncmov %s2958
  %s2960 = vpop.sfrf %2959
  %p2961 = scmp.eq.s32.totalorder %s2960, 0
  %p2962 = pneg %p2961
  %2964 = shalt.err (%p2962)
  %s2965 = scalar_lea.sflag [#allocation5], 6
  %2966 = vsyncmov %s2965
  %s2967 = vpop.sfrf %2966
  %p2968 = scmp.eq.s32.totalorder %s2967, 0
  %p2969 = pneg %p2968
  %2971 = shalt.err (%p2969)
  %s2972 = scalar_lea.sflag [#allocation5], 7
  %2973 = vsyncmov %s2972
  %s2974 = vpop.sfrf %2973
  %p2975 = scmp.eq.s32.totalorder %s2974, 0
  %p2976 = pneg %p2975
  %2978 = shalt.err (%p2976)
  %2979 = vsyncmov [#allocation6]
  %s2980 = vpop.sfrf %2979
  %p2981 = scmp.eq.s32.totalorder %s2980, 0
  %p2982 = pneg %p2981
  %2984 = shalt.err (%p2982)

</llo_original>
